<compile_context>
chip_gen: v7x
topology: tpu7x:2x2x1
jax: 0.10.0
libtpu: 0.0.40
codegen_flags: <defaults>
</compile_context>

<pallas_src>
import re
import functools
from math import sqrt

import jax
import jax.numpy as jnp
from jax.experimental import pallas as pl
from jax.experimental.pallas import tpu as pltpu

# ----------------------------- configuration --------------------------------
E = 128            # embedding_dim (scaled down from 256)
H = 128            # hidden_dim    (scaled down from 256)
N_ARY = 4
DECODE_LEVEL = 2
SYMBOLS = ['ROOT', 'S', 'NP', 'VP', 'DT', 'NN', 'VB', 'JJ']
S_OUT = len(SYMBOLS)
S_PAD = 128        # lane-dense padded projection width
SYM_INDEX = {s: i for i, s in enumerate(SYMBOLS)}

_F32 = jnp.float32
_BF16 = jnp.bfloat16


def _round_up(x, m):
    return ((x + m - 1) // m) * m


def _const_spec(shape):
    """Whole-array block with a constant index map -> stays resident in VMEM."""
    zeros = (0,) * len(shape)
    return pl.BlockSpec(shape, lambda *_, _z=zeros: _z)


# ----------------------------- encoder kernel --------------------------------
def _encoder_kernel(sym_ref, child_ref, leaf_ref,                  # scalar prefetch (SMEM)
                    emb_ref, h0_ref, c0_ref, wcat_ref, ucat_ref, bw_ref, bu_ref,
                    h_out_ref, c_out_ref,                          # outputs (resident)
                    hs_ref, cs_ref):                               # VMEM state scratch
    i = pl.program_id(0)
    n_state = hs_ref.shape[0]

    @pl.when(i == 0)
    def _():
        hs_ref[...] = jnp.zeros_like(hs_ref)
        cs_ref[...] = jnp.zeros_like(cs_ref)

    # -- embedding gather: one-hot sublane mask + reduce (exact, no dyn. index)
    sym = sym_ref[i]
    erows = jax.lax.broadcasted_iota(jnp.int32, (emb_ref.shape[0], 1), 0)
    x = jnp.sum(emb_ref[...] * (erows == sym).astype(_F32), axis=0, keepdims=True)
    x = x.astype(_BF16)                                            # (1, E)

    # -- gather children (h, c) from the running state buffers
    rows = jax.lax.broadcasted_iota(jnp.int32, (n_state, 1), 0)
    hs = hs_ref[...]
    cs = cs_ref[...]
    h_parts, c_parts = [], []
    for j in range(N_ARY):
        cidx = child_ref[i * N_ARY + j]                # -1 => missing child => zero slot
        m = (rows == cidx).astype(_F32)
        h_parts.append(jnp.sum(hs * m, axis=0, keepdims=True))
        c_parts.append(jnp.sum(cs * m, axis=0, keepdims=True))
    h_child = jnp.concatenate(h_parts, axis=1)                     # (1, N_ARY*H)
    c_child = jnp.concatenate(c_parts, axis=1)

    leaf = (leaf_ref[i] > 0).astype(_F32)              # leaves use learnable h0/c0
    h_prev = leaf * h0_ref[...] + (1.0 - leaf) * h_child
    c_prev = leaf * c0_ref[...] + (1.0 - leaf) * c_child

    # -- TreeLSTM cell: two wide matmuls ([W_iou|W_f], [U_iou|U_f]), bf16->f32
    wx = jnp.dot(x, wcat_ref[...], preferred_element_type=_F32) + bw_ref[...]    # (1, 4H)
    uh = (jnp.dot(h_prev.astype(_BF16), ucat_ref[...], preferred_element_type=_F32)
          + bu_ref[...])                                                         # (1, 7H)

    iou = wx[:, :3 * H] + uh[:, :3 * H]
    gi = jax.nn.sigmoid(iou[:, 0:H])
    go = jax.nn.sigmoid(iou[:, H:2 * H])
    gu = jnp.tanh(iou[:, 2 * H:3 * H])

    wf = wx[:, 3 * H:4 * H]
    fc = jnp.zeros((1, H), _F32)
    for j in range(N_ARY):
        fj = jax.nn.sigmoid(uh[:, 3 * H + j * H:3 * H + (j + 1) * H] + wf)
        fc = fc + fj * c_prev[:, j * H:(j + 1) * H]

    c_new = gi * gu + fc
    h_new = go * jnp.tanh(c_new)

    # -- scatter node i's state (one-hot row update; each row written once)
    sel = (rows == i).astype(_F32)
    new_hs = hs + sel * h_new
    new_cs = cs + sel * c_new
    hs_ref[...] = new_hs
    cs_ref[...] = new_cs

    # encoder memory is assembled in-kernel; outputs are whole-array resident
    h_out_ref[...] = new_hs
    c_out_ref[...] = new_cs


def _encode(params, enc_syms, enc_child, enc_leaf, n_real):
    n_state = _round_up(max(n_real, 1), 8)
    p = params['enc']
    emb = params['emb']
    grid_spec = pltpu.PrefetchScalarGridSpec(
        num_scalar_prefetch=3,
        grid=(n_real,),
        in_specs=[_const_spec(emb.shape), _const_spec(p['h0'].shape),
                  _const_spec(p['c0'].shape), _const_spec(p['w_cat'].shape),
                  _const_spec(p['u_cat'].shape), _const_spec(p['bw'].shape),
                  _const_spec(p['bu'].shape)],
        out_specs=(_const_spec((n_state, H)), _const_spec((n_state, H))),
        scratch_shapes=[pltpu.VMEM((n_state, H), _F32),
                        pltpu.VMEM((n_state, H), _F32)],
    )
    return pl.pallas_call(
        _encoder_kernel,
        grid_spec=grid_spec,
        out_shape=(jax.ShapeDtypeStruct((n_state, H), _F32),
                   jax.ShapeDtypeStruct((n_state, H), _F32)),
        compiler_params=pltpu.CompilerParams(dimension_semantics=("arbitrary",)),
    )(enc_syms, enc_child, enc_leaf,
      emb, p['h0'], p['c0'], p['w_cat'], p['u_cat'], p['bw'], p['bu'])


# ----------------------------- decoder kernel --------------------------------
def _make_decoder_kernel(n_real, root_idx):
    def kernel(sym_ref, par_ref,                                   # scalar prefetch
               emb_ref, ench_ref, encc_ref,
               wxh_ref, bg_ref, wq_ref, wk_ref, wv_ref,
               wlin_ref, blin_ref, pos_ref, wout_ref, bout_ref,
               out_ref,                                            # (1, N_ARY, S_PAD) block
               k_ref, v_ref, sh_ref, sc_ref):                      # VMEM scratch
        i = pl.program_id(0)

        # grid step 0: hoist K/V (constant over the decode) + zero the state
        @pl.when(i == 0)
        def _():
            enc_bf = ench_ref[...].astype(_BF16)
            k_ref[...] = jnp.dot(enc_bf, wk_ref[...], preferred_element_type=_F32)
            v_ref[...] = jnp.dot(enc_bf, wv_ref[...], preferred_element_type=_F32)
            sh_ref[...] = jnp.zeros_like(sh_ref)
            sc_ref[...] = jnp.zeros_like(sc_ref)

        # embedding gather (one-hot mask + sublane reduce)
        sym = sym_ref[i]
        erows = jax.lax.broadcasted_iota(jnp.int32, (emb_ref.shape[0], 1), 0)
        x = jnp.sum(emb_ref[...] * (erows == sym).astype(_F32), axis=0, keepdims=True)

        # parent recurrent state: ROOT (-1) uses encoder_h/c[:, -1, :]
        par = par_ref[i]
        rows = jax.lax.broadcasted_iota(jnp.int32, (sh_ref.shape[0], 1), 0)
        pm = (rows == par).astype(_F32)                  # all-zero when par == -1
        hp = jnp.sum(sh_ref[...] * pm, axis=0, keepdims=True)
        cp = jnp.sum(sc_ref[...] * pm, axis=0, keepdims=True)
        is_root = (par < 0).astype(_F32)
        hp = hp + is_root * ench_ref[root_idx:root_idx + 1, :]
        cp = cp + is_root * encc_ref[root_idx:root_idx + 1, :]

        # LSTMCell: single wide matmul on cat(x, h_prev), pre-summed biases
        xh = jnp.concatenate([x, hp], axis=1).astype(_BF16)        # (1, E+H)
        gates = jnp.dot(xh, wxh_ref[...], preferred_element_type=_F32) + bg_ref[...]
        gi = jax.nn.sigmoid(gates[:, 0:H])
        gf = jax.nn.sigmoid(gates[:, H:2 * H])
        gg = jnp.tanh(gates[:, 2 * H:3 * H])
        go = jax.nn.sigmoid(gates[:, 3 * H:4 * H])
        c = gf * cp + gi * gg
        h = go * jnp.tanh(c)

        # attention over encoder memory (un-scaled dot product, as in reference)
        q = jnp.dot(h.astype(_BF16), wq_ref[...], preferred_element_type=_F32)   # (1, H)
        scores = jax.lax.dot_general(
            q.astype(_BF16), k_ref[...].astype(_BF16),
            (((1,), (1,)), ((), ())), preferred_element_type=_F32)               # (1, N_pad)
        lanes = jax.lax.broadcasted_iota(jnp.int32, scores.shape, 1)
        scores = jnp.where(lanes < n_real, scores, -1e30)          # mask padded nodes
        scores = scores - jnp.max(scores, axis=-1, keepdims=True)
        ex = jnp.exp(scores)
        p_att = ex * pl.reciprocal(jnp.sum(ex, axis=-1, keepdims=True), approx=True)
        attn = jnp.dot(p_att.astype(_BF16), v_ref[...].astype(_BF16),
                       preferred_element_type=_F32)                               # (1, H)

        # linear(cat(h, attn)): one (1, 2H) @ (2H, H) matmul
        hc = jnp.concatenate([h, attn], axis=1).astype(_BF16)
        h_lin = jnp.dot(hc, wlin_ref[...], preferred_element_type=_F32) + blin_ref[...]

        # children recurse on (projected h, raw LSTM c) -- matches the reference
        sel = (rows == i).astype(_F32)
        sh_ref[...] = sh_ref[...] + sel * h_lin
        sc_ref[...] = sc_ref[...] + sel * c

        # n_ary position expansion + fused lane-dense symbol projection
        block = h_lin + pos_ref[...]                                               # (N_ARY, H)
        logits = (jnp.dot(block.astype(_BF16), wout_ref[...],
                          preferred_element_type=_F32) + bout_ref[...])            # (N_ARY, S_PAD)
        out_ref[...] = logits.reshape(1, N_ARY, S_PAD)

    return kernel


def _decode(params, enc_h, enc_c, dec_syms, dec_par, n_real, m_dec):
    n_state_enc = enc_h.shape[0]
    m_state = _round_up(max(m_dec, 1), 8)
    d = params['dec']
    o = params['out']
    emb = params['emb']
    kernel = _make_decoder_kernel(n_real, n_real - 1)
    inputs = (emb, enc_h, enc_c,
              d['w_xh'], d['b_g'], d['wq'], d['wk'], d['wv'],
              d['w_lin'], d['b_lin'], d['pos'], o['w'], o['b'])
    grid_spec = pltpu.PrefetchScalarGridSpec(
        num_scalar_prefetch=2,
        grid=(m_dec,),
        in_specs=[_const_spec(a.shape) for a in inputs],
        out_specs=pl.BlockSpec((1, N_ARY, S_PAD), lambda i, *_: (i, 0, 0)),
        scratch_shapes=[pltpu.VMEM((n_state_enc, H), _F32),   # K
                        pltpu.VMEM((n_state_enc, H), _F32),   # V
                        pltpu.VMEM((m_state, H), _F32),       # per-node h (post-linear)
                        pltpu.VMEM((m_state, H), _F32)],      # per-node c
    )
    return pl.pallas_call(
        kernel,
        grid_spec=grid_spec,
        out_shape=jax.ShapeDtypeStruct((m_dec, N_ARY, S_PAD), _F32),
        compiler_params=pltpu.CompilerParams(dimension_semantics=("arbitrary",)),
    )(dec_syms, dec_par, *inputs)


# ----------------------------- parameter setup -------------------------------
def init_params(key):
    bound = sqrt(1.0 / H)
    ks = iter(jax.random.split(key, 32))

    def u(shape):
        return jax.random.uniform(next(ks), shape, _F32, -bound, bound)

    emb = jax.random.normal(next(ks), (S_OUT, E), _F32)     # nn.Embedding ~ N(0, 1)

    # encoder (TreeLSTM): weights pre-transposed, concatenated, stored bf16
    w_iou, b_wiou = u((E, 3 * H)), u((1, 3 * H))
    u_iou, b_uiou = u((N_ARY * H, 3 * H)), u((1, 3 * H))
    w_f, b_wf = u((E, H)), u((1, H))
    u_f, b_uf = u((N_ARY * H, N_ARY * H)), u((1, N_ARY * H))
    enc = {
        'h0': u((1, N_ARY * H)),
        'c0': u((1, N_ARY * H)),
        'w_cat': jnp.concatenate([w_iou, w_f], axis=1).astype(_BF16),   # (E, 4H)
        'u_cat': jnp.concatenate([u_iou, u_f], axis=1).astype(_BF16),   # (4H, 7H)
        'bw': jnp.concatenate([b_wiou, b_wf], axis=1),                  # (1, 4H)
        'bu': jnp.concatenate([b_uiou, b_uf], axis=1),                  # (1, 7H)
    }

    # decoder (LSTMCell + attention + linear + n_ary position embeddings)
    w_ih, w_hh = u((E, 4 * H)), u((H, 4 * H))
    b_ih, b_hh = u((1, 4 * H)), u((1, 4 * H))
    dec = {
        'w_xh': jnp.concatenate([w_ih, w_hh], axis=0).astype(_BF16),    # (E+H, 4H)
        'b_g': b_ih + b_hh,                                             # pre-summed biases
        'wq': u((H, H)).astype(_BF16),
        'wk': u((H, H)).astype(_BF16),
        'wv': u((H, H)).astype(_BF16),
        'w_lin': jnp.concatenate([u((H, H)), u((H, H))], axis=0).astype(_BF16),  # (2H, H)
        'b_lin': u((1, H)),
        'pos': u((N_ARY, H)),
    }

    # output symbol projection, padded lane-dense to 128 columns
    w_out = jnp.pad(u((H, S_OUT)), ((0, 0), (0, S_PAD - S_OUT)))
    b_out = jnp.pad(u((1, S_OUT)), ((0, 0), (0, S_PAD - S_OUT)))
    out = {'w': w_out.astype(_BF16), 'b': b_out}

    return {'emb': emb, 'enc': enc, 'dec': dec, 'out': out}


# ----------------------------- schedules (host-side tree walk) ---------------
def _lemma_id(node):
    return SYM_INDEX[re.sub(r'-\d+', '', node)]


def build_encoder_schedule(syntax):
    """Post-order (bottom-up) schedule; matches SyntaxTransferEncoder.dfsBottomUp."""
    syms, child, leaf = [], [], []

    def dfs(node):
        if node not in syntax:                                     # leaf
            idx = len(syms)
            syms.append(_lemma_id(node)); child.append([-1] * N_ARY); leaf.append(1)
            return idx
        cids = [dfs(c) for c in syntax[node]]
        idx = len(syms)
        slots = [-1] * N_ARY
        for j, cid in enumerate(cids[:N_ARY]):
            slots[j] = cid
        syms.append(_lemma_id(node)); child.append(slots); leaf.append(0)
        return idx

    dfs('ROOT')
    n_real = len(syms)                                             # ROOT is last (index n_real-1)
    return (jnp.asarray(syms, jnp.int32),
            jnp.asarray([c for row in child for c in row], jnp.int32),
            jnp.asarray(leaf, jnp.int32),
            n_real)


def build_decoder_schedule(syntax, level):
    """Pre-order expansion schedule; matches SyntaxTransferDecoder.dfsTopDown."""
    syms, parents = [], []

    def dfs(node, parent, lvl):
        if lvl and node in syntax:
            idx = len(syms)
            syms.append(_lemma_id(node)); parents.append(parent)
            for ch in syntax[node]:
                dfs(ch, idx, lvl - 1)

    dfs('ROOT', -1, level)
    m_dec = len(syms)
    return jnp.asarray(syms, jnp.int32), jnp.asarray(parents, jnp.int32), m_dec


# ----------------------------- forward ---------------------------------------
@functools.partial(jax.jit, static_argnames=("n_real", "m_dec"))
def _forward_jit(params, enc_syms, enc_child, enc_leaf, dec_syms, dec_par,
                 n_real, m_dec):
    enc_h, enc_c = _encode(params, enc_syms, enc_child, enc_leaf, n_real)
    logits = _decode(params, enc_h, enc_c, dec_syms, dec_par, n_real, m_dec)
    return logits.reshape(1, m_dec * N_ARY, S_PAD)[:, :, :S_OUT]


def forward(source_syntax, target_syntax, params):
    # TODO(synk): the tree DFS itself is host control flow; it is compiled into
    # scalar-prefetch schedule arrays rather than traced on device.
    enc_syms, enc_child, enc_leaf, n_real = build_encoder_schedule(source_syntax)
    dec_syms, dec_par, m_dec = build_decoder_schedule(target_syntax, DECODE_LEVEL)
    if m_dec == 0:
        raise ValueError("target syntax expands no nodes at this decode level")
    return _forward_jit(params, enc_syms, enc_child, enc_leaf, dec_syms, dec_par,
                        n_real=n_real, m_dec=m_dec)


# ----------------------------------- main -------------------------------------
if __name__ == "__main__":
    key = jax.random.PRNGKey(0)
    params = init_params(key)

    # Example syntax trees (node -> children); leaves are absent keys.
    source_syntax = {'ROOT': ['S'], 'S': ['NP', 'VP'], 'NP': ['DT', 'NN']}
    target_syntax = {'ROOT': ['S'], 'S': ['NP', 'VP']}

    out = forward(source_syntax, target_syntax, params)
    jax.block_until_ready(out)

    # decode_level=2: ROOT expands (4) + its child 'S' expands (4) => 8 rows.
    assert out.shape == (1, 2 * N_ARY, S_OUT), out.shape
    assert out.dtype == jnp.float32
    assert bool(jnp.all(jnp.isfinite(out)))
    print("KERNEL_OK")
</pallas_src>

<mosaic_0001>
module attributes {stable_mosaic.version = 11 : i64} {
  func.func @_encoder_kernel(%arg0: i32, %arg1: memref<6xi32, #tpu.memory_space<smem>>, %arg2: memref<24xi32, #tpu.memory_space<smem>>, %arg3: memref<6xi32, #tpu.memory_space<smem>>, %arg4: memref<8x128xf32, #tpu.memory_space<vmem>>, %arg5: memref<1x512xf32, #tpu.memory_space<vmem>>, %arg6: memref<1x512xf32, #tpu.memory_space<vmem>>, %arg7: memref<128x512xbf16, #tpu.memory_space<vmem>>, %arg8: memref<512x896xbf16, #tpu.memory_space<vmem>>, %arg9: memref<1x512xf32, #tpu.memory_space<vmem>>, %arg10: memref<1x896xf32, #tpu.memory_space<vmem>>, %arg11: memref<8x128xf32, #tpu.memory_space<vmem>>, %arg12: memref<8x128xf32, #tpu.memory_space<vmem>>, %arg13: memref<8x128xf32, #tpu.memory_space<vmem>>, %arg14: memref<8x128xf32, #tpu.memory_space<vmem>>) attributes {dimension_semantics = [#tpu.dimension_semantics<arbitrary>], iteration_bounds = array<i64: 6>, scalar_prefetch = 3 : i64, scratch_operands = 2 : i64, tpu.core_type = #tpu.core_type<tc>, window_params = [{pipeline_mode = #tpu.pipeline_mode<synchronous>, transform_indices = @transform_0, window_bounds = array<i64: 8, 128>}, {pipeline_mode = #tpu.pipeline_mode<synchronous>, transform_indices = @transform_1, window_bounds = array<i64: 1, 512>}, {pipeline_mode = #tpu.pipeline_mode<synchronous>, transform_indices = @transform_2, window_bounds = array<i64: 1, 512>}, {pipeline_mode = #tpu.pipeline_mode<synchronous>, transform_indices = @transform_3, window_bounds = array<i64: 128, 512>}, {pipeline_mode = #tpu.pipeline_mode<synchronous>, transform_indices = @transform_4, window_bounds = array<i64: 512, 896>}, {pipeline_mode = #tpu.pipeline_mode<synchronous>, transform_indices = @transform_5, window_bounds = array<i64: 1, 512>}, {pipeline_mode = #tpu.pipeline_mode<synchronous>, transform_indices = @transform_6, window_bounds = array<i64: 1, 896>}, {pipeline_mode = #tpu.pipeline_mode<synchronous>, transform_indices = @transform_7, window_bounds = array<i64: 8, 128>}, {pipeline_mode = #tpu.pipeline_mode<synchronous>, transform_indices = @transform_8, window_bounds = array<i64: 8, 128>}]} {
    %c0_i32 = arith.constant 0 : i32
    %0 = arith.cmpi eq, %arg0, %c0_i32 : i32
    %1 = arith.extui %0 : i1 to i32
    %c0_i32_0 = arith.constant 0 : i32
    %2 = arith.cmpi ne, %1, %c0_i32_0 : i32
    scf.if %2 {
      %cst_50 = arith.constant 0.000000e+00 : f32
      %192 = vector.broadcast %cst_50 : f32 to vector<8x128xf32>
      %c0_51 = arith.constant 0 : index
      %c0_52 = arith.constant 0 : index
      %193 = vector.load %arg13[%c0_51, %c0_52] : memref<8x128xf32, #tpu.memory_space<vmem>>, vector<8x128xf32>
      tpu.vector_store %arg13[%c0_51, %c0_52], %192 {strides = array<i32>} : memref<8x128xf32, #tpu.memory_space<vmem>>, vector<8x128xf32>,
      %cst_53 = arith.constant 0.000000e+00 : f32
      %194 = vector.broadcast %cst_53 : f32 to vector<8x128xf32>
      %c0_54 = arith.constant 0 : index
      %c0_55 = arith.constant 0 : index
      %195 = vector.load %arg14[%c0_54, %c0_55] : memref<8x128xf32, #tpu.memory_space<vmem>>, vector<8x128xf32>
      tpu.vector_store %arg14[%c0_54, %c0_55], %194 {strides = array<i32>} : memref<8x128xf32, #tpu.memory_space<vmem>>, vector<8x128xf32>,
    } else {
    }
    %3 = arith.index_cast %arg0 : i32 to index
    %4 = memref.load %arg1[%3] : memref<6xi32, #tpu.memory_space<smem>>
    %5 = tpu.iota {dimensions = array<i32: 0>} : vector<8x1xi32>
    %c0 = arith.constant 0 : index
    %c0_1 = arith.constant 0 : index
    %6 = vector.load %arg4[%c0, %c0_1] : memref<8x128xf32, #tpu.memory_space<vmem>>, vector<8x128xf32>
    %7 = vector.broadcast %4 : i32 to vector<8x1xi32>
    %8 = arith.cmpi eq, %5, %7 : vector<8x1xi32>
    %9 = arith.extui %8 : vector<8x1xi1> to vector<8x1xi32>
    %10 = arith.sitofp %9 : vector<8x1xi32> to vector<8x1xf32>
    %11 = vector.broadcast %10 : vector<8x1xf32> to vector<8x128xf32>
    %12 = arith.mulf %6, %11 : vector<8x128xf32>
    %cst = arith.constant dense<0.000000e+00> : vector<128xf32>
    %13 = vector.multi_reduction <add>, %12, %cst [0] : vector<8x128xf32> to vector<128xf32>
    %14 = vector.shape_cast %13 : vector<128xf32> to vector<1x128xf32>
    %15 = arith.truncf %14 : vector<1x128xf32> to vector<1x128xbf16>
    %16 = tpu.iota {dimensions = array<i32: 0>} : vector<8x1xi32>
    %c0_2 = arith.constant 0 : index
    %c0_3 = arith.constant 0 : index
    %17 = vector.load %arg13[%c0_2, %c0_3] : memref<8x128xf32, #tpu.memory_space<vmem>>, vector<8x128xf32>
    %c0_4 = arith.constant 0 : index
    %c0_5 = arith.constant 0 : index
    %18 = vector.load %arg14[%c0_4, %c0_5] : memref<8x128xf32, #tpu.memory_space<vmem>>, vector<8x128xf32>
    %c4_i32 = arith.constant 4 : i32
    %19 = arith.muli %arg0, %c4_i32 : i32
    %c0_i32_6 = arith.constant 0 : i32
    %20 = arith.addi %19, %c0_i32_6 : i32
    %21 = arith.index_cast %20 : i32 to index
    %22 = memref.load %arg2[%21] : memref<24xi32, #tpu.memory_space<smem>>
    %23 = vector.broadcast %22 : i32 to vector<8x1xi32>
    %24 = arith.cmpi eq, %16, %23 : vector<8x1xi32>
    %25 = arith.extui %24 : vector<8x1xi1> to vector<8x1xi32>
    %26 = arith.sitofp %25 : vector<8x1xi32> to vector<8x1xf32>
    %27 = vector.broadcast %26 : vector<8x1xf32> to vector<8x128xf32>
    %28 = arith.mulf %17, %27 : vector<8x128xf32>
    %cst_7 = arith.constant dense<0.000000e+00> : vector<128xf32>
    %29 = vector.multi_reduction <add>, %28, %cst_7 [0] : vector<8x128xf32> to vector<128xf32>
    %30 = vector.shape_cast %29 : vector<128xf32> to vector<1x128xf32>
    %31 = vector.broadcast %26 : vector<8x1xf32> to vector<8x128xf32>
    %32 = arith.mulf %18, %31 : vector<8x128xf32>
    %cst_8 = arith.constant dense<0.000000e+00> : vector<128xf32>
    %33 = vector.multi_reduction <add>, %32, %cst_8 [0] : vector<8x128xf32> to vector<128xf32>
    %34 = vector.shape_cast %33 : vector<128xf32> to vector<1x128xf32>
    %c4_i32_9 = arith.constant 4 : i32
    %35 = arith.muli %arg0, %c4_i32_9 : i32
    %c1_i32 = arith.constant 1 : i32
    %36 = arith.addi %35, %c1_i32 : i32
    %37 = arith.index_cast %36 : i32 to index
    %38 = memref.load %arg2[%37] : memref<24xi32, #tpu.memory_space<smem>>
    %39 = vector.broadcast %38 : i32 to vector<8x1xi32>
    %40 = arith.cmpi eq, %16, %39 : vector<8x1xi32>
    %41 = arith.extui %40 : vector<8x1xi1> to vector<8x1xi32>
    %42 = arith.sitofp %41 : vector<8x1xi32> to vector<8x1xf32>
    %43 = vector.broadcast %42 : vector<8x1xf32> to vector<8x128xf32>
    %44 = arith.mulf %17, %43 : vector<8x128xf32>
    %cst_10 = arith.constant dense<0.000000e+00> : vector<128xf32>
    %45 = vector.multi_reduction <add>, %44, %cst_10 [0] : vector<8x128xf32> to vector<128xf32>
    %46 = vector.shape_cast %45 : vector<128xf32> to vector<1x128xf32>
    %47 = vector.broadcast %42 : vector<8x1xf32> to vector<8x128xf32>
    %48 = arith.mulf %18, %47 : vector<8x128xf32>
    %cst_11 = arith.constant dense<0.000000e+00> : vector<128xf32>
    %49 = vector.multi_reduction <add>, %48, %cst_11 [0] : vector<8x128xf32> to vector<128xf32>
    %50 = vector.shape_cast %49 : vector<128xf32> to vector<1x128xf32>
    %c4_i32_12 = arith.constant 4 : i32
    %51 = arith.muli %arg0, %c4_i32_12 : i32
    %c2_i32 = arith.constant 2 : i32
    %52 = arith.addi %51, %c2_i32 : i32
    %53 = arith.index_cast %52 : i32 to index
    %54 = memref.load %arg2[%53] : memref<24xi32, #tpu.memory_space<smem>>
    %55 = vector.broadcast %54 : i32 to vector<8x1xi32>
    %56 = arith.cmpi eq, %16, %55 : vector<8x1xi32>
    %57 = arith.extui %56 : vector<8x1xi1> to vector<8x1xi32>
    %58 = arith.sitofp %57 : vector<8x1xi32> to vector<8x1xf32>
    %59 = vector.broadcast %58 : vector<8x1xf32> to vector<8x128xf32>
    %60 = arith.mulf %17, %59 : vector<8x128xf32>
    %cst_13 = arith.constant dense<0.000000e+00> : vector<128xf32>
    %61 = vector.multi_reduction <add>, %60, %cst_13 [0] : vector<8x128xf32> to vector<128xf32>
    %62 = vector.shape_cast %61 : vector<128xf32> to vector<1x128xf32>
    %63 = vector.broadcast %58 : vector<8x1xf32> to vector<8x128xf32>
    %64 = arith.mulf %18, %63 : vector<8x128xf32>
    %cst_14 = arith.constant dense<0.000000e+00> : vector<128xf32>
    %65 = vector.multi_reduction <add>, %64, %cst_14 [0] : vector<8x128xf32> to vector<128xf32>
    %66 = vector.shape_cast %65 : vector<128xf32> to vector<1x128xf32>
    %c4_i32_15 = arith.constant 4 : i32
    %67 = arith.muli %arg0, %c4_i32_15 : i32
    %c3_i32 = arith.constant 3 : i32
    %68 = arith.addi %67, %c3_i32 : i32
    %69 = arith.index_cast %68 : i32 to index
    %70 = memref.load %arg2[%69] : memref<24xi32, #tpu.memory_space<smem>>
    %71 = vector.broadcast %70 : i32 to vector<8x1xi32>
    %72 = arith.cmpi eq, %16, %71 : vector<8x1xi32>
    %73 = arith.extui %72 : vector<8x1xi1> to vector<8x1xi32>
    %74 = arith.sitofp %73 : vector<8x1xi32> to vector<8x1xf32>
    %75 = vector.broadcast %74 : vector<8x1xf32> to vector<8x128xf32>
    %76 = arith.mulf %17, %75 : vector<8x128xf32>
    %cst_16 = arith.constant dense<0.000000e+00> : vector<128xf32>
    %77 = vector.multi_reduction <add>, %76, %cst_16 [0] : vector<8x128xf32> to vector<128xf32>
    %78 = vector.shape_cast %77 : vector<128xf32> to vector<1x128xf32>
    %79 = vector.broadcast %74 : vector<8x1xf32> to vector<8x128xf32>
    %80 = arith.mulf %18, %79 : vector<8x128xf32>
    %cst_17 = arith.constant dense<0.000000e+00> : vector<128xf32>
    %81 = vector.multi_reduction <add>, %80, %cst_17 [0] : vector<8x128xf32> to vector<128xf32>
    %82 = vector.shape_cast %81 : vector<128xf32> to vector<1x128xf32>
    %83 = tpu.concatenate %30, %46, %62, %78 in 1 : vector<1x128xf32>, vector<1x128xf32>, vector<1x128xf32>, vector<1x128xf32> -> vector<1x512xf32>
    %84 = tpu.concatenate %34, %50, %66, %82 in 1 : vector<1x128xf32>, vector<1x128xf32>, vector<1x128xf32>, vector<1x128xf32> -> vector<1x512xf32>
    %85 = arith.index_cast %arg0 : i32 to index
    %86 = memref.load %arg3[%85] : memref<6xi32, #tpu.memory_space<smem>>
    %c0_i32_18 = arith.constant 0 : i32
    %87 = arith.cmpi sgt, %86, %c0_i32_18 : i32
    %88 = arith.extui %87 : i1 to i32
    %89 = arith.sitofp %88 : i32 to f32
    %c0_19 = arith.constant 0 : index
    %c0_20 = arith.constant 0 : index
    %90 = vector.load %arg5[%c0_19, %c0_20] : memref<1x512xf32, #tpu.memory_space<vmem>>, vector<1x512xf32>
    %91 = vector.broadcast %89 : f32 to vector<1x512xf32>
    %92 = arith.mulf %91, %90 : vector<1x512xf32>
    %cst_21 = arith.constant 1.000000e+00 : f32
    %93 = arith.subf %cst_21, %89 : f32
    %94 = vector.broadcast %93 : f32 to vector<1x512xf32>
    %95 = arith.mulf %94, %83 : vector<1x512xf32>
    %96 = arith.addf %92, %95 : vector<1x512xf32>
    %c0_22 = arith.constant 0 : index
    %c0_23 = arith.constant 0 : index
    %97 = vector.load %arg6[%c0_22, %c0_23] : memref<1x512xf32, #tpu.memory_space<vmem>>, vector<1x512xf32>
    %98 = vector.broadcast %89 : f32 to vector<1x512xf32>
    %99 = arith.mulf %98, %97 : vector<1x512xf32>
    %cst_24 = arith.constant 1.000000e+00 : f32
    %100 = arith.subf %cst_24, %89 : f32
    %101 = vector.broadcast %100 : f32 to vector<1x512xf32>
    %102 = arith.mulf %101, %84 : vector<1x512xf32>
    %103 = arith.addf %99, %102 : vector<1x512xf32>
    %c0_25 = arith.constant 0 : index
    %c0_26 = arith.constant 0 : index
    %104 = vector.load %arg7[%c0_25, %c0_26] : memref<128x512xbf16, #tpu.memory_space<vmem>>, vector<128x512xbf16>
    %cst_27 = arith.constant dense<0.000000e+00> : vector<1x512xf32>
    %105 = tpu.matmul %15, %104, %cst_27 {dimension_numbers = #tpu.dot_dimension_numbers<[1], [0], [0], [1], [0, 0, 1, 1], [], []>} : vector<1x128xbf16>, vector<128x512xbf16>, vector<1x512xf32> -> vector<1x512xf32>
    %c0_28 = arith.constant 0 : index
    %c0_29 = arith.constant 0 : index
    %106 = vector.load %arg9[%c0_28, %c0_29] : memref<1x512xf32, #tpu.memory_space<vmem>>, vector<1x512xf32>
    %107 = arith.addf %105, %106 : vector<1x512xf32>
    %108 = arith.truncf %96 : vector<1x512xf32> to vector<1x512xbf16>
    %c0_30 = arith.constant 0 : index
    %c0_31 = arith.constant 0 : index
    %109 = vector.load %arg8[%c0_30, %c0_31] : memref<512x896xbf16, #tpu.memory_space<vmem>>, vector<512x896xbf16>
    %cst_32 = arith.constant dense<0.000000e+00> : vector<1x896xf32>
    %110 = tpu.matmul %108, %109, %cst_32 {dimension_numbers = #tpu.dot_dimension_numbers<[1], [0], [0], [1], [0, 0, 1, 1], [], []>} : vector<1x512xbf16>, vector<512x896xbf16>, vector<1x896xf32> -> vector<1x896xf32>
    %c0_33 = arith.constant 0 : index
    %c0_34 = arith.constant 0 : index
    %111 = vector.load %arg10[%c0_33, %c0_34] : memref<1x896xf32, #tpu.memory_space<vmem>>, vector<1x896xf32>
    %112 = arith.addf %110, %111 : vector<1x896xf32>
    %113 = vector.extract_strided_slice %107 {offsets = [0, 0], sizes = [1, 384], strides = [1, 1]} : vector<1x512xf32> to vector<1x384xf32>
    %114 = vector.extract_strided_slice %112 {offsets = [0, 0], sizes = [1, 384], strides = [1, 1]} : vector<1x896xf32> to vector<1x384xf32>
    %115 = arith.addf %113, %114 : vector<1x384xf32>
    %116 = vector.extract_strided_slice %115 {offsets = [0, 0], sizes = [1, 128], strides = [1, 1]} : vector<1x384xf32> to vector<1x128xf32>
    %117 = arith.negf %116 : vector<1x128xf32>
    %118 = math.exp %117 : vector<1x128xf32>
    %cst_35 = arith.constant 1.000000e+00 : f32
    %119 = vector.broadcast %cst_35 : f32 to vector<1x128xf32>
    %120 = arith.addf %119, %118 : vector<1x128xf32>
    %121 = arith.divf %119, %120 : vector<1x128xf32>
    %122 = vector.extract_strided_slice %115 {offsets = [0, 128], sizes = [1, 128], strides = [1, 1]} : vector<1x384xf32> to vector<1x128xf32>
    %123 = arith.negf %122 : vector<1x128xf32>
    %124 = math.exp %123 : vector<1x128xf32>
    %cst_36 = arith.constant 1.000000e+00 : f32
    %125 = vector.broadcast %cst_36 : f32 to vector<1x128xf32>
    %126 = arith.addf %125, %124 : vector<1x128xf32>
    %127 = arith.divf %125, %126 : vector<1x128xf32>
    %128 = vector.extract_strided_slice %115 {offsets = [0, 256], sizes = [1, 128], strides = [1, 1]} : vector<1x384xf32> to vector<1x128xf32>
    %129 = math.tanh %128 : vector<1x128xf32>
    %130 = vector.extract_strided_slice %107 {offsets = [0, 384], sizes = [1, 128], strides = [1, 1]} : vector<1x512xf32> to vector<1x128xf32>
    %cst_37 = arith.constant 0.000000e+00 : f32
    %131 = vector.broadcast %cst_37 : f32 to vector<1x128xf32>
    %132 = vector.extract_strided_slice %112 {offsets = [0, 384], sizes = [1, 128], strides = [1, 1]} : vector<1x896xf32> to vector<1x128xf32>
    %133 = arith.addf %132, %130 : vector<1x128xf32>
    %134 = arith.negf %133 : vector<1x128xf32>
    %135 = math.exp %134 : vector<1x128xf32>
    %cst_38 = arith.constant 1.000000e+00 : f32
    %136 = vector.broadcast %cst_38 : f32 to vector<1x128xf32>
    %137 = arith.addf %136, %135 : vector<1x128xf32>
    %138 = arith.divf %136, %137 : vector<1x128xf32>
    %139 = vector.extract_strided_slice %103 {offsets = [0, 0], sizes = [1, 128], strides = [1, 1]} : vector<1x512xf32> to vector<1x128xf32>
    %140 = arith.mulf %138, %139 : vector<1x128xf32>
    %141 = arith.addf %131, %140 : vector<1x128xf32>
    %142 = vector.extract_strided_slice %112 {offsets = [0, 512], sizes = [1, 128], strides = [1, 1]} : vector<1x896xf32> to vector<1x128xf32>
    %143 = arith.addf %142, %130 : vector<1x128xf32>
    %144 = arith.negf %143 : vector<1x128xf32>
    %145 = math.exp %144 : vector<1x128xf32>
    %cst_39 = arith.constant 1.000000e+00 : f32
    %146 = vector.broadcast %cst_39 : f32 to vector<1x128xf32>
    %147 = arith.addf %146, %145 : vector<1x128xf32>
    %148 = arith.divf %146, %147 : vector<1x128xf32>
    %149 = vector.extract_strided_slice %103 {offsets = [0, 128], sizes = [1, 128], strides = [1, 1]} : vector<1x512xf32> to vector<1x128xf32>
    %150 = arith.mulf %148, %149 : vector<1x128xf32>
    %151 = arith.addf %141, %150 : vector<1x128xf32>
    %152 = vector.extract_strided_slice %112 {offsets = [0, 640], sizes = [1, 128], strides = [1, 1]} : vector<1x896xf32> to vector<1x128xf32>
    %153 = arith.addf %152, %130 : vector<1x128xf32>
    %154 = arith.negf %153 : vector<1x128xf32>
    %155 = math.exp %154 : vector<1x128xf32>
    %cst_40 = arith.constant 1.000000e+00 : f32
    %156 = vector.broadcast %cst_40 : f32 to vector<1x128xf32>
    %157 = arith.addf %156, %155 : vector<1x128xf32>
    %158 = arith.divf %156, %157 : vector<1x128xf32>
    %159 = vector.extract_strided_slice %103 {offsets = [0, 256], sizes = [1, 128], strides = [1, 1]} : vector<1x512xf32> to vector<1x128xf32>
    %160 = arith.mulf %158, %159 : vector<1x128xf32>
    %161 = arith.addf %151, %160 : vector<1x128xf32>
    %162 = vector.extract_strided_slice %112 {offsets = [0, 768], sizes = [1, 128], strides = [1, 1]} : vector<1x896xf32> to vector<1x128xf32>
    %163 = arith.addf %162, %130 : vector<1x128xf32>
    %164 = arith.negf %163 : vector<1x128xf32>
    %165 = math.exp %164 : vector<1x128xf32>
    %cst_41 = arith.constant 1.000000e+00 : f32
    %166 = vector.broadcast %cst_41 : f32 to vector<1x128xf32>
    %167 = arith.addf %166, %165 : vector<1x128xf32>
    %168 = arith.divf %166, %167 : vector<1x128xf32>
    %169 = vector.extract_strided_slice %103 {offsets = [0, 384], sizes = [1, 128], strides = [1, 1]} : vector<1x512xf32> to vector<1x128xf32>
    %170 = arith.mulf %168, %169 : vector<1x128xf32>
    %171 = arith.addf %161, %170 : vector<1x128xf32>
    %172 = arith.mulf %121, %129 : vector<1x128xf32>
    %173 = arith.addf %172, %171 : vector<1x128xf32>
    %174 = math.tanh %173 : vector<1x128xf32>
    %175 = arith.mulf %127, %174 : vector<1x128xf32>
    %176 = vector.broadcast %arg0 : i32 to vector<8x1xi32>
    %177 = arith.cmpi eq, %16, %176 : vector<8x1xi32>
    %178 = arith.extui %177 : vector<8x1xi1> to vector<8x1xi32>
    %179 = arith.sitofp %178 : vector<8x1xi32> to vector<8x1xf32>
    %180 = vector.broadcast %179 : vector<8x1xf32> to vector<8x128xf32>
    %181 = vector.broadcast %175 : vector<1x128xf32> to vector<8x128xf32>
    %182 = arith.mulf %180, %181 : vector<8x128xf32>
    %183 = arith.addf %17, %182 : vector<8x128xf32>
    %184 = vector.broadcast %179 : vector<8x1xf32> to vector<8x128xf32>
    %185 = vector.broadcast %173 : vector<1x128xf32> to vector<8x128xf32>
    %186 = arith.mulf %184, %185 : vector<8x128xf32>
    %187 = arith.addf %18, %186 : vector<8x128xf32>
    %c0_42 = arith.constant 0 : index
    %c0_43 = arith.constant 0 : index
    %188 = vector.load %arg13[%c0_42, %c0_43] : memref<8x128xf32, #tpu.memory_space<vmem>>, vector<8x128xf32>
    tpu.vector_store %arg13[%c0_42, %c0_43], %183 {strides = array<i32>} : memref<8x128xf32, #tpu.memory_space<vmem>>, vector<8x128xf32>,
    %c0_44 = arith.constant 0 : index
    %c0_45 = arith.constant 0 : index
    %189 = vector.load %arg14[%c0_44, %c0_45] : memref<8x128xf32, #tpu.memory_space<vmem>>, vector<8x128xf32>
    tpu.vector_store %arg14[%c0_44, %c0_45], %187 {strides = array<i32>} : memref<8x128xf32, #tpu.memory_space<vmem>>, vector<8x128xf32>,
    %c0_46 = arith.constant 0 : index
    %c0_47 = arith.constant 0 : index
    %190 = vector.load %arg11[%c0_46, %c0_47] : memref<8x128xf32, #tpu.memory_space<vmem>>, vector<8x128xf32>
    tpu.vector_store %arg11[%c0_46, %c0_47], %183 {strides = array<i32>} : memref<8x128xf32, #tpu.memory_space<vmem>>, vector<8x128xf32>,
    %c0_48 = arith.constant 0 : index
    %c0_49 = arith.constant 0 : index
    %191 = vector.load %arg12[%c0_48, %c0_49] : memref<8x128xf32, #tpu.memory_space<vmem>>, vector<8x128xf32>
    tpu.vector_store %arg12[%c0_48, %c0_49], %187 {strides = array<i32>} : memref<8x128xf32, #tpu.memory_space<vmem>>, vector<8x128xf32>,
    return
  }
  func.func @transform_0(%arg0: i32, %arg1: memref<6xi32, #tpu.memory_space<smem>>, %arg2: memref<24xi32, #tpu.memory_space<smem>>, %arg3: memref<6xi32, #tpu.memory_space<smem>>) -> (i32, i32) {
    %c0_i32 = arith.constant 0 : i32
    %c0_i32_0 = arith.constant 0 : i32
    %c0_i32_1 = arith.constant 0 : i32
    return %c0_i32, %c0_i32_0 : i32, i32
  }
  func.func @transform_1(%arg0: i32, %arg1: memref<6xi32, #tpu.memory_space<smem>>, %arg2: memref<24xi32, #tpu.memory_space<smem>>, %arg3: memref<6xi32, #tpu.memory_space<smem>>) -> (i32, i32) {
    %c0_i32 = arith.constant 0 : i32
    %c0_i32_0 = arith.constant 0 : i32
    %c0_i32_1 = arith.constant 0 : i32
    return %c0_i32, %c0_i32_0 : i32, i32
  }
  func.func @transform_2(%arg0: i32, %arg1: memref<6xi32, #tpu.memory_space<smem>>, %arg2: memref<24xi32, #tpu.memory_space<smem>>, %arg3: memref<6xi32, #tpu.memory_space<smem>>) -> (i32, i32) {
    %c0_i32 = arith.constant 0 : i32
    %c0_i32_0 = arith.constant 0 : i32
    %c0_i32_1 = arith.constant 0 : i32
    return %c0_i32, %c0_i32_0 : i32, i32
  }
  func.func @transform_3(%arg0: i32, %arg1: memref<6xi32, #tpu.memory_space<smem>>, %arg2: memref<24xi32, #tpu.memory_space<smem>>, %arg3: memref<6xi32, #tpu.memory_space<smem>>) -> (i32, i32) {
    %c0_i32 = arith.constant 0 : i32
    %c0_i32_0 = arith.constant 0 : i32
    %c0_i32_1 = arith.constant 0 : i32
    return %c0_i32, %c0_i32_0 : i32, i32
  }
  func.func @transform_4(%arg0: i32, %arg1: memref<6xi32, #tpu.memory_space<smem>>, %arg2: memref<24xi32, #tpu.memory_space<smem>>, %arg3: memref<6xi32, #tpu.memory_space<smem>>) -> (i32, i32) {
    %c0_i32 = arith.constant 0 : i32
    %c0_i32_0 = arith.constant 0 : i32
    %c0_i32_1 = arith.constant 0 : i32
    return %c0_i32, %c0_i32_0 : i32, i32
  }
  func.func @transform_5(%arg0: i32, %arg1: memref<6xi32, #tpu.memory_space<smem>>, %arg2: memref<24xi32, #tpu.memory_space<smem>>, %arg3: memref<6xi32, #tpu.memory_space<smem>>) -> (i32, i32) {
    %c0_i32 = arith.constant 0 : i32
    %c0_i32_0 = arith.constant 0 : i32
    %c0_i32_1 = arith.constant 0 : i32
    return %c0_i32, %c0_i32_0 : i32, i32
  }
  func.func @transform_6(%arg0: i32, %arg1: memref<6xi32, #tpu.memory_space<smem>>, %arg2: memref<24xi32, #tpu.memory_space<smem>>, %arg3: memref<6xi32, #tpu.memory_space<smem>>) -> (i32, i32) {
    %c0_i32 = arith.constant 0 : i32
    %c0_i32_0 = arith.constant 0 : i32
    %c0_i32_1 = arith.constant 0 : i32
    return %c0_i32, %c0_i32_0 : i32, i32
  }
  func.func @transform_7(%arg0: i32, %arg1: memref<6xi32, #tpu.memory_space<smem>>, %arg2: memref<24xi32, #tpu.memory_space<smem>>, %arg3: memref<6xi32, #tpu.memory_space<smem>>) -> (i32, i32) {
    %c0_i32 = arith.constant 0 : i32
    %c0_i32_0 = arith.constant 0 : i32
    %c0_i32_1 = arith.constant 0 : i32
    return %c0_i32, %c0_i32_0 : i32, i32
  }
  func.func @transform_8(%arg0: i32, %arg1: memref<6xi32, #tpu.memory_space<smem>>, %arg2: memref<24xi32, #tpu.memory_space<smem>>, %arg3: memref<6xi32, #tpu.memory_space<smem>>) -> (i32, i32) {
    %c0_i32 = arith.constant 0 : i32
    %c0_i32_0 = arith.constant 0 : i32
    %c0_i32_1 = arith.constant 0 : i32
    return %c0_i32, %c0_i32_0 : i32, i32
  }
}

module attributes {stable_mosaic.version = 11 : i64} {
  func.func @kernel(%arg0: i32, %arg1: memref<2xi32, #tpu.memory_space<smem>>, %arg2: memref<2xi32, #tpu.memory_space<smem>>, %arg3: memref<8x128xf32, #tpu.memory_space<vmem>>, %arg4: memref<8x128xf32, #tpu.memory_space<vmem>>, %arg5: memref<8x128xf32, #tpu.memory_space<vmem>>, %arg6: memref<256x512xbf16, #tpu.memory_space<vmem>>, %arg7: memref<1x512xf32, #tpu.memory_space<vmem>>, %arg8: memref<128x128xbf16, #tpu.memory_space<vmem>>, %arg9: memref<128x128xbf16, #tpu.memory_space<vmem>>, %arg10: memref<128x128xbf16, #tpu.memory_space<vmem>>, %arg11: memref<256x128xbf16, #tpu.memory_space<vmem>>, %arg12: memref<1x128xf32, #tpu.memory_space<vmem>>, %arg13: memref<4x128xf32, #tpu.memory_space<vmem>>, %arg14: memref<128x128xbf16, #tpu.memory_space<vmem>>, %arg15: memref<1x128xf32, #tpu.memory_space<vmem>>, %arg16: memref<1x4x128xf32, #tpu.memory_space<vmem>>, %arg17: memref<8x128xf32, #tpu.memory_space<vmem>>, %arg18: memref<8x128xf32, #tpu.memory_space<vmem>>, %arg19: memref<8x128xf32, #tpu.memory_space<vmem>>, %arg20: memref<8x128xf32, #tpu.memory_space<vmem>>) attributes {dimension_semantics = [#tpu.dimension_semantics<arbitrary>], iteration_bounds = array<i64: 2>, scalar_prefetch = 2 : i64, scratch_operands = 4 : i64, tpu.core_type = #tpu.core_type<tc>, window_params = [{pipeline_mode = #tpu.pipeline_mode<synchronous>, transform_indices = @transform_0, window_bounds = array<i64: 8, 128>}, {pipeline_mode = #tpu.pipeline_mode<synchronous>, transform_indices = @transform_1, window_bounds = array<i64: 8, 128>}, {pipeline_mode = #tpu.pipeline_mode<synchronous>, transform_indices = @transform_2, window_bounds = array<i64: 8, 128>}, {pipeline_mode = #tpu.pipeline_mode<synchronous>, transform_indices = @transform_3, window_bounds = array<i64: 256, 512>}, {pipeline_mode = #tpu.pipeline_mode<synchronous>, transform_indices = @transform_4, window_bounds = array<i64: 1, 512>}, {pipeline_mode = #tpu.pipeline_mode<synchronous>, transform_indices = @transform_5, window_bounds = array<i64: 128, 128>}, {pipeline_mode = #tpu.pipeline_mode<synchronous>, transform_indices = @transform_6, window_bounds = array<i64: 128, 128>}, {pipeline_mode = #tpu.pipeline_mode<synchronous>, transform_indices = @transform_7, window_bounds = array<i64: 128, 128>}, {pipeline_mode = #tpu.pipeline_mode<synchronous>, transform_indices = @transform_8, window_bounds = array<i64: 256, 128>}, {pipeline_mode = #tpu.pipeline_mode<synchronous>, transform_indices = @transform_9, window_bounds = array<i64: 1, 128>}, {pipeline_mode = #tpu.pipeline_mode<synchronous>, transform_indices = @transform_10, window_bounds = array<i64: 4, 128>}, {pipeline_mode = #tpu.pipeline_mode<synchronous>, transform_indices = @transform_11, window_bounds = array<i64: 128, 128>}, {pipeline_mode = #tpu.pipeline_mode<synchronous>, transform_indices = @transform_12, window_bounds = array<i64: 1, 128>}, {transform_indices = @transform_13, window_bounds = array<i64: 1, 4, 128>}]} {
    %c0_i32 = arith.constant 0 : i32
    %0 = arith.cmpi eq, %arg0, %c0_i32 : i32
    %1 = arith.extui %0 : i1 to i32
    %c0_i32_0 = arith.constant 0 : i32
    %2 = arith.cmpi ne, %1, %c0_i32_0 : i32
    scf.if %2 {
      %c0_55 = arith.constant 0 : index
      %c0_56 = arith.constant 0 : index
      %133 = vector.load %arg4[%c0_55, %c0_56] : memref<8x128xf32, #tpu.memory_space<vmem>>, vector<8x128xf32>
      %134 = arith.truncf %133 : vector<8x128xf32> to vector<8x128xbf16>
      %c0_57 = arith.constant 0 : index
      %c0_58 = arith.constant 0 : index
      %135 = vector.load %arg9[%c0_57, %c0_58] : memref<128x128xbf16, #tpu.memory_space<vmem>>, vector<128x128xbf16>
      %cst_59 = arith.constant dense<0.000000e+00> : vector<8x128xf32>
      %136 = tpu.matmul %134, %135, %cst_59 {dimension_numbers = #tpu.dot_dimension_numbers<[1], [0], [0], [1], [0, 0, 1, 1], [], []>} : vector<8x128xbf16>, vector<128x128xbf16>, vector<8x128xf32> -> vector<8x128xf32>
      %c0_60 = arith.constant 0 : index
      %c0_61 = arith.constant 0 : index
      %137 = vector.load %arg17[%c0_60, %c0_61] : memref<8x128xf32, #tpu.memory_space<vmem>>, vector<8x128xf32>
      tpu.vector_store %arg17[%c0_60, %c0_61], %136 {strides = array<i32>} : memref<8x128xf32, #tpu.memory_space<vmem>>, vector<8x128xf32>,
      %c0_62 = arith.constant 0 : index
      %c0_63 = arith.constant 0 : index
      %138 = vector.load %arg10[%c0_62, %c0_63] : memref<128x128xbf16, #tpu.memory_space<vmem>>, vector<128x128xbf16>
      %cst_64 = arith.constant dense<0.000000e+00> : vector<8x128xf32>
      %139 = tpu.matmul %134, %138, %cst_64 {dimension_numbers = #tpu.dot_dimension_numbers<[1], [0], [0], [1], [0, 0, 1, 1], [], []>} : vector<8x128xbf16>, vector<128x128xbf16>, vector<8x128xf32> -> vector<8x128xf32>
      %c0_65 = arith.constant 0 : index
      %c0_66 = arith.constant 0 : index
      %140 = vector.load %arg18[%c0_65, %c0_66] : memref<8x128xf32, #tpu.memory_space<vmem>>, vector<8x128xf32>
      tpu.vector_store %arg18[%c0_65, %c0_66], %139 {strides = array<i32>} : memref<8x128xf32, #tpu.memory_space<vmem>>, vector<8x128xf32>,
      %cst_67 = arith.constant 0.000000e+00 : f32
      %141 = vector.broadcast %cst_67 : f32 to vector<8x128xf32>
      %c0_68 = arith.constant 0 : index
      %c0_69 = arith.constant 0 : index
      %142 = vector.load %arg19[%c0_68, %c0_69] : memref<8x128xf32, #tpu.memory_space<vmem>>, vector<8x128xf32>
      tpu.vector_store %arg19[%c0_68, %c0_69], %141 {strides = array<i32>} : memref<8x128xf32, #tpu.memory_space<vmem>>, vector<8x128xf32>,
      %cst_70 = arith.constant 0.000000e+00 : f32
      %143 = vector.broadcast %cst_70 : f32 to vector<8x128xf32>
      %c0_71 = arith.constant 0 : index
      %c0_72 = arith.constant 0 : index
      %144 = vector.load %arg20[%c0_71, %c0_72] : memref<8x128xf32, #tpu.memory_space<vmem>>, vector<8x128xf32>
      tpu.vector_store %arg20[%c0_71, %c0_72], %143 {strides = array<i32>} : memref<8x128xf32, #tpu.memory_space<vmem>>, vector<8x128xf32>,
    } else {
    }
    %3 = arith.index_cast %arg0 : i32 to index
    %4 = memref.load %arg1[%3] : memref<2xi32, #tpu.memory_space<smem>>
    %5 = tpu.iota {dimensions = array<i32: 0>} : vector<8x1xi32>
    %c0 = arith.constant 0 : index
    %c0_1 = arith.constant 0 : index
    %6 = vector.load %arg3[%c0, %c0_1] : memref<8x128xf32, #tpu.memory_space<vmem>>, vector<8x128xf32>
    %7 = vector.broadcast %4 : i32 to vector<8x1xi32>
    %8 = arith.cmpi eq, %5, %7 : vector<8x1xi32>
    %9 = arith.extui %8 : vector<8x1xi1> to vector<8x1xi32>
    %10 = arith.sitofp %9 : vector<8x1xi32> to vector<8x1xf32>
    %11 = vector.broadcast %10 : vector<8x1xf32> to vector<8x128xf32>
    %12 = arith.mulf %6, %11 : vector<8x128xf32>
    %cst = arith.constant dense<0.000000e+00> : vector<128xf32>
    %13 = vector.multi_reduction <add>, %12, %cst [0] : vector<8x128xf32> to vector<128xf32>
    %14 = vector.shape_cast %13 : vector<128xf32> to vector<1x128xf32>
    %15 = arith.index_cast %arg0 : i32 to index
    %16 = memref.load %arg2[%15] : memref<2xi32, #tpu.memory_space<smem>>
    %17 = tpu.iota {dimensions = array<i32: 0>} : vector<8x1xi32>
    %18 = vector.broadcast %16 : i32 to vector<8x1xi32>
    %19 = arith.cmpi eq, %17, %18 : vector<8x1xi32>
    %20 = arith.extui %19 : vector<8x1xi1> to vector<8x1xi32>
    %21 = arith.sitofp %20 : vector<8x1xi32> to vector<8x1xf32>
    %c0_2 = arith.constant 0 : index
    %c0_3 = arith.constant 0 : index
    %22 = vector.load %arg19[%c0_2, %c0_3] : memref<8x128xf32, #tpu.memory_space<vmem>>, vector<8x128xf32>
    %23 = vector.broadcast %21 : vector<8x1xf32> to vector<8x128xf32>
    %24 = arith.mulf %22, %23 : vector<8x128xf32>
    %cst_4 = arith.constant dense<0.000000e+00> : vector<128xf32>
    %25 = vector.multi_reduction <add>, %24, %cst_4 [0] : vector<8x128xf32> to vector<128xf32>
    %26 = vector.shape_cast %25 : vector<128xf32> to vector<1x128xf32>
    %c0_5 = arith.constant 0 : index
    %c0_6 = arith.constant 0 : index
    %27 = vector.load %arg20[%c0_5, %c0_6] : memref<8x128xf32, #tpu.memory_space<vmem>>, vector<8x128xf32>
    %28 = vector.broadcast %21 : vector<8x1xf32> to vector<8x128xf32>
    %29 = arith.mulf %27, %28 : vector<8x128xf32>
    %cst_7 = arith.constant dense<0.000000e+00> : vector<128xf32>
    %30 = vector.multi_reduction <add>, %29, %cst_7 [0] : vector<8x128xf32> to vector<128xf32>
    %31 = vector.shape_cast %30 : vector<128xf32> to vector<1x128xf32>
    %c0_i32_8 = arith.constant 0 : i32
    %32 = arith.cmpi slt, %16, %c0_i32_8 : i32
    %33 = arith.extui %32 : i1 to i32
    %34 = arith.sitofp %33 : i32 to f32
    %c5 = arith.constant 5 : index
    %c0_9 = arith.constant 0 : index
    %35 = vector.load %arg4[%c5, %c0_9] : memref<8x128xf32, #tpu.memory_space<vmem>>, vector<1x128xf32>
    %36 = vector.broadcast %34 : f32 to vector<1x128xf32>
    %37 = arith.mulf %36, %35 : vector<1x128xf32>
    %38 = arith.addf %26, %37 : vector<1x128xf32>
    %c5_10 = arith.constant 5 : index
    %c0_11 = arith.constant 0 : index
    %39 = vector.load %arg5[%c5_10, %c0_11] : memref<8x128xf32, #tpu.memory_space<vmem>>, vector<1x128xf32>
    %40 = vector.broadcast %34 : f32 to vector<1x128xf32>
    %41 = arith.mulf %40, %39 : vector<1x128xf32>
    %42 = arith.addf %31, %41 : vector<1x128xf32>
    %43 = tpu.concatenate %14, %38 in 1 : vector<1x128xf32>, vector<1x128xf32> -> vector<1x256xf32>
    %44 = arith.truncf %43 : vector<1x256xf32> to vector<1x256xbf16>
    %c0_12 = arith.constant 0 : index
    %c0_13 = arith.constant 0 : index
    %45 = vector.load %arg6[%c0_12, %c0_13] : memref<256x512xbf16, #tpu.memory_space<vmem>>, vector<256x512xbf16>
    %cst_14 = arith.constant dense<0.000000e+00> : vector<1x512xf32>
    %46 = tpu.matmul %44, %45, %cst_14 {dimension_numbers = #tpu.dot_dimension_numbers<[1], [0], [0], [1], [0, 0, 1, 1], [], []>} : vector<1x256xbf16>, vector<256x512xbf16>, vector<1x512xf32> -> vector<1x512xf32>
    %c0_15 = arith.constant 0 : index
    %c0_16 = arith.constant 0 : index
    %47 = vector.load %arg7[%c0_15, %c0_16] : memref<1x512xf32, #tpu.memory_space<vmem>>, vector<1x512xf32>
    %48 = arith.addf %46, %47 : vector<1x512xf32>
    %49 = vector.extract_strided_slice %48 {offsets = [0, 0], sizes = [1, 128], strides = [1, 1]} : vector<1x512xf32> to vector<1x128xf32>
    %50 = arith.negf %49 : vector<1x128xf32>
    %51 = math.exp %50 : vector<1x128xf32>
    %cst_17 = arith.constant 1.000000e+00 : f32
    %52 = vector.broadcast %cst_17 : f32 to vector<1x128xf32>
    %53 = arith.addf %52, %51 : vector<1x128xf32>
    %54 = arith.divf %52, %53 : vector<1x128xf32>
    %55 = vector.extract_strided_slice %48 {offsets = [0, 128], sizes = [1, 128], strides = [1, 1]} : vector<1x512xf32> to vector<1x128xf32>
    %56 = arith.negf %55 : vector<1x128xf32>
    %57 = math.exp %56 : vector<1x128xf32>
    %cst_18 = arith.constant 1.000000e+00 : f32
    %58 = vector.broadcast %cst_18 : f32 to vector<1x128xf32>
    %59 = arith.addf %58, %57 : vector<1x128xf32>
    %60 = arith.divf %58, %59 : vector<1x128xf32>
    %61 = vector.extract_strided_slice %48 {offsets = [0, 256], sizes = [1, 128], strides = [1, 1]} : vector<1x512xf32> to vector<1x128xf32>
    %62 = math.tanh %61 : vector<1x128xf32>
    %63 = vector.extract_strided_slice %48 {offsets = [0, 384], sizes = [1, 128], strides = [1, 1]} : vector<1x512xf32> to vector<1x128xf32>
    %64 = arith.negf %63 : vector<1x128xf32>
    %65 = math.exp %64 : vector<1x128xf32>
    %cst_19 = arith.constant 1.000000e+00 : f32
    %66 = vector.broadcast %cst_19 : f32 to vector<1x128xf32>
    %67 = arith.addf %66, %65 : vector<1x128xf32>
    %68 = arith.divf %66, %67 : vector<1x128xf32>
    %69 = arith.mulf %60, %42 : vector<1x128xf32>
    %70 = arith.mulf %54, %62 : vector<1x128xf32>
    %71 = arith.addf %69, %70 : vector<1x128xf32>
    %72 = math.tanh %71 : vector<1x128xf32>
    %73 = arith.mulf %68, %72 : vector<1x128xf32>
    %74 = arith.truncf %73 : vector<1x128xf32> to vector<1x128xbf16>
    %c0_20 = arith.constant 0 : index
    %c0_21 = arith.constant 0 : index
    %75 = vector.load %arg8[%c0_20, %c0_21] : memref<128x128xbf16, #tpu.memory_space<vmem>>, vector<128x128xbf16>
    %cst_22 = arith.constant dense<0.000000e+00> : vector<1x128xf32>
    %76 = tpu.matmul %74, %75, %cst_22 {dimension_numbers = #tpu.dot_dimension_numbers<[1], [0], [0], [1], [0, 0, 1, 1], [], []>} : vector<1x128xbf16>, vector<128x128xbf16>, vector<1x128xf32> -> vector<1x128xf32>
    %77 = arith.truncf %76 : vector<1x128xf32> to vector<1x128xbf16>
    %c0_23 = arith.constant 0 : index
    %c0_24 = arith.constant 0 : index
    %78 = vector.load %arg17[%c0_23, %c0_24] : memref<8x128xf32, #tpu.memory_space<vmem>>, vector<8x128xf32>
    %79 = arith.truncf %78 : vector<8x128xf32> to vector<8x128xbf16>
    %cst_25 = arith.constant dense<0.000000e+00> : vector<1x8xf32>
    %80 = tpu.matmul %77, %79, %cst_25 {dimension_numbers = #tpu.dot_dimension_numbers<[1], [1], [0], [0], [0, 0, 1, 0], [], []>} : vector<1x128xbf16>, vector<8x128xbf16>, vector<1x8xf32> -> vector<1x8xf32>
    %81 = tpu.iota {dimensions = array<i32: 1>} : vector<1x8xi32>
    %c6_i32 = arith.constant 6 : i32
    %82 = vector.broadcast %c6_i32 : i32 to vector<1x8xi32>
    %83 = arith.cmpi slt, %81, %82 : vector<1x8xi32>
    %cst_26 = arith.constant -1.000000e+30 : f32
    %84 = vector.broadcast %cst_26 : f32 to vector<1x8xf32>
    %85 = arith.select %83, %80, %84 : vector<1x8xi1>, vector<1x8xf32>
    %cst_27 = arith.constant dense<0xFF800000> : vector<1xf32>
    %86 = vector.multi_reduction <maximumf>, %85, %cst_27 [1] : vector<1x8xf32> to vector<1xf32>
    %87 = vector.shape_cast %86 : vector<1xf32> to vector<1x1xf32>
    %88 = vector.broadcast %87 : vector<1x1xf32> to vector<1x8xf32>
    %89 = arith.subf %85, %88 : vector<1x8xf32>
    %90 = math.exp %89 : vector<1x8xf32>
    %cst_28 = arith.constant dense<0.000000e+00> : vector<1xf32>
    %91 = vector.multi_reduction <add>, %90, %cst_28 [1] : vector<1x8xf32> to vector<1xf32>
    %92 = vector.shape_cast %91 : vector<1xf32> to vector<1x1xf32>
    %93 = tpu.reciprocal %92 {approx = true} : vector<1x1xf32> -> vector<1x1xf32>
    %94 = vector.broadcast %93 : vector<1x1xf32> to vector<1x8xf32>
    %95 = arith.mulf %90, %94 : vector<1x8xf32>
    %96 = arith.truncf %95 : vector<1x8xf32> to vector<1x8xbf16>
    %c0_29 = arith.constant 0 : index
    %c0_30 = arith.constant 0 : index
    %97 = vector.load %arg18[%c0_29, %c0_30] : memref<8x128xf32, #tpu.memory_space<vmem>>, vector<8x128xf32>
    %98 = arith.truncf %97 : vector<8x128xf32> to vector<8x128xbf16>
    %cst_31 = arith.constant dense<0.000000e+00> : vector<1x128xf32>
    %99 = tpu.matmul %96, %98, %cst_31 {dimension_numbers = #tpu.dot_dimension_numbers<[1], [0], [0], [1], [0, 0, 1, 1], [], []>} : vector<1x8xbf16>, vector<8x128xbf16>, vector<1x128xf32> -> vector<1x128xf32>
    %100 = tpu.concatenate %73, %99 in 1 : vector<1x128xf32>, vector<1x128xf32> -> vector<1x256xf32>
    %101 = arith.truncf %100 : vector<1x256xf32> to vector<1x256xbf16>
    %c0_32 = arith.constant 0 : index
    %c0_33 = arith.constant 0 : index
    %102 = vector.load %arg11[%c0_32, %c0_33] : memref<256x128xbf16, #tpu.memory_space<vmem>>, vector<256x128xbf16>
    %cst_34 = arith.constant dense<0.000000e+00> : vector<1x128xf32>
    %103 = tpu.matmul %101, %102, %cst_34 {dimension_numbers = #tpu.dot_dimension_numbers<[1], [0], [0], [1], [0, 0, 1, 1], [], []>} : vector<1x256xbf16>, vector<256x128xbf16>, vector<1x128xf32> -> vector<1x128xf32>
    %c0_35 = arith.constant 0 : index
    %c0_36 = arith.constant 0 : index
    %104 = vector.load %arg12[%c0_35, %c0_36] : memref<1x128xf32, #tpu.memory_space<vmem>>, vector<1x128xf32>
    %105 = arith.addf %103, %104 : vector<1x128xf32>
    %106 = vector.broadcast %arg0 : i32 to vector<8x1xi32>
    %107 = arith.cmpi eq, %17, %106 : vector<8x1xi32>
    %108 = arith.extui %107 : vector<8x1xi1> to vector<8x1xi32>
    %109 = arith.sitofp %108 : vector<8x1xi32> to vector<8x1xf32>
    %c0_37 = arith.constant 0 : index
    %c0_38 = arith.constant 0 : index
    %110 = vector.load %arg19[%c0_37, %c0_38] : memref<8x128xf32, #tpu.memory_space<vmem>>, vector<8x128xf32>
    %111 = vector.broadcast %109 : vector<8x1xf32> to vector<8x128xf32>
    %112 = vector.broadcast %105 : vector<1x128xf32> to vector<8x128xf32>
    %113 = arith.mulf %111, %112 : vector<8x128xf32>
    %114 = arith.addf %110, %113 : vector<8x128xf32>
    %c0_39 = arith.constant 0 : index
    %c0_40 = arith.constant 0 : index
    %115 = vector.load %arg19[%c0_39, %c0_40] : memref<8x128xf32, #tpu.memory_space<vmem>>, vector<8x128xf32>
    tpu.vector_store %arg19[%c0_39, %c0_40], %114 {strides = array<i32>} : memref<8x128xf32, #tpu.memory_space<vmem>>, vector<8x128xf32>,
    %c0_41 = arith.constant 0 : index
    %c0_42 = arith.constant 0 : index
    %116 = vector.load %arg20[%c0_41, %c0_42] : memref<8x128xf32, #tpu.memory_space<vmem>>, vector<8x128xf32>
    %117 = vector.broadcast %109 : vector<8x1xf32> to vector<8x128xf32>
    %118 = vector.broadcast %71 : vector<1x128xf32> to vector<8x128xf32>
    %119 = arith.mulf %117, %118 : vector<8x128xf32>
    %120 = arith.addf %116, %119 : vector<8x128xf32>
    %c0_43 = arith.constant 0 : index
    %c0_44 = arith.constant 0 : index
    %121 = vector.load %arg20[%c0_43, %c0_44] : memref<8x128xf32, #tpu.memory_space<vmem>>, vector<8x128xf32>
    tpu.vector_store %arg20[%c0_43, %c0_44], %120 {strides = array<i32>} : memref<8x128xf32, #tpu.memory_space<vmem>>, vector<8x128xf32>,
    %c0_45 = arith.constant 0 : index
    %c0_46 = arith.constant 0 : index
    %122 = vector.load %arg13[%c0_45, %c0_46] : memref<4x128xf32, #tpu.memory_space<vmem>>, vector<4x128xf32>
    %123 = vector.broadcast %105 : vector<1x128xf32> to vector<4x128xf32>
    %124 = arith.addf %123, %122 : vector<4x128xf32>
    %125 = arith.truncf %124 : vector<4x128xf32> to vector<4x128xbf16>
    %c0_47 = arith.constant 0 : index
    %c0_48 = arith.constant 0 : index
    %126 = vector.load %arg14[%c0_47, %c0_48] : memref<128x128xbf16, #tpu.memory_space<vmem>>, vector<128x128xbf16>
    %cst_49 = arith.constant dense<0.000000e+00> : vector<4x128xf32>
    %127 = tpu.matmul %125, %126, %cst_49 {dimension_numbers = #tpu.dot_dimension_numbers<[1], [0], [0], [1], [0, 0, 1, 1], [], []>} : vector<4x128xbf16>, vector<128x128xbf16>, vector<4x128xf32> -> vector<4x128xf32>
    %c0_50 = arith.constant 0 : index
    %c0_51 = arith.constant 0 : index
    %128 = vector.load %arg15[%c0_50, %c0_51] : memref<1x128xf32, #tpu.memory_space<vmem>>, vector<1x128xf32>
    %129 = vector.broadcast %128 : vector<1x128xf32> to vector<4x128xf32>
    %130 = arith.addf %127, %129 : vector<4x128xf32>
    %131 = vector.shape_cast %130 : vector<4x128xf32> to vector<1x4x128xf32>
    %c0_52 = arith.constant 0 : index
    %c0_53 = arith.constant 0 : index
    %c0_54 = arith.constant 0 : index
    %132 = vector.load %arg16[%c0_52, %c0_53, %c0_54] : memref<1x4x128xf32, #tpu.memory_space<vmem>>, vector<1x4x128xf32>
    tpu.vector_store %arg16[%c0_52, %c0_53, %c0_54], %131 {strides = array<i32>} : memref<1x4x128xf32, #tpu.memory_space<vmem>>, vector<1x4x128xf32>,
    return
  }
  func.func @transform_0(%arg0: i32, %arg1: memref<2xi32, #tpu.memory_space<smem>>, %arg2: memref<2xi32, #tpu.memory_space<smem>>) -> (i32, i32) {
    %c0_i32 = arith.constant 0 : i32
    %c0_i32_0 = arith.constant 0 : i32
    %c0_i32_1 = arith.constant 0 : i32
    return %c0_i32, %c0_i32_0 : i32, i32
  }
  func.func @transform_1(%arg0: i32, %arg1: memref<2xi32, #tpu.memory_space<smem>>, %arg2: memref<2xi32, #tpu.memory_space<smem>>) -> (i32, i32) {
    %c0_i32 = arith.constant 0 : i32
    %c0_i32_0 = arith.constant 0 : i32
    %c0_i32_1 = arith.constant 0 : i32
    return %c0_i32, %c0_i32_0 : i32, i32
  }
  func.func @transform_2(%arg0: i32, %arg1: memref<2xi32, #tpu.memory_space<smem>>, %arg2: memref<2xi32, #tpu.memory_space<smem>>) -> (i32, i32) {
    %c0_i32 = arith.constant 0 : i32
    %c0_i32_0 = arith.constant 0 : i32
    %c0_i32_1 = arith.constant 0 : i32
    return %c0_i32, %c0_i32_0 : i32, i32
  }
  func.func @transform_3(%arg0: i32, %arg1: memref<2xi32, #tpu.memory_space<smem>>, %arg2: memref<2xi32, #tpu.memory_space<smem>>) -> (i32, i32) {
    %c0_i32 = arith.constant 0 : i32
    %c0_i32_0 = arith.constant 0 : i32
    %c0_i32_1 = arith.constant 0 : i32
    return %c0_i32, %c0_i32_0 : i32, i32
  }
  func.func @transform_4(%arg0: i32, %arg1: memref<2xi32, #tpu.memory_space<smem>>, %arg2: memref<2xi32, #tpu.memory_space<smem>>) -> (i32, i32) {
    %c0_i32 = arith.constant 0 : i32
    %c0_i32_0 = arith.constant 0 : i32
    %c0_i32_1 = arith.constant 0 : i32
    return %c0_i32, %c0_i32_0 : i32, i32
  }
  func.func @transform_5(%arg0: i32, %arg1: memref<2xi32, #tpu.memory_space<smem>>, %arg2: memref<2xi32, #tpu.memory_space<smem>>) -> (i32, i32) {
    %c0_i32 = arith.constant 0 : i32
    %c0_i32_0 = arith.constant 0 : i32
    %c0_i32_1 = arith.constant 0 : i32
    return %c0_i32, %c0_i32_0 : i32, i32
  }
  func.func @transform_6(%arg0: i32, %arg1: memref<2xi32, #tpu.memory_space<smem>>, %arg2: memref<2xi32, #tpu.memory_space<smem>>) -> (i32, i32) {
    %c0_i32 = arith.constant 0 : i32
    %c0_i32_0 = arith.constant 0 : i32
    %c0_i32_1 = arith.constant 0 : i32
    return %c0_i32, %c0_i32_0 : i32, i32
  }
  func.func @transform_7(%arg0: i32, %arg1: memref<2xi32, #tpu.memory_space<smem>>, %arg2: memref<2xi32, #tpu.memory_space<smem>>) -> (i32, i32) {
    %c0_i32 = arith.constant 0 : i32
    %c0_i32_0 = arith.constant 0 : i32
    %c0_i32_1 = arith.constant 0 : i32
    return %c0_i32, %c0_i32_0 : i32, i32
  }
  func.func @transform_8(%arg0: i32, %arg1: memref<2xi32, #tpu.memory_space<smem>>, %arg2: memref<2xi32, #tpu.memory_space<smem>>) -> (i32, i32) {
    %c0_i32 = arith.constant 0 : i32
    %c0_i32_0 = arith.constant 0 : i32
    %c0_i32_1 = arith.constant 0 : i32
    return %c0_i32, %c0_i32_0 : i32, i32
  }
  func.func @transform_9(%arg0: i32, %arg1: memref<2xi32, #tpu.memory_space<smem>>, %arg2: memref<2xi32, #tpu.memory_space<smem>>) -> (i32, i32) {
    %c0_i32 = arith.constant 0 : i32
    %c0_i32_0 = arith.constant 0 : i32
    %c0_i32_1 = arith.constant 0 : i32
    return %c0_i32, %c0_i32_0 : i32, i32
  }
  func.func @transform_10(%arg0: i32, %arg1: memref<2xi32, #tpu.memory_space<smem>>, %arg2: memref<2xi32, #tpu.memory_space<smem>>) -> (i32, i32) {
    %c0_i32 = arith.constant 0 : i32
    %c0_i32_0 = arith.constant 0 : i32
    %c0_i32_1 = arith.constant 0 : i32
    return %c0_i32, %c0_i32_0 : i32, i32
  }
  func.func @transform_11(%arg0: i32, %arg1: memref<2xi32, #tpu.memory_space<smem>>, %arg2: memref<2xi32, #tpu.memory_space<smem>>) -> (i32, i32) {
    %c0_i32 = arith.constant 0 : i32
    %c0_i32_0 = arith.constant 0 : i32
    %c0_i32_1 = arith.constant 0 : i32
    return %c0_i32, %c0_i32_0 : i32, i32
  }
  func.func @transform_12(%arg0: i32, %arg1: memref<2xi32, #tpu.memory_space<smem>>, %arg2: memref<2xi32, #tpu.memory_space<smem>>) -> (i32, i32) {
    %c0_i32 = arith.constant 0 : i32
    %c0_i32_0 = arith.constant 0 : i32
    %c0_i32_1 = arith.constant 0 : i32
    return %c0_i32, %c0_i32_0 : i32, i32
  }
  func.func @transform_13(%arg0: i32, %arg1: memref<2xi32, #tpu.memory_space<smem>>, %arg2: memref<2xi32, #tpu.memory_space<smem>>) -> (i32, i32, i32) {
    %c0_i32 = arith.constant 0 : i32
    %c0_i32_0 = arith.constant 0 : i32
    %c0_i32_1 = arith.constant 0 : i32
    return %arg0, %c0_i32, %c0_i32_0 : i32, i32, i32
  }
}

</mosaic_0001>

<llo_original>
// kernel: _forward_jit.3
$region0: #{_forward_jit.3}
  #allocation0 [shape = 'u32[]', space=smem, size = 0x4, offset = 0x4, fixed_abs, tag = 'smem constant byte address 0x4 - core index']
  #allocation1 [shape = 'u32[144,128]{1,0:T(1,128)}', space=vmem, size = 0x12000, scoped, tag = 'internal scratch']
  #allocation2 [shape = 'f32[8,128]{1,0:T(8,128)}', space=vmem, size = 0x1000, scoped, tag = 'scratch operand']
  #allocation3 [shape = 'f32[8,128]{1,0:T(8,128)}', space=vmem, size = 0x1000, scoped, tag = 'scratch operand']
  #allocation4 [shape = 'f32[8,128]{1,0:T(8,128)}', space=vmem, size = 0x1000, scoped, tag = 'scratch operand']
  #allocation5 [shape = 'f32[8,128]{1,0:T(8,128)}', space=vmem, size = 0x1000, scoped, tag = 'scratch operand']
  #allocation6 [shape = 's32[1]{0}', space=sflag, size = 0x4, scoped, tag = 'scoped memory for _forward_jit.3']
  #allocation7 [shape = 'u8[512]{0}', space=smem, size = 0x200, scoped, tag = 'prefetched SMEM operand 0']
  #allocation8 [shape = 'u8[512]{0}', space=smem, size = 0x200, scoped, tag = 'prefetched SMEM operand 1']
  %s0 = inlined_call_operand.vmem [shape: s32[2], index: 0, kind: input, shape index: {}]
  %s1 = inlined_call_operand.vmem [shape: s32[2], index: 1, kind: input, shape index: {}]
  %s2 = inlined_call_operand.vmem [shape: f32[8,128], index: 2, kind: input, shape index: {}]
  %s3 = inlined_call_operand.vmem [shape: f32[8,128], index: 3, kind: input, shape index: {}]
  %s4 = inlined_call_operand.vmem [shape: f32[8,128], index: 4, kind: input, shape index: {}]
  %s5 = inlined_call_operand.vmem [shape: bf16[256,512], index: 5, kind: input, shape index: {}]
  %s6 = inlined_call_operand.vmem [shape: f32[1,512], index: 6, kind: input, shape index: {}]
  %s7 = inlined_call_operand.vmem [shape: bf16[128,128], index: 7, kind: input, shape index: {}]
  %s8 = inlined_call_operand.vmem [shape: bf16[128,128], index: 8, kind: input, shape index: {}]
  %s9 = inlined_call_operand.vmem [shape: bf16[128,128], index: 9, kind: input, shape index: {}]
  %s10 = inlined_call_operand.vmem [shape: bf16[256,128], index: 10, kind: input, shape index: {}]
  %s11 = inlined_call_operand.vmem [shape: f32[1,128], index: 11, kind: input, shape index: {}]
  %s12 = inlined_call_operand.vmem [shape: f32[4,128], index: 12, kind: input, shape index: {}]
  %s13 = inlined_call_operand.vmem [shape: bf16[128,128], index: 13, kind: input, shape index: {}]
  %s14 = inlined_call_operand.vmem [shape: f32[1,128], index: 14, kind: input, shape index: {}]
  %s15 = inlined_call_operand.hbm [shape: f32[2,4,128], index: 15, kind: output, shape index: {}]
  %s16 = sld [smem:[#allocation0]]
  $region89: #{_forward_jit.3} parent=0
    _
  %s18 = ssub.s32 1, %s16
  %s19 = scalar_select 0, %s18, %s16
  %s20 = sshll.u32 %s0, 4
  %s21 = int_to_ptr.vmem [resolvable:$true] %s20
  %23 = dma.vmem_to_smem %s21, 16, [#allocation7], [#allocation6]
  %s24 = sshll.u32 %s1, 4
  %s25 = int_to_ptr.vmem [resolvable:$true] %s24
  %27 = dma.vmem_to_smem %s25, 16, [#allocation8], [#allocation6]
  %28 = dma.done [#allocation6], 32
  %29 = sfence
  $region1: #{_forward_jit.3} parent=0
    #allocation9 [shape = 'u8[4096]{0}', space=vmem, size = 0x1000, scoped, tag = 'output window, operand 0']
    #allocation10 [shape = 's32[2]{0}', space=sflag, size = 0x8, scoped, tag = 'scoped memory for _forward_jit.3']
    %30 = vsyncpa [#allocation10], 0
    %s31 = scalar_lea.sflag [#allocation10], 1
    %32 = vsyncpa %s31, 0
    loop: start=0, step=1, limit=4
    $region2: #{_forward_jit.3} parent=1 // loop_pre_header
      _
    $region3: #{_forward_jit.3} parent=1 // loop_header
      %s34 = sphi 0, %s38
      %p35 = scmp.ge.s32.totalorder %s34, 4
      %s42 = sphi 0, %s42
      %s44 = sphi 0, %s42
      %s45 = sphi 0, %s44
      %s59 = sphi 0, %s45
      %s63 = sphi 0, %s63
      %s65 = sphi 0, %s63
      %s66 = sphi 0, %s65
      %s80 = sphi 0, %s66
      %s84 = sphi 0, %s84
      %s86 = sphi 0, %s84
      %s87 = sphi 0, %s86
      %s101 = sphi 0, %s87
      %s105 = sphi 0, %s105
      %s107 = sphi 0, %s105
      %s108 = sphi 0, %s107
      %s122 = sphi 0, %s108
      %s126 = sphi 0, %s126
      %s128 = sphi 0, %s126
      %s129 = sphi 0, %s128
      %s143 = sphi 0, %s129
      %s147 = sphi 0, %s147
      %s149 = sphi 0, %s147
      %s150 = sphi 0, %s149
      %s164 = sphi 0, %s150
      %s168 = sphi 0, %s168
      %s170 = sphi 0, %s168
      %s171 = sphi 0, %s170
      %s185 = sphi 0, %s171
      %s189 = sphi 0, %s189
      %s191 = sphi 0, %s189
      %s192 = sphi 0, %s191
      %s206 = sphi 0, %s192
      %s210 = sphi 0, %s210
      %s212 = sphi 0, %s210
      %s213 = sphi 0, %s212
      %s227 = sphi 0, %s213
      %s231 = sphi 0, %s231
      %s233 = sphi 0, %s231
      %s234 = sphi 0, %s233
      %s248 = sphi 0, %s234
      %s252 = sphi 0, %s252
      %s254 = sphi 0, %s252
      %s255 = sphi 0, %s254
      %s269 = sphi 0, %s255
      %s273 = sphi 0, %s273
      %s275 = sphi 0, %s273
      %s276 = sphi 0, %s275
      %s290 = sphi 0, %s276
      %s294 = sphi 0, %s294
      %s296 = sphi 0, %s294
      %s297 = sphi 0, %s296
      %s311 = sphi 0, %s297
      %s317 = sphi 0, %s319
      %s320 = sphi 0, %s317
      %s321 = sphi 0, %s320
      %s337 = sphi 0, %s321
    $region4: #{_forward_jit.3} parent=1 // loop_header_branch
      %37 = sbr.rel (%p35) target = $region8
    $region5: #{_forward_jit.3} parent=1 // loop_body
      %s39 = ssub.s32 %s34, 1
      %s40 = ssub.s32 %s34, 2
      %s41 = sadd.s32 %s34, 1
      %s43 = sadd.s32 %s42, 1
      %p46 = scmp.eq.s32.totalorder %s34, 1
      %p47 = scmp.ne.s32.totalorder %s42, %s44
      %p48 = scmp.eq.s32.totalorder %s34, 0
      %p49 = por %p47, %p48
      %p50 = scmp.ne.s32.totalorder %s42, %s44
      %p51 = scmp.eq.s32.totalorder %s39, 1
      %p52 = por %p50, %p51
      %p53 = scmp.ne.s32.totalorder %s44, %s45
      %p54 = scmp.eq.s32.totalorder %s39, 0
      %p55 = por %p53, %p54
      %p56 = scmp.ne.s32.totalorder %s44, %s45
      %p57 = scmp.eq.s32.totalorder %s40, 1
      %p58 = por %p56, %p57
      %p60 = scmp.ne.s32.totalorder %s45, %s59
      %p61 = scmp.eq.s32.totalorder %s40, 0
      %p62 = por %p60, %p61
      %s64 = sadd.s32 %s63, 1
      %p67 = scmp.eq.s32.totalorder %s34, 1
      %p68 = scmp.ne.s32.totalorder %s63, %s65
      %p69 = scmp.eq.s32.totalorder %s34, 0
      %p70 = por %p68, %p69
      %p71 = scmp.ne.s32.totalorder %s63, %s65
      %p72 = scmp.eq.s32.totalorder %s39, 1
      %p73 = por %p71, %p72
      %p74 = scmp.ne.s32.totalorder %s65, %s66
      %p75 = scmp.eq.s32.totalorder %s39, 0
      %p76 = por %p74, %p75
      %p77 = scmp.ne.s32.totalorder %s65, %s66
      %p78 = scmp.eq.s32.totalorder %s40, 1
      %p79 = por %p77, %p78
      %p81 = scmp.ne.s32.totalorder %s66, %s80
      %p82 = scmp.eq.s32.totalorder %s40, 0
      %p83 = por %p81, %p82
      %s85 = sadd.s32 %s84, 1
      %p88 = scmp.eq.s32.totalorder %s34, 1
      %p89 = scmp.ne.s32.totalorder %s84, %s86
      %p90 = scmp.eq.s32.totalorder %s34, 0
      %p91 = por %p89, %p90
      %p92 = scmp.ne.s32.totalorder %s84, %s86
      %p93 = scmp.eq.s32.totalorder %s39, 1
      %p94 = por %p92, %p93
      %p95 = scmp.ne.s32.totalorder %s86, %s87
      %p96 = scmp.eq.s32.totalorder %s39, 0
      %p97 = por %p95, %p96
      %p98 = scmp.ne.s32.totalorder %s86, %s87
      %p99 = scmp.eq.s32.totalorder %s40, 1
      %p100 = por %p98, %p99
      %p102 = scmp.ne.s32.totalorder %s87, %s101
      %p103 = scmp.eq.s32.totalorder %s40, 0
      %p104 = por %p102, %p103
      %s106 = sadd.s32 %s105, 1
      %p109 = scmp.eq.s32.totalorder %s34, 1
      %p110 = scmp.ne.s32.totalorder %s105, %s107
      %p111 = scmp.eq.s32.totalorder %s34, 0
      %p112 = por %p110, %p111
      %p113 = scmp.ne.s32.totalorder %s105, %s107
      %p114 = scmp.eq.s32.totalorder %s39, 1
      %p115 = por %p113, %p114
      %p116 = scmp.ne.s32.totalorder %s107, %s108
      %p117 = scmp.eq.s32.totalorder %s39, 0
      %p118 = por %p116, %p117
      %p119 = scmp.ne.s32.totalorder %s107, %s108
      %p120 = scmp.eq.s32.totalorder %s40, 1
      %p121 = por %p119, %p120
      %p123 = scmp.ne.s32.totalorder %s108, %s122
      %p124 = scmp.eq.s32.totalorder %s40, 0
      %p125 = por %p123, %p124
      %s127 = sadd.s32 %s126, 1
      %p130 = scmp.eq.s32.totalorder %s34, 1
      %p131 = scmp.ne.s32.totalorder %s126, %s128
      %p132 = scmp.eq.s32.totalorder %s34, 0
      %p133 = por %p131, %p132
      %p134 = scmp.ne.s32.totalorder %s126, %s128
      %p135 = scmp.eq.s32.totalorder %s39, 1
      %p136 = por %p134, %p135
      %p137 = scmp.ne.s32.totalorder %s128, %s129
      %p138 = scmp.eq.s32.totalorder %s39, 0
      %p139 = por %p137, %p138
      %p140 = scmp.ne.s32.totalorder %s128, %s129
      %p141 = scmp.eq.s32.totalorder %s40, 1
      %p142 = por %p140, %p141
      %p144 = scmp.ne.s32.totalorder %s129, %s143
      %p145 = scmp.eq.s32.totalorder %s40, 0
      %p146 = por %p144, %p145
      %s148 = sadd.s32 %s147, 1
      %p151 = scmp.eq.s32.totalorder %s34, 1
      %p152 = scmp.ne.s32.totalorder %s147, %s149
      %p153 = scmp.eq.s32.totalorder %s34, 0
      %p154 = por %p152, %p153
      %p155 = scmp.ne.s32.totalorder %s147, %s149
      %p156 = scmp.eq.s32.totalorder %s39, 1
      %p157 = por %p155, %p156
      %p158 = scmp.ne.s32.totalorder %s149, %s150
      %p159 = scmp.eq.s32.totalorder %s39, 0
      %p160 = por %p158, %p159
      %p161 = scmp.ne.s32.totalorder %s149, %s150
      %p162 = scmp.eq.s32.totalorder %s40, 1
      %p163 = por %p161, %p162
      %p165 = scmp.ne.s32.totalorder %s150, %s164
      %p166 = scmp.eq.s32.totalorder %s40, 0
      %p167 = por %p165, %p166
      %s169 = sadd.s32 %s168, 1
      %p172 = scmp.eq.s32.totalorder %s34, 1
      %p173 = scmp.ne.s32.totalorder %s168, %s170
      %p174 = scmp.eq.s32.totalorder %s34, 0
      %p175 = por %p173, %p174
      %p176 = scmp.ne.s32.totalorder %s168, %s170
      %p177 = scmp.eq.s32.totalorder %s39, 1
      %p178 = por %p176, %p177
      %p179 = scmp.ne.s32.totalorder %s170, %s171
      %p180 = scmp.eq.s32.totalorder %s39, 0
      %p181 = por %p179, %p180
      %p182 = scmp.ne.s32.totalorder %s170, %s171
      %p183 = scmp.eq.s32.totalorder %s40, 1
      %p184 = por %p182, %p183
      %p186 = scmp.ne.s32.totalorder %s171, %s185
      %p187 = scmp.eq.s32.totalorder %s40, 0
      %p188 = por %p186, %p187
      %s190 = sadd.s32 %s189, 1
      %p193 = scmp.eq.s32.totalorder %s34, 1
      %p194 = scmp.ne.s32.totalorder %s189, %s191
      %p195 = scmp.eq.s32.totalorder %s34, 0
      %p196 = por %p194, %p195
      %p197 = scmp.ne.s32.totalorder %s189, %s191
      %p198 = scmp.eq.s32.totalorder %s39, 1
      %p199 = por %p197, %p198
      %p200 = scmp.ne.s32.totalorder %s191, %s192
      %p201 = scmp.eq.s32.totalorder %s39, 0
      %p202 = por %p200, %p201
      %p203 = scmp.ne.s32.totalorder %s191, %s192
      %p204 = scmp.eq.s32.totalorder %s40, 1
      %p205 = por %p203, %p204
      %p207 = scmp.ne.s32.totalorder %s192, %s206
      %p208 = scmp.eq.s32.totalorder %s40, 0
      %p209 = por %p207, %p208
      %s211 = sadd.s32 %s210, 1
      %p214 = scmp.eq.s32.totalorder %s34, 1
      %p215 = scmp.ne.s32.totalorder %s210, %s212
      %p216 = scmp.eq.s32.totalorder %s34, 0
      %p217 = por %p215, %p216
      %p218 = scmp.ne.s32.totalorder %s210, %s212
      %p219 = scmp.eq.s32.totalorder %s39, 1
      %p220 = por %p218, %p219
      %p221 = scmp.ne.s32.totalorder %s212, %s213
      %p222 = scmp.eq.s32.totalorder %s39, 0
      %p223 = por %p221, %p222
      %p224 = scmp.ne.s32.totalorder %s212, %s213
      %p225 = scmp.eq.s32.totalorder %s40, 1
      %p226 = por %p224, %p225
      %p228 = scmp.ne.s32.totalorder %s213, %s227
      %p229 = scmp.eq.s32.totalorder %s40, 0
      %p230 = por %p228, %p229
      %s232 = sadd.s32 %s231, 1
      %p235 = scmp.eq.s32.totalorder %s34, 1
      %p236 = scmp.ne.s32.totalorder %s231, %s233
      %p237 = scmp.eq.s32.totalorder %s34, 0
      %p238 = por %p236, %p237
      %p239 = scmp.ne.s32.totalorder %s231, %s233
      %p240 = scmp.eq.s32.totalorder %s39, 1
      %p241 = por %p239, %p240
      %p242 = scmp.ne.s32.totalorder %s233, %s234
      %p243 = scmp.eq.s32.totalorder %s39, 0
      %p244 = por %p242, %p243
      %p245 = scmp.ne.s32.totalorder %s233, %s234
      %p246 = scmp.eq.s32.totalorder %s40, 1
      %p247 = por %p245, %p246
      %p249 = scmp.ne.s32.totalorder %s234, %s248
      %p250 = scmp.eq.s32.totalorder %s40, 0
      %p251 = por %p249, %p250
      %s253 = sadd.s32 %s252, 1
      %p256 = scmp.eq.s32.totalorder %s34, 1
      %p257 = scmp.ne.s32.totalorder %s252, %s254
      %p258 = scmp.eq.s32.totalorder %s34, 0
      %p259 = por %p257, %p258
      %p260 = scmp.ne.s32.totalorder %s252, %s254
      %p261 = scmp.eq.s32.totalorder %s39, 1
      %p262 = por %p260, %p261
      %p263 = scmp.ne.s32.totalorder %s254, %s255
      %p264 = scmp.eq.s32.totalorder %s39, 0
      %p265 = por %p263, %p264
      %p266 = scmp.ne.s32.totalorder %s254, %s255
      %p267 = scmp.eq.s32.totalorder %s40, 1
      %p268 = por %p266, %p267
      %p270 = scmp.ne.s32.totalorder %s255, %s269
      %p271 = scmp.eq.s32.totalorder %s40, 0
      %p272 = por %p270, %p271
      %s274 = sadd.s32 %s273, 1
      %p277 = scmp.eq.s32.totalorder %s34, 1
      %p278 = scmp.ne.s32.totalorder %s273, %s275
      %p279 = scmp.eq.s32.totalorder %s34, 0
      %p280 = por %p278, %p279
      %p281 = scmp.ne.s32.totalorder %s273, %s275
      %p282 = scmp.eq.s32.totalorder %s39, 1
      %p283 = por %p281, %p282
      %p284 = scmp.ne.s32.totalorder %s275, %s276
      %p285 = scmp.eq.s32.totalorder %s39, 0
      %p286 = por %p284, %p285
      %p287 = scmp.ne.s32.totalorder %s275, %s276
      %p288 = scmp.eq.s32.totalorder %s40, 1
      %p289 = por %p287, %p288
      %p291 = scmp.ne.s32.totalorder %s276, %s290
      %p292 = scmp.eq.s32.totalorder %s40, 0
      %p293 = por %p291, %p292
      %s295 = sadd.s32 %s294, 1
      %p298 = scmp.eq.s32.totalorder %s34, 1
      %p299 = scmp.ne.s32.totalorder %s294, %s296
      %p300 = scmp.eq.s32.totalorder %s34, 0
      %p301 = por %p299, %p300
      %p302 = scmp.ne.s32.totalorder %s294, %s296
      %p303 = scmp.eq.s32.totalorder %s39, 1
      %p304 = por %p302, %p303
      %p305 = scmp.ne.s32.totalorder %s296, %s297
      %p306 = scmp.eq.s32.totalorder %s39, 0
      %p307 = por %p305, %p306
      %p308 = scmp.ne.s32.totalorder %s296, %s297
      %p309 = scmp.eq.s32.totalorder %s40, 1
      %p310 = por %p308, %p309
      %p312 = scmp.ne.s32.totalorder %s297, %s311
      %p313 = scmp.eq.s32.totalorder %s40, 0
      %p314 = por %p312, %p313
      %s315 = ssub.s32 %s34, %s41
      %p316 = scmp.eq.s32.totalorder %s315, 0
      %s318 = sadd.s32 %s317, 1
      %s319 = scalar_select %p316, %s317, %s318
      %p322 = pneg %p316
      %p323 = scmp.eq.s32.totalorder %s34, 1
      %p324 = por %p322, %p323
      %p325 = scmp.ne.s32.totalorder %s317, %s320
      %p326 = scmp.eq.s32.totalorder %s34, 0
      %p327 = por %p325, %p326
      %p328 = scmp.ne.s32.totalorder %s317, %s320
      %p329 = scmp.eq.s32.totalorder %s39, 1
      %p330 = por %p328, %p329
      %p331 = scmp.ne.s32.totalorder %s320, %s321
      %p332 = scmp.eq.s32.totalorder %s39, 0
      %p333 = por %p331, %p332
      %p334 = scmp.ne.s32.totalorder %s320, %s321
      %p335 = scmp.eq.s32.totalorder %s40, 1
      %p336 = por %p334, %p335
      %p338 = scmp.ne.s32.totalorder %s321, %s337
      %p339 = scmp.eq.s32.totalorder %s40, 0
      %p340 = por %p338, %p339
      %p341 = scmp.le.s32.totalorder 1, %s34
      %p342 = scmp.lt.s32.totalorder %s34, 3
      %p343 = pnand %p341, %p342
      %p344 = pneg %p343
      // Predicated region
      $region9: #{_forward_jit.3} parent=5 // pred_check
        _
      $region10: #{_forward_jit.3} parent=5 // pred_check_branch
        %346 = sbr.rel (%p343) target = $region12
      $region11: #{_forward_jit.3} parent=5 // pred_region
        %s347 = ssub.s32 %s34, 1
        // Predicated region
        $region13: #{_forward_jit.3} parent=11 // pred_check
          %p348 = pneg %p55
        $region14: #{_forward_jit.3} parent=11 // pred_check_branch
          %350 = sbr.rel (%p348) target = $region16
        $region15: #{_forward_jit.3} parent=11 // pred_region
          _
        $region16: #{_forward_jit.3} parent=11 // pred_fallthru
          _
        // Predicated region
        $region17: #{_forward_jit.3} parent=11 // pred_check
          %p351 = pneg %p76
        $region18: #{_forward_jit.3} parent=11 // pred_check_branch
          %353 = sbr.rel (%p351) target = $region20
        $region19: #{_forward_jit.3} parent=11 // pred_region
          _
        $region20: #{_forward_jit.3} parent=11 // pred_fallthru
          _
        // Predicated region
        $region21: #{_forward_jit.3} parent=11 // pred_check
          %p354 = pneg %p97
        $region22: #{_forward_jit.3} parent=11 // pred_check_branch
          %356 = sbr.rel (%p354) target = $region24
        $region23: #{_forward_jit.3} parent=11 // pred_region
          _
        $region24: #{_forward_jit.3} parent=11 // pred_fallthru
          _
        // Predicated region
        $region25: #{_forward_jit.3} parent=11 // pred_check
          %p357 = pneg %p118
        $region26: #{_forward_jit.3} parent=11 // pred_check_branch
          %359 = sbr.rel (%p357) target = $region28
        $region27: #{_forward_jit.3} parent=11 // pred_region
          _
        $region28: #{_forward_jit.3} parent=11 // pred_fallthru
          _
        // Predicated region
        $region29: #{_forward_jit.3} parent=11 // pred_check
          %p360 = pneg %p139
        $region30: #{_forward_jit.3} parent=11 // pred_check_branch
          %362 = sbr.rel (%p360) target = $region32
        $region31: #{_forward_jit.3} parent=11 // pred_region
          _
        $region32: #{_forward_jit.3} parent=11 // pred_fallthru
          _
        // Predicated region
        $region33: #{_forward_jit.3} parent=11 // pred_check
          %p363 = pneg %p160
        $region34: #{_forward_jit.3} parent=11 // pred_check_branch
          %365 = sbr.rel (%p363) target = $region36
        $region35: #{_forward_jit.3} parent=11 // pred_region
          _
        $region36: #{_forward_jit.3} parent=11 // pred_fallthru
          _
        // Predicated region
        $region37: #{_forward_jit.3} parent=11 // pred_check
          %p366 = pneg %p181
        $region38: #{_forward_jit.3} parent=11 // pred_check_branch
          %368 = sbr.rel (%p366) target = $region40
        $region39: #{_forward_jit.3} parent=11 // pred_region
          _
        $region40: #{_forward_jit.3} parent=11 // pred_fallthru
          _
        // Predicated region
        $region41: #{_forward_jit.3} parent=11 // pred_check
          %p369 = pneg %p202
        $region42: #{_forward_jit.3} parent=11 // pred_check_branch
          %371 = sbr.rel (%p369) target = $region44
        $region43: #{_forward_jit.3} parent=11 // pred_region
          _
        $region44: #{_forward_jit.3} parent=11 // pred_fallthru
          _
        // Predicated region
        $region45: #{_forward_jit.3} parent=11 // pred_check
          %p372 = pneg %p223
        $region46: #{_forward_jit.3} parent=11 // pred_check_branch
          %374 = sbr.rel (%p372) target = $region48
        $region47: #{_forward_jit.3} parent=11 // pred_region
          _
        $region48: #{_forward_jit.3} parent=11 // pred_fallthru
          _
        // Predicated region
        $region49: #{_forward_jit.3} parent=11 // pred_check
          %p375 = pneg %p244
        $region50: #{_forward_jit.3} parent=11 // pred_check_branch
          %377 = sbr.rel (%p375) target = $region52
        $region51: #{_forward_jit.3} parent=11 // pred_region
          _
        $region52: #{_forward_jit.3} parent=11 // pred_fallthru
          _
        // Predicated region
        $region53: #{_forward_jit.3} parent=11 // pred_check
          %p378 = pneg %p265
        $region54: #{_forward_jit.3} parent=11 // pred_check_branch
          %380 = sbr.rel (%p378) target = $region56
        $region55: #{_forward_jit.3} parent=11 // pred_region
          _
        $region56: #{_forward_jit.3} parent=11 // pred_fallthru
          _
        // Predicated region
        $region57: #{_forward_jit.3} parent=11 // pred_check
          %p381 = pneg %p286
        $region58: #{_forward_jit.3} parent=11 // pred_check_branch
          %383 = sbr.rel (%p381) target = $region60
        $region59: #{_forward_jit.3} parent=11 // pred_region
          _
        $region60: #{_forward_jit.3} parent=11 // pred_fallthru
          _
        // Predicated region
        $region61: #{_forward_jit.3} parent=11 // pred_check
          %p384 = pneg %p307
        $region62: #{_forward_jit.3} parent=11 // pred_check_branch
          %386 = sbr.rel (%p384) target = $region64
        $region63: #{_forward_jit.3} parent=11 // pred_region
          _
        $region64: #{_forward_jit.3} parent=11 // pred_fallthru
          _
      $region12: #{_forward_jit.3} parent=5 // pred_fallthru
        _
      %p387 = scmp.lt.s32.totalorder %s34, 2
      // Predicated region
      $region65: #{_forward_jit.3} parent=5 // pred_check
        %p388 = pneg %p387
      $region66: #{_forward_jit.3} parent=5 // pred_check_branch
        %390 = sbr.rel (%p388) target = $region68
      $region67: #{_forward_jit.3} parent=5 // pred_region
        _
      $region68: #{_forward_jit.3} parent=5 // pred_fallthru
        _
      %p391 = scmp.le.s32.totalorder 1, %s34
      %p392 = scmp.lt.s32.totalorder %s34, 3
      %p393 = pnand %p391, %p392
      %p394 = pneg %p393
      // Predicated region
      $region69: #{_forward_jit.3} parent=5 // pred_check
        _
      $region70: #{_forward_jit.3} parent=5 // pred_check_branch
        %396 = sbr.rel (%p393) target = $region72
      $region71: #{_forward_jit.3} parent=5 // pred_region
        %s397 = ssub.s32 %s34, 1
        %p398 = pneg %p55
        %p399 = pneg %p52
        %p400 = pneg %p76
        %p401 = pneg %p73
        %p402 = pneg %p97
        %p403 = pneg %p94
        %p404 = pneg %p118
        %p405 = pneg %p115
        %p406 = pneg %p139
        %p407 = pneg %p136
        %p408 = pneg %p160
        %p409 = pneg %p157
        %p410 = pneg %p181
        %p411 = pneg %p178
        %p412 = pneg %p202
        %p413 = pneg %p199
        %p414 = pneg %p223
        %p415 = pneg %p220
        %p416 = pneg %p244
        %p417 = pneg %p241
        %p418 = pneg %p265
        %p419 = pneg %p262
        %p420 = pneg %p286
        %p421 = pneg %p283
        %p422 = pneg %p307
        %p423 = pneg %p304
        %p424 = pneg %p333
        %p425 = pneg %p330
        %s426 = sand.u32 %s320, 1
        %s427 = scalar_lea.sflag [#allocation10], %s426
        %s428 = sand.u32 %s320, 1
        %s429 = smul.addr %s428, 4
        %s430 = scalar_lea.vmem [#allocation9], %s429
        %p432 = scmp.eq.s32.totalorder %s39, 0
        // Predicated region
        $region73: #{_forward_jit.3} parent=71 // pred_check
          %p433 = pneg %p432
        $region74: #{_forward_jit.3} parent=71 // pred_check_branch
          %435 = sbr.rel (%p433) target = $region76
        $region75: #{_forward_jit.3} parent=71 // pred_region
          %v436 = vld [vmem:[%s3] sm:$0xff]
          %v437 = vpack.c.bf16 %v436, %v436
          %v438 = vld [vmem:[%s8] sm:$0xf]
          %v439 = vld [vmem:[%s8 + $0x4] sm:$0xf]
          %v440 = vld [vmem:[%s8 + $0x8] sm:$0xf]
          %v441 = vld [vmem:[%s8 + $0xc] sm:$0xf]
          %v442 = vld [vmem:[%s8 + $0x10] sm:$0xf]
          %v443 = vld [vmem:[%s8 + $0x14] sm:$0xf]
          %v444 = vld [vmem:[%s8 + $0x18] sm:$0xf]
          %v445 = vld [vmem:[%s8 + $0x1c] sm:$0xf]
          %v446 = vld [vmem:[%s8 + $0x20] sm:$0xf]
          %v447 = vld [vmem:[%s8 + $0x24] sm:$0xf]
          %v448 = vld [vmem:[%s8 + $0x28] sm:$0xf]
          %v449 = vld [vmem:[%s8 + $0x2c] sm:$0xf]
          %v450 = vld [vmem:[%s8 + $0x30] sm:$0xf]
          %v451 = vld [vmem:[%s8 + $0x34] sm:$0xf]
          %v452 = vld [vmem:[%s8 + $0x38] sm:$0xf]
          %v453 = vld [vmem:[%s8 + $0x3c] sm:$0xf]
          %v470 = vunpack.c.l.b16 %v438
          %v471 = vunpack.c.l.b16 %v439
          %v472 = vunpack.c.l.b16 %v440
          %v473 = vunpack.c.l.b16 %v441
          %v474 = vunpack.c.l.b16 %v442
          %v475 = vunpack.c.l.b16 %v443
          %v476 = vunpack.c.l.b16 %v444
          %v477 = vunpack.c.l.b16 %v445
          %v478 = vunpack.c.l.b16 %v446
          %v479 = vunpack.c.l.b16 %v447
          %v480 = vunpack.c.l.b16 %v448
          %v481 = vunpack.c.l.b16 %v449
          %v482 = vunpack.c.l.b16 %v450
          %v483 = vunpack.c.l.b16 %v451
          %v484 = vunpack.c.l.b16 %v452
          %v485 = vunpack.c.l.b16 %v453
          %v486 = vpack.c.b16 %v471, %v470
          %v487 = vpack.c.b16 %v473, %v472
          %v488 = vpack.c.b16 %v475, %v474
          %v489 = vpack.c.b16 %v477, %v476
          %v490 = vpack.c.b16 %v479, %v478
          %v491 = vpack.c.b16 %v481, %v480
          %v492 = vpack.c.b16 %v483, %v482
          %v493 = vpack.c.b16 %v485, %v484
          %502 = vmatprep.subr.bf16.mxu0 0
          %503 = vmatpush1.bf16.msra.mxu0 %v486
          %504 = vmatprep.subr.bf16.mxu0 0
          %505 = vmatpush1.bf16.msra.mxu0 %v487
          %506 = vmatprep.subr.bf16.mxu0 0
          %507 = vmatpush1.bf16.msra.mxu0 %v488
          %508 = vmatprep.subr.bf16.mxu0 0
          %509 = vmatpush1.bf16.msra.mxu0 %v489
          %510 = vmatprep.subr.bf16.mxu0 0
          %511 = vmatpush1.bf16.msra.mxu0 %v490
          %512 = vmatprep.subr.bf16.mxu0 0
          %513 = vmatpush1.bf16.msra.mxu0 %v491
          %514 = vmatprep.subr.bf16.mxu0 0
          %515 = vmatpush1.bf16.msra.mxu0 %v492
          %516 = vmatprep.subr.bf16.mxu0 0
          %517 = vmatpush1.bf16.msra.mxu0 %v493
          %518 = vmatprep.subr.bf16.mxu0 0
          %519 = vmatpush1.bf16.msra.mxu0 0
          %520 = vmatprep.subr.bf16.mxu0 0
          %521 = vmatpush1.bf16.msra.mxu0 0
          %522 = vmatprep.subr.bf16.mxu0 0
          %523 = vmatpush1.bf16.msra.mxu0 0
          %524 = vmatprep.subr.bf16.mxu0 0
          %525 = vmatpush1.bf16.msra.mxu0 0
          %526 = vmatprep.subr.bf16.mxu0 0
          %527 = vmatpush1.bf16.msra.mxu0 0
          %528 = vmatprep.subr.bf16.mxu0 0
          %529 = vmatpush1.bf16.msra.mxu0 0
          %530 = vmatprep.subr.bf16.mxu0 0
          %531 = vmatpush1.bf16.msra.mxu0 0
          %532 = vmatprep.subr.bf16.mxu0 0
          %533 = vmatpush1.bf16.msra.mxu0 0
          %534 = vmatprep.mubr.bf16.mxu0 0
          %535 = vmatmul.mubr.bf16.gmra.mrb[0].mxu0 %v437
          %v536 = vpop.f32.mrb[0].mxu0
          %v537 = vadd.f32 0.0, %v536
          %v538 = vpop.f32.mrb[0].mxu0
          %v539 = vpop.f32.mrb[0].mxu0
          %v540 = vpop.f32.mrb[0].mxu0
          %541 = vdwg.mxu0
          %542 = vst [vmem:[#allocation2] sm:$0xff] %v537
          %v543 = vld [vmem:[%s9] sm:$0xf]
          %v544 = vld [vmem:[%s9 + $0x4] sm:$0xf]
          %v545 = vld [vmem:[%s9 + $0x8] sm:$0xf]
          %v546 = vld [vmem:[%s9 + $0xc] sm:$0xf]
          %v547 = vld [vmem:[%s9 + $0x10] sm:$0xf]
          %v548 = vld [vmem:[%s9 + $0x14] sm:$0xf]
          %v549 = vld [vmem:[%s9 + $0x18] sm:$0xf]
          %v550 = vld [vmem:[%s9 + $0x1c] sm:$0xf]
          %v551 = vld [vmem:[%s9 + $0x20] sm:$0xf]
          %v552 = vld [vmem:[%s9 + $0x24] sm:$0xf]
          %v553 = vld [vmem:[%s9 + $0x28] sm:$0xf]
          %v554 = vld [vmem:[%s9 + $0x2c] sm:$0xf]
          %v555 = vld [vmem:[%s9 + $0x30] sm:$0xf]
          %v556 = vld [vmem:[%s9 + $0x34] sm:$0xf]
          %v557 = vld [vmem:[%s9 + $0x38] sm:$0xf]
          %v558 = vld [vmem:[%s9 + $0x3c] sm:$0xf]
          %v575 = vunpack.c.l.b16 %v543
          %v576 = vunpack.c.l.b16 %v544
          %v577 = vunpack.c.l.b16 %v545
          %v578 = vunpack.c.l.b16 %v546
          %v579 = vunpack.c.l.b16 %v547
          %v580 = vunpack.c.l.b16 %v548
          %v581 = vunpack.c.l.b16 %v549
          %v582 = vunpack.c.l.b16 %v550
          %v583 = vunpack.c.l.b16 %v551
          %v584 = vunpack.c.l.b16 %v552
          %v585 = vunpack.c.l.b16 %v553
          %v586 = vunpack.c.l.b16 %v554
          %v587 = vunpack.c.l.b16 %v555
          %v588 = vunpack.c.l.b16 %v556
          %v589 = vunpack.c.l.b16 %v557
          %v590 = vunpack.c.l.b16 %v558
          %v591 = vpack.c.b16 %v576, %v575
          %v592 = vpack.c.b16 %v578, %v577
          %v593 = vpack.c.b16 %v580, %v579
          %v594 = vpack.c.b16 %v582, %v581
          %v595 = vpack.c.b16 %v584, %v583
          %v596 = vpack.c.b16 %v586, %v585
          %v597 = vpack.c.b16 %v588, %v587
          %v598 = vpack.c.b16 %v590, %v589
          %607 = vmatprep.subr.bf16.mxu0 0
          %608 = vmatpush1.bf16.msra.mxu0 %v591
          %609 = vmatprep.subr.bf16.mxu0 0
          %610 = vmatpush1.bf16.msra.mxu0 %v592
          %611 = vmatprep.subr.bf16.mxu0 0
          %612 = vmatpush1.bf16.msra.mxu0 %v593
          %613 = vmatprep.subr.bf16.mxu0 0
          %614 = vmatpush1.bf16.msra.mxu0 %v594
          %615 = vmatprep.subr.bf16.mxu0 0
          %616 = vmatpush1.bf16.msra.mxu0 %v595
          %617 = vmatprep.subr.bf16.mxu0 0
          %618 = vmatpush1.bf16.msra.mxu0 %v596
          %619 = vmatprep.subr.bf16.mxu0 0
          %620 = vmatpush1.bf16.msra.mxu0 %v597
          %621 = vmatprep.subr.bf16.mxu0 0
          %622 = vmatpush1.bf16.msra.mxu0 %v598
          %623 = vmatprep.subr.bf16.mxu0 0
          %624 = vmatpush1.bf16.msra.mxu0 0
          %625 = vmatprep.subr.bf16.mxu0 0
          %626 = vmatpush1.bf16.msra.mxu0 0
          %627 = vmatprep.subr.bf16.mxu0 0
          %628 = vmatpush1.bf16.msra.mxu0 0
          %629 = vmatprep.subr.bf16.mxu0 0
          %630 = vmatpush1.bf16.msra.mxu0 0
          %631 = vmatprep.subr.bf16.mxu0 0
          %632 = vmatpush1.bf16.msra.mxu0 0
          %633 = vmatprep.subr.bf16.mxu0 0
          %634 = vmatpush1.bf16.msra.mxu0 0
          %635 = vmatprep.subr.bf16.mxu0 0
          %636 = vmatpush1.bf16.msra.mxu0 0
          %637 = vmatprep.subr.bf16.mxu0 0
          %638 = vmatpush1.bf16.msra.mxu0 0
          %639 = vmatprep.mubr.bf16.mxu0 0
          %640 = vmatmul.mubr.bf16.gmra.mrb[0].mxu0 %v437
          %v641 = vpop.f32.mrb[0].mxu0
          %v642 = vadd.f32 0.0, %v641
          %v643 = vpop.f32.mrb[0].mxu0
          %v644 = vpop.f32.mrb[0].mxu0
          %v645 = vpop.f32.mrb[0].mxu0
          %646 = vdwg.mxu0
          %647 = vst [vmem:[#allocation3] sm:$0xff] %v642
          %648 = vst [vmem:[#allocation4] sm:$0xff] 0.0
          %649 = vst [vmem:[#allocation5] sm:$0xff] 0.0
        $region76: #{_forward_jit.3} parent=71 // pred_fallthru
          _
        %s650 = sld [smem:[#allocation7 + %s39]]
        %v651 = vlaneseq
        %v652 = vshrl.u32 %v651, 7
        %v653 = vld [vmem:[%s2] sm:$0xff]
        %v654 = vstv %s650
        %vm655 = vcmp.eq.s32.totalorder %v652, %v654
        %v656 = vsel %vm655, 1, 0
        %v657 = vcvt.s32.f32 %v656
        %v658 = vmul.f32 %v653, %v657
        %v659 = vrot.slane %v658, 4
        %v660 = vadd.f32 %v658, %v659
        %v661 = vrot.slane %v660, 2
        %v662 = vadd.f32 %v660, %v661
        %v663 = vrot.slane %v662, 1
        %v664 = vadd.f32 %v662, %v663
        %s665 = sld [smem:[#allocation8 + %s39]]
        %v666 = vstv %s665
        %vm667 = vcmp.eq.s32.totalorder %v652, %v666
        %v668 = vsel %vm667, 1, 0
        %v669 = vcvt.s32.f32 %v668
        %v670 = vld [vmem:[#allocation4] sm:$0xff]
        %v671 = vmul.f32 %v670, %v669
        %v672 = vrot.slane %v671, 4
        %v673 = vadd.f32 %v671, %v672
        %v674 = vrot.slane %v673, 2
        %v675 = vadd.f32 %v673, %v674
        %v676 = vrot.slane %v675, 1
        %v677 = vadd.f32 %v675, %v676
        %v678 = vld [vmem:[#allocation5] sm:$0xff]
        %v679 = vmul.f32 %v678, %v669
        %v680 = vrot.slane %v679, 4
        %v681 = vadd.f32 %v679, %v680
        %v682 = vrot.slane %v681, 2
        %v683 = vadd.f32 %v681, %v682
        %v684 = vrot.slane %v683, 1
        %v685 = vadd.f32 %v683, %v684
        %p686 = scmp.lt.s32.totalorder %s665, 0
        %s687 = scalar_select %p686, 1, 0
        %s688 = scvt.s32.f32 %s687
        %v689 = vld [vmem:[%s3 + $0x5] sm:$0x1]
        %v690 = vstv %s688
        %v691 = vmul.f32 %v690, %v689
        %v692 = vadd.f32 %v677, %v691
        %v693 = vld [vmem:[%s4 + $0x5] sm:$0x1]
        %v694 = vmul.f32 %v690, %v693
        %v695 = vadd.f32 %v685, %v694
        %v696 = vpack.c.bf16 %v664, %v664
        %v697 = vpack.c.bf16 %v692, %v692
        %v698 = vld [vmem:[%s5] sm:$0xff]
        %v699 = vld [vmem:[%s5 + $0x8] sm:$0xff]
        %v700 = vld [vmem:[%s5 + $0x10] sm:$0xff]
        %v701 = vld [vmem:[%s5 + $0x18] sm:$0xff]
        %v702 = vld [vmem:[%s5 + $0x20] sm:$0xff]
        %v703 = vld [vmem:[%s5 + $0x28] sm:$0xff]
        %v704 = vld [vmem:[%s5 + $0x30] sm:$0xff]
        %v705 = vld [vmem:[%s5 + $0x38] sm:$0xff]
        %v706 = vld [vmem:[%s5 + $0x40] sm:$0xff]
        %v707 = vld [vmem:[%s5 + $0x48] sm:$0xff]
        %v708 = vld [vmem:[%s5 + $0x50] sm:$0xff]
        %v709 = vld [vmem:[%s5 + $0x58] sm:$0xff]
        %v710 = vld [vmem:[%s5 + $0x60] sm:$0xff]
        %v711 = vld [vmem:[%s5 + $0x68] sm:$0xff]
        %v712 = vld [vmem:[%s5 + $0x70] sm:$0xff]
        %v713 = vld [vmem:[%s5 + $0x78] sm:$0xff]
        %v714 = vld [vmem:[%s5 + $0x80] sm:$0xff]
        %v715 = vld [vmem:[%s5 + $0x88] sm:$0xff]
        %v716 = vld [vmem:[%s5 + $0x90] sm:$0xff]
        %v717 = vld [vmem:[%s5 + $0x98] sm:$0xff]
        %v718 = vld [vmem:[%s5 + $0xa0] sm:$0xff]
        %v719 = vld [vmem:[%s5 + $0xa8] sm:$0xff]
        %v720 = vld [vmem:[%s5 + $0xb0] sm:$0xff]
        %v721 = vld [vmem:[%s5 + $0xb8] sm:$0xff]
        %v722 = vld [vmem:[%s5 + $0xc0] sm:$0xff]
        %v723 = vld [vmem:[%s5 + $0xc8] sm:$0xff]
        %v724 = vld [vmem:[%s5 + $0xd0] sm:$0xff]
        %v725 = vld [vmem:[%s5 + $0xd8] sm:$0xff]
        %v726 = vld [vmem:[%s5 + $0xe0] sm:$0xff]
        %v727 = vld [vmem:[%s5 + $0xe8] sm:$0xff]
        %v728 = vld [vmem:[%s5 + $0xf0] sm:$0xff]
        %v729 = vld [vmem:[%s5 + $0xf8] sm:$0xff]
        %v730 = vld [vmem:[%s5 + $0x100] sm:$0xff]
        %v731 = vld [vmem:[%s5 + $0x108] sm:$0xff]
        %v732 = vld [vmem:[%s5 + $0x110] sm:$0xff]
        %v733 = vld [vmem:[%s5 + $0x118] sm:$0xff]
        %v734 = vld [vmem:[%s5 + $0x120] sm:$0xff]
        %v735 = vld [vmem:[%s5 + $0x128] sm:$0xff]
        %v736 = vld [vmem:[%s5 + $0x130] sm:$0xff]
        %v737 = vld [vmem:[%s5 + $0x138] sm:$0xff]
        %v738 = vld [vmem:[%s5 + $0x140] sm:$0xff]
        %v739 = vld [vmem:[%s5 + $0x148] sm:$0xff]
        %v740 = vld [vmem:[%s5 + $0x150] sm:$0xff]
        %v741 = vld [vmem:[%s5 + $0x158] sm:$0xff]
        %v742 = vld [vmem:[%s5 + $0x160] sm:$0xff]
        %v743 = vld [vmem:[%s5 + $0x168] sm:$0xff]
        %v744 = vld [vmem:[%s5 + $0x170] sm:$0xff]
        %v745 = vld [vmem:[%s5 + $0x178] sm:$0xff]
        %v746 = vld [vmem:[%s5 + $0x180] sm:$0xff]
        %v747 = vld [vmem:[%s5 + $0x188] sm:$0xff]
        %v748 = vld [vmem:[%s5 + $0x190] sm:$0xff]
        %v749 = vld [vmem:[%s5 + $0x198] sm:$0xff]
        %v750 = vld [vmem:[%s5 + $0x1a0] sm:$0xff]
        %v751 = vld [vmem:[%s5 + $0x1a8] sm:$0xff]
        %v752 = vld [vmem:[%s5 + $0x1b0] sm:$0xff]
        %v753 = vld [vmem:[%s5 + $0x1b8] sm:$0xff]
        %v754 = vld [vmem:[%s5 + $0x1c0] sm:$0xff]
        %v755 = vld [vmem:[%s5 + $0x1c8] sm:$0xff]
        %v756 = vld [vmem:[%s5 + $0x1d0] sm:$0xff]
        %v757 = vld [vmem:[%s5 + $0x1d8] sm:$0xff]
        %v758 = vld [vmem:[%s5 + $0x1e0] sm:$0xff]
        %v759 = vld [vmem:[%s5 + $0x1e8] sm:$0xff]
        %v760 = vld [vmem:[%s5 + $0x1f0] sm:$0xff]
        %v761 = vld [vmem:[%s5 + $0x1f8] sm:$0xff]
        %v762 = vld [vmem:[%s6] sm:$0xf]
        %v827 = vunpack.c.l.b16 %v698
        %v828 = vunpack.c.h.b16 %v698
        %v829 = vunpack.c.l.b16 %v699
        %v830 = vunpack.c.h.b16 %v699
        %v831 = vunpack.c.l.b16 %v700
        %v832 = vunpack.c.h.b16 %v700
        %v833 = vunpack.c.l.b16 %v701
        %v834 = vunpack.c.h.b16 %v701
        %v835 = vunpack.c.l.b16 %v702
        %v836 = vunpack.c.h.b16 %v702
        %v837 = vunpack.c.l.b16 %v703
        %v838 = vunpack.c.h.b16 %v703
        %v839 = vunpack.c.l.b16 %v704
        %v840 = vunpack.c.h.b16 %v704
        %v841 = vunpack.c.l.b16 %v705
        %v842 = vunpack.c.h.b16 %v705
        %v843 = vunpack.c.l.b16 %v706
        %v844 = vunpack.c.h.b16 %v706
        %v845 = vunpack.c.l.b16 %v707
        %v846 = vunpack.c.h.b16 %v707
        %v847 = vunpack.c.l.b16 %v708
        %v848 = vunpack.c.h.b16 %v708
        %v849 = vunpack.c.l.b16 %v709
        %v850 = vunpack.c.h.b16 %v709
        %v851 = vunpack.c.l.b16 %v710
        %v852 = vunpack.c.h.b16 %v710
        %v853 = vunpack.c.l.b16 %v711
        %v854 = vunpack.c.h.b16 %v711
        %v855 = vunpack.c.l.b16 %v712
        %v856 = vunpack.c.h.b16 %v712
        %v857 = vunpack.c.l.b16 %v713
        %v858 = vunpack.c.h.b16 %v713
        %v859 = vunpack.c.l.b16 %v714
        %v860 = vunpack.c.h.b16 %v714
        %v861 = vunpack.c.l.b16 %v715
        %v862 = vunpack.c.h.b16 %v715
        %v863 = vunpack.c.l.b16 %v716
        %v864 = vunpack.c.h.b16 %v716
        %v865 = vunpack.c.l.b16 %v717
        %v866 = vunpack.c.h.b16 %v717
        %v867 = vunpack.c.l.b16 %v718
        %v868 = vunpack.c.h.b16 %v718
        %v869 = vunpack.c.l.b16 %v719
        %v870 = vunpack.c.h.b16 %v719
        %v871 = vunpack.c.l.b16 %v720
        %v872 = vunpack.c.h.b16 %v720
        %v873 = vunpack.c.l.b16 %v721
        %v874 = vunpack.c.h.b16 %v721
        %v875 = vunpack.c.l.b16 %v722
        %v876 = vunpack.c.h.b16 %v722
        %v877 = vunpack.c.l.b16 %v723
        %v878 = vunpack.c.h.b16 %v723
        %v879 = vunpack.c.l.b16 %v724
        %v880 = vunpack.c.h.b16 %v724
        %v881 = vunpack.c.l.b16 %v725
        %v882 = vunpack.c.h.b16 %v725
        %v883 = vunpack.c.l.b16 %v726
        %v884 = vunpack.c.h.b16 %v726
        %v885 = vunpack.c.l.b16 %v727
        %v886 = vunpack.c.h.b16 %v727
        %v887 = vunpack.c.l.b16 %v728
        %v888 = vunpack.c.h.b16 %v728
        %v889 = vunpack.c.l.b16 %v729
        %v890 = vunpack.c.h.b16 %v729
        %v891 = vunpack.c.l.b16 %v730
        %v892 = vunpack.c.h.b16 %v730
        %v893 = vunpack.c.l.b16 %v731
        %v894 = vunpack.c.h.b16 %v731
        %v895 = vunpack.c.l.b16 %v732
        %v896 = vunpack.c.h.b16 %v732
        %v897 = vunpack.c.l.b16 %v733
        %v898 = vunpack.c.h.b16 %v733
        %v899 = vunpack.c.l.b16 %v734
        %v900 = vunpack.c.h.b16 %v734
        %v901 = vunpack.c.l.b16 %v735
        %v902 = vunpack.c.h.b16 %v735
        %v903 = vunpack.c.l.b16 %v736
        %v904 = vunpack.c.h.b16 %v736
        %v905 = vunpack.c.l.b16 %v737
        %v906 = vunpack.c.h.b16 %v737
        %v907 = vunpack.c.l.b16 %v738
        %v908 = vunpack.c.h.b16 %v738
        %v909 = vunpack.c.l.b16 %v739
        %v910 = vunpack.c.h.b16 %v739
        %v911 = vunpack.c.l.b16 %v740
        %v912 = vunpack.c.h.b16 %v740
        %v913 = vunpack.c.l.b16 %v741
        %v914 = vunpack.c.h.b16 %v741
        %v915 = vunpack.c.l.b16 %v742
        %v916 = vunpack.c.h.b16 %v742
        %v917 = vunpack.c.l.b16 %v743
        %v918 = vunpack.c.h.b16 %v743
        %v919 = vunpack.c.l.b16 %v744
        %v920 = vunpack.c.h.b16 %v744
        %v921 = vunpack.c.l.b16 %v745
        %v922 = vunpack.c.h.b16 %v745
        %v923 = vunpack.c.l.b16 %v746
        %v924 = vunpack.c.h.b16 %v746
        %v925 = vunpack.c.l.b16 %v747
        %v926 = vunpack.c.h.b16 %v747
        %v927 = vunpack.c.l.b16 %v748
        %v928 = vunpack.c.h.b16 %v748
        %v929 = vunpack.c.l.b16 %v749
        %v930 = vunpack.c.h.b16 %v749
        %v931 = vunpack.c.l.b16 %v750
        %v932 = vunpack.c.h.b16 %v750
        %v933 = vunpack.c.l.b16 %v751
        %v934 = vunpack.c.h.b16 %v751
        %v935 = vunpack.c.l.b16 %v752
        %v936 = vunpack.c.h.b16 %v752
        %v937 = vunpack.c.l.b16 %v753
        %v938 = vunpack.c.h.b16 %v753
        %v939 = vunpack.c.l.b16 %v754
        %v940 = vunpack.c.h.b16 %v754
        %v941 = vunpack.c.l.b16 %v755
        %v942 = vunpack.c.h.b16 %v755
        %v943 = vunpack.c.l.b16 %v756
        %v944 = vunpack.c.h.b16 %v756
        %v945 = vunpack.c.l.b16 %v757
        %v946 = vunpack.c.h.b16 %v757
        %v947 = vunpack.c.l.b16 %v758
        %v948 = vunpack.c.h.b16 %v758
        %v949 = vunpack.c.l.b16 %v759
        %v950 = vunpack.c.h.b16 %v759
        %v951 = vunpack.c.l.b16 %v760
        %v952 = vunpack.c.h.b16 %v760
        %v953 = vunpack.c.l.b16 %v761
        %v954 = vunpack.c.h.b16 %v761
        %v955 = vpack.c.b16 %v831, %v827
        %v956 = vpack.c.b16 %v832, %v828
        %v957 = vpack.c.b16 %v833, %v829
        %v958 = vpack.c.b16 %v834, %v830
        %v959 = vpack.c.b16 %v839, %v835
        %v960 = vpack.c.b16 %v840, %v836
        %v961 = vpack.c.b16 %v841, %v837
        %v962 = vpack.c.b16 %v842, %v838
        %v963 = vpack.c.b16 %v847, %v843
        %v964 = vpack.c.b16 %v848, %v844
        %v965 = vpack.c.b16 %v849, %v845
        %v966 = vpack.c.b16 %v850, %v846
        %v967 = vpack.c.b16 %v855, %v851
        %v968 = vpack.c.b16 %v856, %v852
        %v969 = vpack.c.b16 %v857, %v853
        %v970 = vpack.c.b16 %v858, %v854
        %v971 = vpack.c.b16 %v863, %v859
        %v972 = vpack.c.b16 %v864, %v860
        %v973 = vpack.c.b16 %v865, %v861
        %v974 = vpack.c.b16 %v866, %v862
        %v975 = vpack.c.b16 %v871, %v867
        %v976 = vpack.c.b16 %v872, %v868
        %v977 = vpack.c.b16 %v873, %v869
        %v978 = vpack.c.b16 %v874, %v870
        %v979 = vpack.c.b16 %v879, %v875
        %v980 = vpack.c.b16 %v880, %v876
        %v981 = vpack.c.b16 %v881, %v877
        %v982 = vpack.c.b16 %v882, %v878
        %v983 = vpack.c.b16 %v887, %v883
        %v984 = vpack.c.b16 %v888, %v884
        %v985 = vpack.c.b16 %v889, %v885
        %v986 = vpack.c.b16 %v890, %v886
        %v987 = vpack.c.b16 %v895, %v891
        %v988 = vpack.c.b16 %v896, %v892
        %v989 = vpack.c.b16 %v897, %v893
        %v990 = vpack.c.b16 %v898, %v894
        %v991 = vpack.c.b16 %v903, %v899
        %v992 = vpack.c.b16 %v904, %v900
        %v993 = vpack.c.b16 %v905, %v901
        %v994 = vpack.c.b16 %v906, %v902
        %v995 = vpack.c.b16 %v911, %v907
        %v996 = vpack.c.b16 %v912, %v908
        %v997 = vpack.c.b16 %v913, %v909
        %v998 = vpack.c.b16 %v914, %v910
        %v999 = vpack.c.b16 %v919, %v915
        %v1000 = vpack.c.b16 %v920, %v916
        %v1001 = vpack.c.b16 %v921, %v917
        %v1002 = vpack.c.b16 %v922, %v918
        %v1003 = vpack.c.b16 %v927, %v923
        %v1004 = vpack.c.b16 %v928, %v924
        %v1005 = vpack.c.b16 %v929, %v925
        %v1006 = vpack.c.b16 %v930, %v926
        %v1007 = vpack.c.b16 %v935, %v931
        %v1008 = vpack.c.b16 %v936, %v932
        %v1009 = vpack.c.b16 %v937, %v933
        %v1010 = vpack.c.b16 %v938, %v934
        %v1011 = vpack.c.b16 %v943, %v939
        %v1012 = vpack.c.b16 %v944, %v940
        %v1013 = vpack.c.b16 %v945, %v941
        %v1014 = vpack.c.b16 %v946, %v942
        %v1015 = vpack.c.b16 %v951, %v947
        %v1016 = vpack.c.b16 %v952, %v948
        %v1017 = vpack.c.b16 %v953, %v949
        %v1018 = vpack.c.b16 %v954, %v950
        %v1084 = vlaneseq
        %v1085 = vshrl.u32 %v1084, 7
        %v1086 = vsub.s32 0, %v1085
        %v1087 = vrot.slane %v762, %v1086
        %v1088 = vlaneseq
        %v1089 = vshrl.u32 %v1088, 7
        %v1090 = vsub.s32 1, %v1089
        %v1091 = vrot.slane %v762, %v1090
        %v1092 = vlaneseq
        %v1093 = vshrl.u32 %v1092, 7
        %v1094 = vsub.s32 2, %v1093
        %v1095 = vrot.slane %v762, %v1094
        %v1096 = vlaneseq
        %v1097 = vshrl.u32 %v1096, 7
        %v1098 = vsub.s32 3, %v1097
        %v1099 = vrot.slane %v762, %v1098
        %1104 = vmatprep.subr.bf16.mxu0 %v956
        %1105 = vmatpush1.bf16.msra.mxu0 %v955
        %1106 = vmatprep.subr.bf16.mxu0 %v960
        %1107 = vmatpush1.bf16.msra.mxu0 %v959
        %1108 = vmatprep.subr.bf16.mxu0 %v964
        %1109 = vmatpush1.bf16.msra.mxu0 %v963
        %1110 = vmatprep.subr.bf16.mxu0 %v968
        %1111 = vmatpush1.bf16.msra.mxu0 %v967
        %1112 = vmatprep.subr.bf16.mxu0 %v972
        %1113 = vmatpush1.bf16.msra.mxu0 %v971
        %1114 = vmatprep.subr.bf16.mxu0 %v976
        %1115 = vmatpush1.bf16.msra.mxu0 %v975
        %1116 = vmatprep.subr.bf16.mxu0 %v980
        %1117 = vmatpush1.bf16.msra.mxu0 %v979
        %1118 = vmatprep.subr.bf16.mxu0 %v984
        %1119 = vmatpush1.bf16.msra.mxu0 %v983
        %1120 = vmatprep.subr.bf16.mxu0 %v988
        %1121 = vmatpush1.bf16.msra.mxu0 %v987
        %1122 = vmatprep.subr.bf16.mxu0 %v992
        %1123 = vmatpush1.bf16.msra.mxu0 %v991
        %1124 = vmatprep.subr.bf16.mxu0 %v996
        %1125 = vmatpush1.bf16.msra.mxu0 %v995
        %1126 = vmatprep.subr.bf16.mxu0 %v1000
        %1127 = vmatpush1.bf16.msra.mxu0 %v999
        %1128 = vmatprep.subr.bf16.mxu0 %v1004
        %1129 = vmatpush1.bf16.msra.mxu0 %v1003
        %1130 = vmatprep.subr.bf16.mxu0 %v1008
        %1131 = vmatpush1.bf16.msra.mxu0 %v1007
        %1132 = vmatprep.subr.bf16.mxu0 %v1012
        %1133 = vmatpush1.bf16.msra.mxu0 %v1011
        %1134 = vmatprep.subr.bf16.mxu0 %v1016
        %1135 = vmatpush1.bf16.msra.mxu0 %v1015
        %1136 = vmatprep.mubr.bf16.mxu0 %v697
        %1137 = vmatmul.mubr.bf16.gmra.mrb[0].mxu0 %v696
        %v1138 = vpop.f32.mrb[0].mxu0
        %v1139 = vadd.f32 %v1087, %v1138
        %v1140 = vpop.f32.mrb[0].mxu0
        %v1141 = vadd.f32 %v1091, %v1140
        %v1142 = vpop.f32.mrb[0].mxu0
        %v1143 = vpop.f32.mrb[0].mxu0
        %1144 = vdwg.mxu0
        %1145 = vmatprep.subr.bf16.mxu0 %v958
        %1146 = vmatpush1.bf16.msra.mxu0 %v957
        %1147 = vmatprep.subr.bf16.mxu0 %v962
        %1148 = vmatpush1.bf16.msra.mxu0 %v961
        %1149 = vmatprep.subr.bf16.mxu0 %v966
        %1150 = vmatpush1.bf16.msra.mxu0 %v965
        %1151 = vmatprep.subr.bf16.mxu0 %v970
        %1152 = vmatpush1.bf16.msra.mxu0 %v969
        %1153 = vmatprep.subr.bf16.mxu0 %v974
        %1154 = vmatpush1.bf16.msra.mxu0 %v973
        %1155 = vmatprep.subr.bf16.mxu0 %v978
        %1156 = vmatpush1.bf16.msra.mxu0 %v977
        %1157 = vmatprep.subr.bf16.mxu0 %v982
        %1158 = vmatpush1.bf16.msra.mxu0 %v981
        %1159 = vmatprep.subr.bf16.mxu0 %v986
        %1160 = vmatpush1.bf16.msra.mxu0 %v985
        %1161 = vmatprep.subr.bf16.mxu0 %v990
        %1162 = vmatpush1.bf16.msra.mxu0 %v989
        %1163 = vmatprep.subr.bf16.mxu0 %v994
        %1164 = vmatpush1.bf16.msra.mxu0 %v993
        %1165 = vmatprep.subr.bf16.mxu0 %v998
        %1166 = vmatpush1.bf16.msra.mxu0 %v997
        %1167 = vmatprep.subr.bf16.mxu0 %v1002
        %1168 = vmatpush1.bf16.msra.mxu0 %v1001
        %1169 = vmatprep.subr.bf16.mxu0 %v1006
        %1170 = vmatpush1.bf16.msra.mxu0 %v1005
        %1171 = vmatprep.subr.bf16.mxu0 %v1010
        %1172 = vmatpush1.bf16.msra.mxu0 %v1009
        %1173 = vmatprep.subr.bf16.mxu0 %v1014
        %1174 = vmatpush1.bf16.msra.mxu0 %v1013
        %1175 = vmatprep.subr.bf16.mxu0 %v1018
        %1176 = vmatpush1.bf16.msra.mxu0 %v1017
        %1177 = vmatprep.mubr.bf16.mxu0 %v697
        %1178 = vmatmul.mubr.bf16.gmra.mrb[0].mxu0 %v696
        %v1179 = vpop.f32.mrb[0].mxu0
        %v1180 = vadd.f32 %v1095, %v1179
        %v1181 = vpop.f32.mrb[0].mxu0
        %v1182 = vadd.f32 %v1099, %v1181
        %v1183 = vpop.f32.mrb[0].mxu0
        %v1184 = vpop.f32.mrb[0].mxu0
        %1185 = vdwg.mxu0
        %v1186 = vxor.u32 %v1139, 2147483648
        %v1187 = vmul.f32 %v1186, 1.442695
        %v1188 = vpow.pop %v1187
        %v1189 = vadd.f32 %v1188, 1.0
        %v1190 = vrcp.pop %v1189
        %v1191 = vmul.f32 1.0, %v1190
        %v1192 = vxor.u32 %v1141, 2147483648
        %v1193 = vmul.f32 %v1192, 1.442695
        %v1194 = vpow.pop %v1193
        %v1195 = vadd.f32 %v1194, 1.0
        %v1196 = vrcp.pop %v1195
        %v1197 = vmul.f32 1.0, %v1196
        %v1198 = vtanh.pop %v1180
        %v1199 = vxor.u32 %v1182, 2147483648
        %v1200 = vmul.f32 %v1199, 1.442695
        %v1201 = vpow.pop %v1200
        %v1202 = vadd.f32 %v1201, 1.0
        %v1203 = vrcp.pop %v1202
        %v1204 = vmul.f32 1.0, %v1203
        %v1205 = vmul.f32 %v1197, %v695
        %v1206 = vmul.f32 %v1191, %v1198
        %v1207 = vadd.f32 %v1205, %v1206
        %v1208 = vtanh.pop %v1207
        %v1209 = vmul.f32 %v1204, %v1208
        %v1210 = vpack.c.bf16 %v1209, %v1209
        %v1211 = vld [vmem:[%s7] sm:$0xf]
        %v1212 = vld [vmem:[%s7 + $0x4] sm:$0xf]
        %v1213 = vld [vmem:[%s7 + $0x8] sm:$0xf]
        %v1214 = vld [vmem:[%s7 + $0xc] sm:$0xf]
        %v1215 = vld [vmem:[%s7 + $0x10] sm:$0xf]
        %v1216 = vld [vmem:[%s7 + $0x14] sm:$0xf]
        %v1217 = vld [vmem:[%s7 + $0x18] sm:$0xf]
        %v1218 = vld [vmem:[%s7 + $0x1c] sm:$0xf]
        %v1219 = vld [vmem:[%s7 + $0x20] sm:$0xf]
        %v1220 = vld [vmem:[%s7 + $0x24] sm:$0xf]
        %v1221 = vld [vmem:[%s7 + $0x28] sm:$0xf]
        %v1222 = vld [vmem:[%s7 + $0x2c] sm:$0xf]
        %v1223 = vld [vmem:[%s7 + $0x30] sm:$0xf]
        %v1224 = vld [vmem:[%s7 + $0x34] sm:$0xf]
        %v1225 = vld [vmem:[%s7 + $0x38] sm:$0xf]
        %v1226 = vld [vmem:[%s7 + $0x3c] sm:$0xf]
        %v1243 = vunpack.c.l.b16 %v1211
        %v1244 = vunpack.c.l.b16 %v1212
        %v1245 = vunpack.c.l.b16 %v1213
        %v1246 = vunpack.c.l.b16 %v1214
        %v1247 = vunpack.c.l.b16 %v1215
        %v1248 = vunpack.c.l.b16 %v1216
        %v1249 = vunpack.c.l.b16 %v1217
        %v1250 = vunpack.c.l.b16 %v1218
        %v1251 = vunpack.c.l.b16 %v1219
        %v1252 = vunpack.c.l.b16 %v1220
        %v1253 = vunpack.c.l.b16 %v1221
        %v1254 = vunpack.c.l.b16 %v1222
        %v1255 = vunpack.c.l.b16 %v1223
        %v1256 = vunpack.c.l.b16 %v1224
        %v1257 = vunpack.c.l.b16 %v1225
        %v1258 = vunpack.c.l.b16 %v1226
        %v1259 = vpack.c.b16 %v1244, %v1243
        %v1260 = vpack.c.b16 %v1246, %v1245
        %v1261 = vpack.c.b16 %v1248, %v1247
        %v1262 = vpack.c.b16 %v1250, %v1249
        %v1263 = vpack.c.b16 %v1252, %v1251
        %v1264 = vpack.c.b16 %v1254, %v1253
        %v1265 = vpack.c.b16 %v1256, %v1255
        %v1266 = vpack.c.b16 %v1258, %v1257
        %1275 = vmatprep.subr.bf16.mxu0 0
        %1276 = vmatpush1.bf16.msra.mxu0 %v1259
        %1277 = vmatprep.subr.bf16.mxu0 0
        %1278 = vmatpush1.bf16.msra.mxu0 %v1260
        %1279 = vmatprep.subr.bf16.mxu0 0
        %1280 = vmatpush1.bf16.msra.mxu0 %v1261
        %1281 = vmatprep.subr.bf16.mxu0 0
        %1282 = vmatpush1.bf16.msra.mxu0 %v1262
        %1283 = vmatprep.subr.bf16.mxu0 0
        %1284 = vmatpush1.bf16.msra.mxu0 %v1263
        %1285 = vmatprep.subr.bf16.mxu0 0
        %1286 = vmatpush1.bf16.msra.mxu0 %v1264
        %1287 = vmatprep.subr.bf16.mxu0 0
        %1288 = vmatpush1.bf16.msra.mxu0 %v1265
        %1289 = vmatprep.subr.bf16.mxu0 0
        %1290 = vmatpush1.bf16.msra.mxu0 %v1266
        %1291 = vmatprep.subr.bf16.mxu0 0
        %1292 = vmatpush1.bf16.msra.mxu0 0
        %1293 = vmatprep.subr.bf16.mxu0 0
        %1294 = vmatpush1.bf16.msra.mxu0 0
        %1295 = vmatprep.subr.bf16.mxu0 0
        %1296 = vmatpush1.bf16.msra.mxu0 0
        %1297 = vmatprep.subr.bf16.mxu0 0
        %1298 = vmatpush1.bf16.msra.mxu0 0
        %1299 = vmatprep.subr.bf16.mxu0 0
        %1300 = vmatpush1.bf16.msra.mxu0 0
        %1301 = vmatprep.subr.bf16.mxu0 0
        %1302 = vmatpush1.bf16.msra.mxu0 0
        %1303 = vmatprep.subr.bf16.mxu0 0
        %1304 = vmatpush1.bf16.msra.mxu0 0
        %1305 = vmatprep.subr.bf16.mxu0 0
        %1306 = vmatpush1.bf16.msra.mxu0 0
        %1307 = vmatprep.mubr.bf16.mxu0 0
        %1308 = vmatmul.mubr.bf16.gmra.mrb[0].mxu0 %v1210
        %v1309 = vpop.f32.mrb[0].mxu0
        %v1310 = vadd.f32 0.0, %v1309
        %v1311 = vpop.f32.mrb[0].mxu0
        %v1312 = vpop.f32.mrb[0].mxu0
        %v1313 = vpop.f32.mrb[0].mxu0
        %1314 = vdwg.mxu0
        %v1315 = vpack.c.bf16 %v1310, %v1310
        %v1316 = vld [vmem:[#allocation2] sm:$0xff]
        %v1317 = vpack.c.bf16 %v1316, %v1316
        %1318 = vmatprep.subr.bf16.mxu0 0
        %1319 = vmatpush1.bf16.xpose.msra.mxu0 %v1317
        %1320 = vmatprep.subr.bf16.mxu0 0
        %1321 = vmatpush1.bf16.xpose.msra.mxu0 0
        %1322 = vmatprep.subr.bf16.mxu0 0
        %1323 = vmatpush1.bf16.xpose.msra.mxu0 0
        %1324 = vmatprep.subr.bf16.mxu0 0
        %1325 = vmatpush1.bf16.xpose.msra.mxu0 0
        %1326 = vmatprep.subr.bf16.mxu0 0
        %1327 = vmatpush1.bf16.xpose.msra.mxu0 0
        %1328 = vmatprep.subr.bf16.mxu0 0
        %1329 = vmatpush1.bf16.xpose.msra.mxu0 0
        %1330 = vmatprep.subr.bf16.mxu0 0
        %1331 = vmatpush1.bf16.xpose.msra.mxu0 0
        %1332 = vmatprep.subr.bf16.mxu0 0
        %1333 = vmatpush1.bf16.xpose.msra.mxu0 0
        %1334 = vmatprep.subr.bf16.mxu0 0
        %1335 = vmatpush1.bf16.xpose.msra.mxu0 0
        %1336 = vmatprep.subr.bf16.mxu0 0
        %1337 = vmatpush1.bf16.xpose.msra.mxu0 0
        %1338 = vmatprep.subr.bf16.mxu0 0
        %1339 = vmatpush1.bf16.xpose.msra.mxu0 0
        %1340 = vmatprep.subr.bf16.mxu0 0
        %1341 = vmatpush1.bf16.xpose.msra.mxu0 0
        %1342 = vmatprep.subr.bf16.mxu0 0
        %1343 = vmatpush1.bf16.xpose.msra.mxu0 0
        %1344 = vmatprep.subr.bf16.mxu0 0
        %1345 = vmatpush1.bf16.xpose.msra.mxu0 0
        %1346 = vmatprep.subr.bf16.mxu0 0
        %1347 = vmatpush1.bf16.xpose.msra.mxu0 0
        %1348 = vmatprep.subr.bf16.mxu0 0
        %1349 = vmatpush1.bf16.xpose.msra.mxu0 0
        %1350 = vmatprep.mubr.bf16.mxu0 0
        %1351 = vmatmul.mubr.bf16.gmra.mrb[0].mxu0 %v1315
        %v1352 = vpop.f32.mrb[0].mxu0
        %v1353 = vadd.f32 0.0, %v1352
        %v1354 = vpop.f32.mrb[0].mxu0
        %v1355 = vpop.f32.mrb[0].mxu0
        %v1356 = vpop.f32.mrb[0].mxu0
        %1357 = vdwg.mxu0
        %v1358 = vlaneseq
        %v1359 = vand.u32 %v1358, 127
        %vm1360 = vcmp.lt.s32.totalorder %v1359, 6
        %v1361 = vsel %vm1360, %v1353, -1e+30
        %vm1362 = vcmask 57344
        %v1363 = vsel %vm1362, %v1361, -inf
        %1364 = vmax.xlane.f32.xlu0 %v1363
        %v1365 = vpop.xlane.xlu0 %1364
        %v1366 = vsub.f32 %v1361, %v1365
        %v1367 = vmul.f32 %v1366, 1.442695
        %v1368 = vpow.pop %v1367
        %v1369 = vsel %vm1362, %v1368, 0.0
        %1370 = vadd.xlane.f32.xlu0 %v1369
        %v1371 = vpop.xlane.xlu0 %1370
        %v1372 = vrcp.pop %v1371
        %v1373 = vmul.f32 %v1368, %v1372
        %v1374 = vpack.c.bf16 %v1373, %v1373
        %v1375 = vld [vmem:[#allocation3] sm:$0xff]
        %v1376 = vpack.c.bf16 %v1375, %v1375
        %vm1377 = vcmask 64512
        %v1379 = vsel %vm1377, %v1374, 0
        %vm1381 = vcmask 1043456
        %v1383 = vsel %vm1381, %v1376, 0
        %1385 = vmatprep.subr.bf16.mxu0 0
        %1386 = vmatpush1.bf16.msra.mxu0 %v1383
        %1387 = vmatprep.subr.bf16.mxu0 0
        %1388 = vmatpush1.bf16.msra.mxu0 0
        %1389 = vmatprep.subr.bf16.mxu0 0
        %1390 = vmatpush1.bf16.msra.mxu0 0
        %1391 = vmatprep.subr.bf16.mxu0 0
        %1392 = vmatpush1.bf16.msra.mxu0 0
        %1393 = vmatprep.subr.bf16.mxu0 0
        %1394 = vmatpush1.bf16.msra.mxu0 0
        %1395 = vmatprep.subr.bf16.mxu0 0
        %1396 = vmatpush1.bf16.msra.mxu0 0
        %1397 = vmatprep.subr.bf16.mxu0 0
        %1398 = vmatpush1.bf16.msra.mxu0 0
        %1399 = vmatprep.subr.bf16.mxu0 0
        %1400 = vmatpush1.bf16.msra.mxu0 0
        %1401 = vmatprep.subr.bf16.mxu0 0
        %1402 = vmatpush1.bf16.msra.mxu0 0
        %1403 = vmatprep.subr.bf16.mxu0 0
        %1404 = vmatpush1.bf16.msra.mxu0 0
        %1405 = vmatprep.subr.bf16.mxu0 0
        %1406 = vmatpush1.bf16.msra.mxu0 0
        %1407 = vmatprep.subr.bf16.mxu0 0
        %1408 = vmatpush1.bf16.msra.mxu0 0
        %1409 = vmatprep.subr.bf16.mxu0 0
        %1410 = vmatpush1.bf16.msra.mxu0 0
        %1411 = vmatprep.subr.bf16.mxu0 0
        %1412 = vmatpush1.bf16.msra.mxu0 0
        %1413 = vmatprep.subr.bf16.mxu0 0
        %1414 = vmatpush1.bf16.msra.mxu0 0
        %1415 = vmatprep.subr.bf16.mxu0 0
        %1416 = vmatpush1.bf16.msra.mxu0 0
        %1417 = vmatprep.mubr.bf16.mxu0 0
        %1418 = vmatmul.mubr.bf16.gmra.mrb[0].mxu0 %v1379
        %v1419 = vpop.f32.mrb[0].mxu0
        %v1420 = vadd.f32 0.0, %v1419
        %v1421 = vpop.f32.mrb[0].mxu0
        %v1422 = vpop.f32.mrb[0].mxu0
        %v1423 = vpop.f32.mrb[0].mxu0
        %1424 = vdwg.mxu0
        %v1425 = vpack.c.bf16 %v1420, %v1420
        %v1426 = vld [vmem:[%s10] sm:$0xf]
        %v1427 = vld [vmem:[%s10 + $0x4] sm:$0xf]
        %v1428 = vld [vmem:[%s10 + $0x8] sm:$0xf]
        %v1429 = vld [vmem:[%s10 + $0xc] sm:$0xf]
        %v1430 = vld [vmem:[%s10 + $0x10] sm:$0xf]
        %v1431 = vld [vmem:[%s10 + $0x14] sm:$0xf]
        %v1432 = vld [vmem:[%s10 + $0x18] sm:$0xf]
        %v1433 = vld [vmem:[%s10 + $0x1c] sm:$0xf]
        %v1434 = vld [vmem:[%s10 + $0x20] sm:$0xf]
        %v1435 = vld [vmem:[%s10 + $0x24] sm:$0xf]
        %v1436 = vld [vmem:[%s10 + $0x28] sm:$0xf]
        %v1437 = vld [vmem:[%s10 + $0x2c] sm:$0xf]
        %v1438 = vld [vmem:[%s10 + $0x30] sm:$0xf]
        %v1439 = vld [vmem:[%s10 + $0x34] sm:$0xf]
        %v1440 = vld [vmem:[%s10 + $0x38] sm:$0xf]
        %v1441 = vld [vmem:[%s10 + $0x3c] sm:$0xf]
        %v1442 = vld [vmem:[%s10 + $0x40] sm:$0xf]
        %v1443 = vld [vmem:[%s10 + $0x44] sm:$0xf]
        %v1444 = vld [vmem:[%s10 + $0x48] sm:$0xf]
        %v1445 = vld [vmem:[%s10 + $0x4c] sm:$0xf]
        %v1446 = vld [vmem:[%s10 + $0x50] sm:$0xf]
        %v1447 = vld [vmem:[%s10 + $0x54] sm:$0xf]
        %v1448 = vld [vmem:[%s10 + $0x58] sm:$0xf]
        %v1449 = vld [vmem:[%s10 + $0x5c] sm:$0xf]
        %v1450 = vld [vmem:[%s10 + $0x60] sm:$0xf]
        %v1451 = vld [vmem:[%s10 + $0x64] sm:$0xf]
        %v1452 = vld [vmem:[%s10 + $0x68] sm:$0xf]
        %v1453 = vld [vmem:[%s10 + $0x6c] sm:$0xf]
        %v1454 = vld [vmem:[%s10 + $0x70] sm:$0xf]
        %v1455 = vld [vmem:[%s10 + $0x74] sm:$0xf]
        %v1456 = vld [vmem:[%s10 + $0x78] sm:$0xf]
        %v1457 = vld [vmem:[%s10 + $0x7c] sm:$0xf]
        %v1458 = vld [vmem:[%s11] sm:$0x1]
        %v1491 = vunpack.c.l.b16 %v1426
        %v1492 = vunpack.c.l.b16 %v1427
        %v1493 = vunpack.c.l.b16 %v1428
        %v1494 = vunpack.c.l.b16 %v1429
        %v1495 = vunpack.c.l.b16 %v1430
        %v1496 = vunpack.c.l.b16 %v1431
        %v1497 = vunpack.c.l.b16 %v1432
        %v1498 = vunpack.c.l.b16 %v1433
        %v1499 = vunpack.c.l.b16 %v1434
        %v1500 = vunpack.c.l.b16 %v1435
        %v1501 = vunpack.c.l.b16 %v1436
        %v1502 = vunpack.c.l.b16 %v1437
        %v1503 = vunpack.c.l.b16 %v1438
        %v1504 = vunpack.c.l.b16 %v1439
        %v1505 = vunpack.c.l.b16 %v1440
        %v1506 = vunpack.c.l.b16 %v1441
        %v1507 = vunpack.c.l.b16 %v1442
        %v1508 = vunpack.c.l.b16 %v1443
        %v1509 = vunpack.c.l.b16 %v1444
        %v1510 = vunpack.c.l.b16 %v1445
        %v1511 = vunpack.c.l.b16 %v1446
        %v1512 = vunpack.c.l.b16 %v1447
        %v1513 = vunpack.c.l.b16 %v1448
        %v1514 = vunpack.c.l.b16 %v1449
        %v1515 = vunpack.c.l.b16 %v1450
        %v1516 = vunpack.c.l.b16 %v1451
        %v1517 = vunpack.c.l.b16 %v1452
        %v1518 = vunpack.c.l.b16 %v1453
        %v1519 = vunpack.c.l.b16 %v1454
        %v1520 = vunpack.c.l.b16 %v1455
        %v1521 = vunpack.c.l.b16 %v1456
        %v1522 = vunpack.c.l.b16 %v1457
        %v1523 = vpack.c.b16 %v1492, %v1491
        %v1524 = vpack.c.b16 %v1494, %v1493
        %v1525 = vpack.c.b16 %v1496, %v1495
        %v1526 = vpack.c.b16 %v1498, %v1497
        %v1527 = vpack.c.b16 %v1500, %v1499
        %v1528 = vpack.c.b16 %v1502, %v1501
        %v1529 = vpack.c.b16 %v1504, %v1503
        %v1530 = vpack.c.b16 %v1506, %v1505
        %v1531 = vpack.c.b16 %v1508, %v1507
        %v1532 = vpack.c.b16 %v1510, %v1509
        %v1533 = vpack.c.b16 %v1512, %v1511
        %v1534 = vpack.c.b16 %v1514, %v1513
        %v1535 = vpack.c.b16 %v1516, %v1515
        %v1536 = vpack.c.b16 %v1518, %v1517
        %v1537 = vpack.c.b16 %v1520, %v1519
        %v1538 = vpack.c.b16 %v1522, %v1521
        %1555 = vmatprep.subr.bf16.mxu0 0
        %1556 = vmatpush1.bf16.msra.mxu0 %v1523
        %1557 = vmatprep.subr.bf16.mxu0 0
        %1558 = vmatpush1.bf16.msra.mxu0 %v1524
        %1559 = vmatprep.subr.bf16.mxu0 0
        %1560 = vmatpush1.bf16.msra.mxu0 %v1525
        %1561 = vmatprep.subr.bf16.mxu0 0
        %1562 = vmatpush1.bf16.msra.mxu0 %v1526
        %1563 = vmatprep.subr.bf16.mxu0 0
        %1564 = vmatpush1.bf16.msra.mxu0 %v1527
        %1565 = vmatprep.subr.bf16.mxu0 0
        %1566 = vmatpush1.bf16.msra.mxu0 %v1528
        %1567 = vmatprep.subr.bf16.mxu0 0
        %1568 = vmatpush1.bf16.msra.mxu0 %v1529
        %1569 = vmatprep.subr.bf16.mxu0 0
        %1570 = vmatpush1.bf16.msra.mxu0 %v1530
        %1571 = vmatprep.subr.bf16.mxu0 0
        %1572 = vmatpush1.bf16.msra.mxu0 %v1531
        %1573 = vmatprep.subr.bf16.mxu0 0
        %1574 = vmatpush1.bf16.msra.mxu0 %v1532
        %1575 = vmatprep.subr.bf16.mxu0 0
        %1576 = vmatpush1.bf16.msra.mxu0 %v1533
        %1577 = vmatprep.subr.bf16.mxu0 0
        %1578 = vmatpush1.bf16.msra.mxu0 %v1534
        %1579 = vmatprep.subr.bf16.mxu0 0
        %1580 = vmatpush1.bf16.msra.mxu0 %v1535
        %1581 = vmatprep.subr.bf16.mxu0 0
        %1582 = vmatpush1.bf16.msra.mxu0 %v1536
        %1583 = vmatprep.subr.bf16.mxu0 0
        %1584 = vmatpush1.bf16.msra.mxu0 %v1537
        %1585 = vmatprep.subr.bf16.mxu0 0
        %1586 = vmatpush1.bf16.msra.mxu0 %v1538
        %1587 = vmatprep.mubr.bf16.mxu0 %v1425
        %1588 = vmatmul.mubr.bf16.gmra.mrb[0].mxu0 %v1210
        %v1589 = vpop.f32.mrb[0].mxu0
        %v1590 = vadd.f32 %v1458, %v1589
        %v1591 = vpop.f32.mrb[0].mxu0
        %v1592 = vpop.f32.mrb[0].mxu0
        %v1593 = vpop.f32.mrb[0].mxu0
        %1594 = vdwg.mxu0
        %v1595 = vstv %s39
        %vm1596 = vcmp.eq.s32.totalorder %v652, %v1595
        %v1597 = vsel %vm1596, 1, 0
        %v1598 = vcvt.s32.f32 %v1597
        %v1599 = vlaneseq
        %v1600 = vshrl.u32 %v1599, 7
        %v1601 = vsub.s32 0, %v1600
        %v1602 = vrot.slane %v1590, %v1601
        %v1603 = vmul.f32 %v1598, %v1602
        %v1604 = vadd.f32 %v670, %v1603
        %1605 = vst [vmem:[#allocation4] sm:$0xff] %v1604
        %v1606 = vld [vmem:[#allocation5] sm:$0xff]
        %v1607 = vlaneseq
        %v1608 = vshrl.u32 %v1607, 7
        %v1609 = vsub.s32 0, %v1608
        %v1610 = vrot.slane %v1207, %v1609
        %v1611 = vmul.f32 %v1598, %v1610
        %v1612 = vadd.f32 %v1606, %v1611
        %1613 = vst [vmem:[#allocation5] sm:$0xff] %v1612
        %v1614 = vld [vmem:[%s12] sm:$0xf]
        %v1615 = vadd.f32 %v1602, %v1614
        %v1616 = vpack.c.bf16 %v1615, %v1615
        %v1617 = vld [vmem:[%s13] sm:$0xf]
        %v1618 = vld [vmem:[%s13 + $0x4] sm:$0xf]
        %v1619 = vld [vmem:[%s13 + $0x8] sm:$0xf]
        %v1620 = vld [vmem:[%s13 + $0xc] sm:$0xf]
        %v1621 = vld [vmem:[%s13 + $0x10] sm:$0xf]
        %v1622 = vld [vmem:[%s13 + $0x14] sm:$0xf]
        %v1623 = vld [vmem:[%s13 + $0x18] sm:$0xf]
        %v1624 = vld [vmem:[%s13 + $0x1c] sm:$0xf]
        %v1625 = vld [vmem:[%s13 + $0x20] sm:$0xf]
        %v1626 = vld [vmem:[%s13 + $0x24] sm:$0xf]
        %v1627 = vld [vmem:[%s13 + $0x28] sm:$0xf]
        %v1628 = vld [vmem:[%s13 + $0x2c] sm:$0xf]
        %v1629 = vld [vmem:[%s13 + $0x30] sm:$0xf]
        %v1630 = vld [vmem:[%s13 + $0x34] sm:$0xf]
        %v1631 = vld [vmem:[%s13 + $0x38] sm:$0xf]
        %v1632 = vld [vmem:[%s13 + $0x3c] sm:$0xf]
        %v1633 = vld [vmem:[%s14] sm:$0x1]
        %v1635 = vlaneseq
        %v1636 = vshrl.u32 %v1635, 7
        %v1637 = vsub.s32 0, %v1636
        %v1638 = vrot.slane %v1633, %v1637
        %v1656 = vunpack.c.l.b16 %v1617
        %v1657 = vunpack.c.l.b16 %v1618
        %v1658 = vunpack.c.l.b16 %v1619
        %v1659 = vunpack.c.l.b16 %v1620
        %v1660 = vunpack.c.l.b16 %v1621
        %v1661 = vunpack.c.l.b16 %v1622
        %v1662 = vunpack.c.l.b16 %v1623
        %v1663 = vunpack.c.l.b16 %v1624
        %v1664 = vunpack.c.l.b16 %v1625
        %v1665 = vunpack.c.l.b16 %v1626
        %v1666 = vunpack.c.l.b16 %v1627
        %v1667 = vunpack.c.l.b16 %v1628
        %v1668 = vunpack.c.l.b16 %v1629
        %v1669 = vunpack.c.l.b16 %v1630
        %v1670 = vunpack.c.l.b16 %v1631
        %v1671 = vunpack.c.l.b16 %v1632
        %v1672 = vpack.c.b16 %v1657, %v1656
        %v1673 = vpack.c.b16 %v1659, %v1658
        %v1674 = vpack.c.b16 %v1661, %v1660
        %v1675 = vpack.c.b16 %v1663, %v1662
        %v1676 = vpack.c.b16 %v1665, %v1664
        %v1677 = vpack.c.b16 %v1667, %v1666
        %v1678 = vpack.c.b16 %v1669, %v1668
        %v1679 = vpack.c.b16 %v1671, %v1670
        %1688 = vmatprep.subr.bf16.mxu0 0
        %1689 = vmatpush1.bf16.msra.mxu0 %v1672
        %1690 = vmatprep.subr.bf16.mxu0 0
        %1691 = vmatpush1.bf16.msra.mxu0 %v1673
        %1692 = vmatprep.subr.bf16.mxu0 0
        %1693 = vmatpush1.bf16.msra.mxu0 %v1674
        %1694 = vmatprep.subr.bf16.mxu0 0
        %1695 = vmatpush1.bf16.msra.mxu0 %v1675
        %1696 = vmatprep.subr.bf16.mxu0 0
        %1697 = vmatpush1.bf16.msra.mxu0 %v1676
        %1698 = vmatprep.subr.bf16.mxu0 0
        %1699 = vmatpush1.bf16.msra.mxu0 %v1677
        %1700 = vmatprep.subr.bf16.mxu0 0
        %1701 = vmatpush1.bf16.msra.mxu0 %v1678
        %1702 = vmatprep.subr.bf16.mxu0 0
        %1703 = vmatpush1.bf16.msra.mxu0 %v1679
        %1704 = vmatprep.subr.bf16.mxu0 0
        %1705 = vmatpush1.bf16.msra.mxu0 0
        %1706 = vmatprep.subr.bf16.mxu0 0
        %1707 = vmatpush1.bf16.msra.mxu0 0
        %1708 = vmatprep.subr.bf16.mxu0 0
        %1709 = vmatpush1.bf16.msra.mxu0 0
        %1710 = vmatprep.subr.bf16.mxu0 0
        %1711 = vmatpush1.bf16.msra.mxu0 0
        %1712 = vmatprep.subr.bf16.mxu0 0
        %1713 = vmatpush1.bf16.msra.mxu0 0
        %1714 = vmatprep.subr.bf16.mxu0 0
        %1715 = vmatpush1.bf16.msra.mxu0 0
        %1716 = vmatprep.subr.bf16.mxu0 0
        %1717 = vmatpush1.bf16.msra.mxu0 0
        %1718 = vmatprep.subr.bf16.mxu0 0
        %1719 = vmatpush1.bf16.msra.mxu0 0
        %1720 = vmatprep.mubr.bf16.mxu0 0
        %1721 = vmatmul.mubr.bf16.gmra.mrb[0].mxu0 %v1616
        %v1722 = vpop.f32.mrb[0].mxu0
        %v1723 = vadd.f32 %v1638, %v1722
        %v1724 = vpop.f32.mrb[0].mxu0
        %v1725 = vpop.f32.mrb[0].mxu0
        %v1726 = vpop.f32.mrb[0].mxu0
        %1727 = vdwg.mxu0
        %1728 = vst [vmem:[%s430] sm:$0xf] %v1723
        %s1729 = sand.u32 %s320, 1
        %s1730 = scalar_lea.sflag [#allocation10], %s1729
        %s1731 = sand.u32 %s320, 1
        %s1732 = smul.addr %s1731, 4
        %s1733 = scalar_lea.vmem [#allocation9], %s1732
        // Predicated region
        $region77: #{_forward_jit.3} parent=71 // pred_check
          %p1734 = pneg %p330
        $region78: #{_forward_jit.3} parent=71 // pred_check_branch
          %1736 = sbr.rel (%p1734) target = $region80
        $region79: #{_forward_jit.3} parent=71 // pred_region
          %s1738 = ssub.s32 64, 64
          %1739 = vsyncadd %s1730, %s1738
          %s1740 = smul.addr %s39, 64
          %s1741 = scalar_lea.hbm %s15, %s1740
          %s1743 = sshll.u32 %s1733, 4
          %s1744 = int_to_ptr.vmem [resolvable:$true] %s1743
          %1746 = dma.vmem_to_hbm [thread:$0]  %s1744, 64, %s1741, %s1730
        $region80: #{_forward_jit.3} parent=71 // pred_fallthru
          _
      $region72: #{_forward_jit.3} parent=5 // pred_fallthru
        _
      %p1747 = scmp.le.s32.totalorder 2, %s34
      // Predicated region
      $region81: #{_forward_jit.3} parent=5 // pred_check
        %p1748 = pneg %p1747
      $region82: #{_forward_jit.3} parent=5 // pred_check_branch
        %1750 = sbr.rel (%p1748) target = $region84
      $region83: #{_forward_jit.3} parent=5 // pred_region
        %s1751 = ssub.s32 %s34, 2
        // Predicated region
        $region85: #{_forward_jit.3} parent=83 // pred_check
          %p1752 = pneg %p336
        $region86: #{_forward_jit.3} parent=83 // pred_check_branch
          %1754 = sbr.rel (%p1752) target = $region88
        $region87: #{_forward_jit.3} parent=83 // pred_region
          %s1755 = sand.u32 %s321, 1
          %s1756 = scalar_lea.sflag [#allocation10], %s1755
          %s1757 = sand.u32 %s321, 1
          %s1758 = smul.addr %s1757, 4
          %s1759 = scalar_lea.vmem [#allocation9], %s1758
          %1760 = dma.done %s1756, 64
        $region88: #{_forward_jit.3} parent=83 // pred_fallthru
          _
      $region84: #{_forward_jit.3} parent=5 // pred_fallthru
        _
    $region6: #{_forward_jit.3} parent=1 // loop_footer
      %s38 = sadd.s32 1, %s34
    $region7: #{_forward_jit.3} parent=1 // loop_footer_branch
      %33 = sbr.rel target = $region3
    $region8: #{_forward_jit.3} parent=1 // loop_exit
      _
    %1761 = vsyncpa [#allocation10], 1
    %s1762 = scalar_lea.sflag [#allocation10], 1
    %1763 = vsyncpa %s1762, 1

// kernel: _forward_jit.2
$region0: #{_forward_jit.2}
  #allocation0 [shape = 'u32[]', space=smem, size = 0x4, offset = 0x4, fixed_abs, tag = 'smem constant byte address 0x4 - core index']
  #allocation1 [shape = 'u32[144,128]{1,0:T(1,128)}', space=vmem, size = 0x12000, scoped, tag = 'internal scratch']
  #allocation2 [shape = 'f32[8,128]{1,0:T(8,128)}', space=vmem, size = 0x1000, scoped, tag = 'scratch operand']
  #allocation3 [shape = 'f32[8,128]{1,0:T(8,128)}', space=vmem, size = 0x1000, scoped, tag = 'scratch operand']
  #allocation4 [shape = 's32[1]{0}', space=sflag, size = 0x4, scoped, tag = 'scoped memory for _forward_jit.2']
  #allocation5 [shape = 'u8[512]{0}', space=smem, size = 0x200, scoped, tag = 'prefetched SMEM operand 0']
  #allocation6 [shape = 'u8[512]{0}', space=smem, size = 0x200, scoped, tag = 'prefetched SMEM operand 1']
  #allocation7 [shape = 'u8[512]{0}', space=smem, size = 0x200, scoped, tag = 'prefetched SMEM operand 2']
  %s0 = inlined_call_operand.vmem [shape: s32[6], index: 0, kind: input, shape index: {}]
  %s1 = inlined_call_operand.vmem [shape: s32[24], index: 1, kind: input, shape index: {}]
  %s2 = inlined_call_operand.vmem [shape: s32[6], index: 2, kind: input, shape index: {}]
  %s3 = inlined_call_operand.vmem [shape: f32[8,128], index: 3, kind: input, shape index: {}]
  %s4 = inlined_call_operand.vmem [shape: f32[1,512], index: 4, kind: input, shape index: {}]
  %s5 = inlined_call_operand.vmem [shape: f32[1,512], index: 5, kind: input, shape index: {}]
  %s6 = inlined_call_operand.hbm [shape: bf16[128,512], index: 6, kind: input, shape index: {}]
  %s7 = inlined_call_operand.hbm [shape: bf16[512,896], index: 7, kind: input, shape index: {}]
  %s8 = inlined_call_operand.vmem [shape: f32[1,512], index: 8, kind: input, shape index: {}]
  %s9 = inlined_call_operand.vmem [shape: f32[1,896], index: 9, kind: input, shape index: {}]
  %s10 = inlined_call_operand.vmem [shape: f32[8,128], index: 10, kind: output, shape index: {0}]
  %s11 = inlined_call_operand.vmem [shape: f32[8,128], index: 11, kind: output, shape index: {1}]
  %12 = xla_tuple %s10, %s11
  %s13 = sld [smem:[#allocation0]]
  $region81: #{_forward_jit.2} parent=0
    _
  %s15 = ssub.s32 1, %s13
  %s16 = scalar_select 0, %s15, %s13
  %s17 = sshll.u32 %s0, 4
  %s18 = int_to_ptr.vmem [resolvable:$true] %s17
  %20 = dma.vmem_to_smem %s18, 16, [#allocation5], [#allocation4]
  %s21 = sshll.u32 %s1, 4
  %s22 = int_to_ptr.vmem [resolvable:$true] %s21
  %24 = dma.vmem_to_smem %s22, 16, [#allocation6], [#allocation4]
  %s25 = sshll.u32 %s2, 4
  %s26 = int_to_ptr.vmem [resolvable:$true] %s25
  %28 = dma.vmem_to_smem %s26, 16, [#allocation7], [#allocation4]
  %29 = dma.done [#allocation4], 48
  %30 = sfence
  $region1: #{_forward_jit.2} parent=0
    #allocation8 [shape = 'u8[131072]{0}', space=vmem, size = 0x20000, scoped, tag = 'input window, operand 6, single buffered']
    #allocation9 [shape = 's32[2]{0}', space=sflag, size = 0x8, scoped, tag = 'scoped memory for _forward_jit.2']
    #allocation10 [shape = 'u8[917504]{0}', space=vmem, size = 0xe0000, scoped, tag = 'input window, operand 7, single buffered']
    #allocation11 [shape = 's32[1]{0}', space=sflag, size = 0x4, scoped, tag = 'scoped memory for _forward_jit.2']
    %31 = vsyncpa [#allocation9], 0
    %32 = vsyncpa [#allocation11], 0
    loop: start=0, step=1, limit=8
    $region2: #{_forward_jit.2} parent=1 // loop_pre_header
      _
    $region3: #{_forward_jit.2} parent=1 // loop_header
      %s34 = sphi 0, %s38
      %p35 = scmp.ge.s32.totalorder %s34, 8
      %s42 = sphi 0, %s42
      %s44 = sphi 0, %s42
      %s45 = sphi 0, %s44
      %s59 = sphi 0, %s45
      %s63 = sphi 0, %s63
      %s65 = sphi 0, %s63
      %s66 = sphi 0, %s65
      %s80 = sphi 0, %s66
      %s84 = sphi 0, %s84
      %s86 = sphi 0, %s84
      %s87 = sphi 0, %s86
      %s101 = sphi 0, %s87
      %s105 = sphi 0, %s105
      %s107 = sphi 0, %s105
      %s108 = sphi 0, %s107
      %s122 = sphi 0, %s108
      %s126 = sphi 0, %s126
      %s128 = sphi 0, %s126
      %s129 = sphi 0, %s128
      %s143 = sphi 0, %s129
      %s147 = sphi 0, %s147
      %s149 = sphi 0, %s147
      %s150 = sphi 0, %s149
      %s164 = sphi 0, %s150
      %s168 = sphi 0, %s168
      %s170 = sphi 0, %s168
      %s171 = sphi 0, %s170
      %s185 = sphi 0, %s171
      %s189 = sphi 0, %s189
      %s191 = sphi 0, %s189
      %s192 = sphi 0, %s191
      %s206 = sphi 0, %s192
      %s210 = sphi 0, %s210
      %s212 = sphi 0, %s210
      %s213 = sphi 0, %s212
      %s227 = sphi 0, %s213
    $region4: #{_forward_jit.2} parent=1 // loop_header_branch
      %37 = sbr.rel (%p35) target = $region8
    $region5: #{_forward_jit.2} parent=1 // loop_body
      %s39 = ssub.s32 %s34, 1
      %s40 = ssub.s32 %s34, 2
      %s41 = sadd.s32 %s34, 1
      %s43 = sadd.s32 %s42, 1
      %p46 = scmp.eq.s32.totalorder %s34, 5
      %p47 = scmp.ne.s32.totalorder %s42, %s44
      %p48 = scmp.eq.s32.totalorder %s34, 0
      %p49 = por %p47, %p48
      %p50 = scmp.ne.s32.totalorder %s42, %s44
      %p51 = scmp.eq.s32.totalorder %s39, 5
      %p52 = por %p50, %p51
      %p53 = scmp.ne.s32.totalorder %s44, %s45
      %p54 = scmp.eq.s32.totalorder %s39, 0
      %p55 = por %p53, %p54
      %p56 = scmp.ne.s32.totalorder %s44, %s45
      %p57 = scmp.eq.s32.totalorder %s40, 5
      %p58 = por %p56, %p57
      %p60 = scmp.ne.s32.totalorder %s45, %s59
      %p61 = scmp.eq.s32.totalorder %s40, 0
      %p62 = por %p60, %p61
      %s64 = sadd.s32 %s63, 1
      %p67 = scmp.eq.s32.totalorder %s34, 5
      %p68 = scmp.ne.s32.totalorder %s63, %s65
      %p69 = scmp.eq.s32.totalorder %s34, 0
      %p70 = por %p68, %p69
      %p71 = scmp.ne.s32.totalorder %s63, %s65
      %p72 = scmp.eq.s32.totalorder %s39, 5
      %p73 = por %p71, %p72
      %p74 = scmp.ne.s32.totalorder %s65, %s66
      %p75 = scmp.eq.s32.totalorder %s39, 0
      %p76 = por %p74, %p75
      %p77 = scmp.ne.s32.totalorder %s65, %s66
      %p78 = scmp.eq.s32.totalorder %s40, 5
      %p79 = por %p77, %p78
      %p81 = scmp.ne.s32.totalorder %s66, %s80
      %p82 = scmp.eq.s32.totalorder %s40, 0
      %p83 = por %p81, %p82
      %s85 = sadd.s32 %s84, 1
      %p88 = scmp.eq.s32.totalorder %s34, 5
      %p89 = scmp.ne.s32.totalorder %s84, %s86
      %p90 = scmp.eq.s32.totalorder %s34, 0
      %p91 = por %p89, %p90
      %p92 = scmp.ne.s32.totalorder %s84, %s86
      %p93 = scmp.eq.s32.totalorder %s39, 5
      %p94 = por %p92, %p93
      %p95 = scmp.ne.s32.totalorder %s86, %s87
      %p96 = scmp.eq.s32.totalorder %s39, 0
      %p97 = por %p95, %p96
      %p98 = scmp.ne.s32.totalorder %s86, %s87
      %p99 = scmp.eq.s32.totalorder %s40, 5
      %p100 = por %p98, %p99
      %p102 = scmp.ne.s32.totalorder %s87, %s101
      %p103 = scmp.eq.s32.totalorder %s40, 0
      %p104 = por %p102, %p103
      %s106 = sadd.s32 %s105, 1
      %p109 = scmp.eq.s32.totalorder %s34, 5
      %p110 = scmp.ne.s32.totalorder %s105, %s107
      %p111 = scmp.eq.s32.totalorder %s34, 0
      %p112 = por %p110, %p111
      %p113 = scmp.ne.s32.totalorder %s105, %s107
      %p114 = scmp.eq.s32.totalorder %s39, 5
      %p115 = por %p113, %p114
      %p116 = scmp.ne.s32.totalorder %s107, %s108
      %p117 = scmp.eq.s32.totalorder %s39, 0
      %p118 = por %p116, %p117
      %p119 = scmp.ne.s32.totalorder %s107, %s108
      %p120 = scmp.eq.s32.totalorder %s40, 5
      %p121 = por %p119, %p120
      %p123 = scmp.ne.s32.totalorder %s108, %s122
      %p124 = scmp.eq.s32.totalorder %s40, 0
      %p125 = por %p123, %p124
      %s127 = sadd.s32 %s126, 1
      %p130 = scmp.eq.s32.totalorder %s34, 5
      %p131 = scmp.ne.s32.totalorder %s126, %s128
      %p132 = scmp.eq.s32.totalorder %s34, 0
      %p133 = por %p131, %p132
      %p134 = scmp.ne.s32.totalorder %s126, %s128
      %p135 = scmp.eq.s32.totalorder %s39, 5
      %p136 = por %p134, %p135
      %p137 = scmp.ne.s32.totalorder %s128, %s129
      %p138 = scmp.eq.s32.totalorder %s39, 0
      %p139 = por %p137, %p138
      %p140 = scmp.ne.s32.totalorder %s128, %s129
      %p141 = scmp.eq.s32.totalorder %s40, 5
      %p142 = por %p140, %p141
      %p144 = scmp.ne.s32.totalorder %s129, %s143
      %p145 = scmp.eq.s32.totalorder %s40, 0
      %p146 = por %p144, %p145
      %s148 = sadd.s32 %s147, 1
      %p151 = scmp.eq.s32.totalorder %s34, 5
      %p152 = scmp.ne.s32.totalorder %s147, %s149
      %p153 = scmp.eq.s32.totalorder %s34, 0
      %p154 = por %p152, %p153
      %p155 = scmp.ne.s32.totalorder %s147, %s149
      %p156 = scmp.eq.s32.totalorder %s39, 5
      %p157 = por %p155, %p156
      %p158 = scmp.ne.s32.totalorder %s149, %s150
      %p159 = scmp.eq.s32.totalorder %s39, 0
      %p160 = por %p158, %p159
      %p161 = scmp.ne.s32.totalorder %s149, %s150
      %p162 = scmp.eq.s32.totalorder %s40, 5
      %p163 = por %p161, %p162
      %p165 = scmp.ne.s32.totalorder %s150, %s164
      %p166 = scmp.eq.s32.totalorder %s40, 0
      %p167 = por %p165, %p166
      %s169 = sadd.s32 %s168, 1
      %p172 = scmp.eq.s32.totalorder %s34, 5
      %p173 = scmp.ne.s32.totalorder %s168, %s170
      %p174 = scmp.eq.s32.totalorder %s34, 0
      %p175 = por %p173, %p174
      %p176 = scmp.ne.s32.totalorder %s168, %s170
      %p177 = scmp.eq.s32.totalorder %s39, 5
      %p178 = por %p176, %p177
      %p179 = scmp.ne.s32.totalorder %s170, %s171
      %p180 = scmp.eq.s32.totalorder %s39, 0
      %p181 = por %p179, %p180
      %p182 = scmp.ne.s32.totalorder %s170, %s171
      %p183 = scmp.eq.s32.totalorder %s40, 5
      %p184 = por %p182, %p183
      %p186 = scmp.ne.s32.totalorder %s171, %s185
      %p187 = scmp.eq.s32.totalorder %s40, 0
      %p188 = por %p186, %p187
      %s190 = sadd.s32 %s189, 1
      %p193 = scmp.eq.s32.totalorder %s34, 5
      %p194 = scmp.ne.s32.totalorder %s189, %s191
      %p195 = scmp.eq.s32.totalorder %s34, 0
      %p196 = por %p194, %p195
      %p197 = scmp.ne.s32.totalorder %s189, %s191
      %p198 = scmp.eq.s32.totalorder %s39, 5
      %p199 = por %p197, %p198
      %p200 = scmp.ne.s32.totalorder %s191, %s192
      %p201 = scmp.eq.s32.totalorder %s39, 0
      %p202 = por %p200, %p201
      %p203 = scmp.ne.s32.totalorder %s191, %s192
      %p204 = scmp.eq.s32.totalorder %s40, 5
      %p205 = por %p203, %p204
      %p207 = scmp.ne.s32.totalorder %s192, %s206
      %p208 = scmp.eq.s32.totalorder %s40, 0
      %p209 = por %p207, %p208
      %s211 = sadd.s32 %s210, 1
      %p214 = scmp.eq.s32.totalorder %s34, 5
      %p215 = scmp.ne.s32.totalorder %s210, %s212
      %p216 = scmp.eq.s32.totalorder %s34, 0
      %p217 = por %p215, %p216
      %p218 = scmp.ne.s32.totalorder %s210, %s212
      %p219 = scmp.eq.s32.totalorder %s39, 5
      %p220 = por %p218, %p219
      %p221 = scmp.ne.s32.totalorder %s212, %s213
      %p222 = scmp.eq.s32.totalorder %s39, 0
      %p223 = por %p221, %p222
      %p224 = scmp.ne.s32.totalorder %s212, %s213
      %p225 = scmp.eq.s32.totalorder %s40, 5
      %p226 = por %p224, %p225
      %p228 = scmp.ne.s32.totalorder %s213, %s227
      %p229 = scmp.eq.s32.totalorder %s40, 0
      %p230 = por %p228, %p229
      %p231 = scmp.le.s32.totalorder 1, %s34
      %p232 = scmp.lt.s32.totalorder %s34, 7
      %p233 = pnand %p231, %p232
      %p234 = pneg %p233
      // Predicated region
      $region9: #{_forward_jit.2} parent=5 // pred_check
        _
      $region10: #{_forward_jit.2} parent=5 // pred_check_branch
        %236 = sbr.rel (%p233) target = $region12
      $region11: #{_forward_jit.2} parent=5 // pred_region
        %s237 = ssub.s32 %s34, 1
        // Predicated region
        $region13: #{_forward_jit.2} parent=11 // pred_check
          %p238 = pneg %p55
        $region14: #{_forward_jit.2} parent=11 // pred_check_branch
          %240 = sbr.rel (%p238) target = $region16
        $region15: #{_forward_jit.2} parent=11 // pred_region
          _
        $region16: #{_forward_jit.2} parent=11 // pred_fallthru
          _
        // Predicated region
        $region17: #{_forward_jit.2} parent=11 // pred_check
          %p241 = pneg %p76
        $region18: #{_forward_jit.2} parent=11 // pred_check_branch
          %243 = sbr.rel (%p241) target = $region20
        $region19: #{_forward_jit.2} parent=11 // pred_region
          _
        $region20: #{_forward_jit.2} parent=11 // pred_fallthru
          _
        // Predicated region
        $region21: #{_forward_jit.2} parent=11 // pred_check
          %p244 = pneg %p97
        $region22: #{_forward_jit.2} parent=11 // pred_check_branch
          %246 = sbr.rel (%p244) target = $region24
        $region23: #{_forward_jit.2} parent=11 // pred_region
          _
        $region24: #{_forward_jit.2} parent=11 // pred_fallthru
          _
        // Predicated region
        $region25: #{_forward_jit.2} parent=11 // pred_check
          %p247 = pneg %p118
        $region26: #{_forward_jit.2} parent=11 // pred_check_branch
          %249 = sbr.rel (%p247) target = $region28
        $region27: #{_forward_jit.2} parent=11 // pred_region
          %s251 = ssub.s32 4096, 4096
          %252 = vsyncadd [#allocation9], %s251
          %s253 = sshll.u32 [#allocation8], 4
          %s254 = int_to_ptr.vmem [resolvable:$true] %s253
          %259 = dma.hbm_to_vmem [thread:$0]  %s6, 4096, %s254, [#allocation9], 256, 256, 16
        $region28: #{_forward_jit.2} parent=11 // pred_fallthru
          _
        // Predicated region
        $region29: #{_forward_jit.2} parent=11 // pred_check
          %p260 = pneg %p139
        $region30: #{_forward_jit.2} parent=11 // pred_check_branch
          %262 = sbr.rel (%p260) target = $region32
        $region31: #{_forward_jit.2} parent=11 // pred_region
          %s264 = ssub.s32 28672, 28672
          %265 = vsyncadd [#allocation11], %s264
          %s266 = sshll.u32 [#allocation10], 4
          %s267 = int_to_ptr.vmem [resolvable:$true] %s266
          %272 = dma.hbm_to_vmem [thread:$0]  %s7, 28672, %s267, [#allocation11], 448, 448, 28
        $region32: #{_forward_jit.2} parent=11 // pred_fallthru
          _
        // Predicated region
        $region33: #{_forward_jit.2} parent=11 // pred_check
          %p273 = pneg %p160
        $region34: #{_forward_jit.2} parent=11 // pred_check_branch
          %275 = sbr.rel (%p273) target = $region36
        $region35: #{_forward_jit.2} parent=11 // pred_region
          _
        $region36: #{_forward_jit.2} parent=11 // pred_fallthru
          _
        // Predicated region
        $region37: #{_forward_jit.2} parent=11 // pred_check
          %p276 = pneg %p181
        $region38: #{_forward_jit.2} parent=11 // pred_check_branch
          %278 = sbr.rel (%p276) target = $region40
        $region39: #{_forward_jit.2} parent=11 // pred_region
          _
        $region40: #{_forward_jit.2} parent=11 // pred_fallthru
          _
      $region12: #{_forward_jit.2} parent=5 // pred_fallthru
        _
      %p279 = scmp.lt.s32.totalorder %s34, 6
      // Predicated region
      $region41: #{_forward_jit.2} parent=5 // pred_check
        %p280 = pneg %p279
      $region42: #{_forward_jit.2} parent=5 // pred_check_branch
        %282 = sbr.rel (%p280) target = $region44
      $region43: #{_forward_jit.2} parent=5 // pred_region
        _
      $region44: #{_forward_jit.2} parent=5 // pred_fallthru
        _
      %p283 = scmp.le.s32.totalorder 1, %s34
      %p284 = scmp.lt.s32.totalorder %s34, 7
      %p285 = pnand %p283, %p284
      %p286 = pneg %p285
      // Predicated region
      $region45: #{_forward_jit.2} parent=5 // pred_check
        _
      $region46: #{_forward_jit.2} parent=5 // pred_check_branch
        %288 = sbr.rel (%p285) target = $region48
      $region47: #{_forward_jit.2} parent=5 // pred_region
        %s289 = ssub.s32 %s34, 1
        // Predicated region
        $region49: #{_forward_jit.2} parent=47 // pred_check
          %p290 = pneg %p118
        $region50: #{_forward_jit.2} parent=47 // pred_check_branch
          %292 = sbr.rel (%p290) target = $region52
        $region51: #{_forward_jit.2} parent=47 // pred_region
          %293 = dma.done [#allocation9], 4096
        $region52: #{_forward_jit.2} parent=47 // pred_fallthru
          _
        // Predicated region
        $region53: #{_forward_jit.2} parent=47 // pred_check
          %p294 = pneg %p139
        $region54: #{_forward_jit.2} parent=47 // pred_check_branch
          %296 = sbr.rel (%p294) target = $region56
        $region55: #{_forward_jit.2} parent=47 // pred_region
          %297 = dma.done [#allocation11], 28672
        $region56: #{_forward_jit.2} parent=47 // pred_fallthru
          _
        %p298 = pneg %p55
        %p299 = pneg %p52
        %p300 = pneg %p76
        %p301 = pneg %p73
        %p302 = pneg %p97
        %p303 = pneg %p94
        %p304 = pneg %p118
        %p305 = pneg %p115
        %p306 = pneg %p139
        %p307 = pneg %p136
        %p308 = pneg %p160
        %p309 = pneg %p157
        %p310 = pneg %p181
        %p311 = pneg %p178
        %p312 = pneg %p202
        %p313 = pneg %p199
        %p314 = pneg %p223
        %p315 = pneg %p220
        %p317 = scmp.eq.s32.totalorder %s39, 0
        // Predicated region
        $region57: #{_forward_jit.2} parent=47 // pred_check
          %p318 = pneg %p317
        $region58: #{_forward_jit.2} parent=47 // pred_check_branch
          %320 = sbr.rel (%p318) target = $region60
        $region59: #{_forward_jit.2} parent=47 // pred_region
          %321 = vst [vmem:[#allocation2] sm:$0xff] 0.0
          %322 = vst [vmem:[#allocation3] sm:$0xff] 0.0
        $region60: #{_forward_jit.2} parent=47 // pred_fallthru
          _
        %s323 = sld [smem:[#allocation5 + %s39]]
        %v324 = vlaneseq
        %v325 = vshrl.u32 %v324, 7
        %v326 = vld [vmem:[%s3] sm:$0xff]
        %v327 = vstv %s323
        %vm328 = vcmp.eq.s32.totalorder %v325, %v327
        %v329 = vsel %vm328, 1, 0
        %v330 = vcvt.s32.f32 %v329
        %v331 = vmul.f32 %v326, %v330
        %v332 = vrot.slane %v331, 4
        %v333 = vadd.f32 %v331, %v332
        %v334 = vrot.slane %v333, 2
        %v335 = vadd.f32 %v333, %v334
        %v336 = vrot.slane %v335, 1
        %v337 = vadd.f32 %v335, %v336
        %v338 = vpack.c.bf16 %v337, %v337
        %v339 = vld [vmem:[#allocation2] sm:$0xff]
        %v340 = vld [vmem:[#allocation3] sm:$0xff]
        %s341 = smul.u32 %s39, 4
        %s342 = sld [smem:[#allocation6 + %s341]]
        %v343 = vstv %s342
        %vm344 = vcmp.eq.s32.totalorder %v325, %v343
        %v345 = vsel %vm344, 1, 0
        %v346 = vcvt.s32.f32 %v345
        %v347 = vmul.f32 %v339, %v346
        %v348 = vrot.slane %v347, 4
        %v349 = vadd.f32 %v347, %v348
        %v350 = vrot.slane %v349, 2
        %v351 = vadd.f32 %v349, %v350
        %v352 = vrot.slane %v351, 1
        %v353 = vadd.f32 %v351, %v352
        %v354 = vmul.f32 %v340, %v346
        %v355 = vrot.slane %v354, 4
        %v356 = vadd.f32 %v354, %v355
        %v357 = vrot.slane %v356, 2
        %v358 = vadd.f32 %v356, %v357
        %v359 = vrot.slane %v358, 1
        %v360 = vadd.f32 %v358, %v359
        %s361 = sadd.s32 %s341, 1
        %s362 = sld [smem:[#allocation6 + %s361]]
        %v363 = vstv %s362
        %vm364 = vcmp.eq.s32.totalorder %v325, %v363
        %v365 = vsel %vm364, 1, 0
        %v366 = vcvt.s32.f32 %v365
        %v367 = vmul.f32 %v339, %v366
        %v368 = vrot.slane %v367, 4
        %v369 = vadd.f32 %v367, %v368
        %v370 = vrot.slane %v369, 2
        %v371 = vadd.f32 %v369, %v370
        %v372 = vrot.slane %v371, 1
        %v373 = vadd.f32 %v371, %v372
        %v374 = vmul.f32 %v340, %v366
        %v375 = vrot.slane %v374, 4
        %v376 = vadd.f32 %v374, %v375
        %v377 = vrot.slane %v376, 2
        %v378 = vadd.f32 %v376, %v377
        %v379 = vrot.slane %v378, 1
        %v380 = vadd.f32 %v378, %v379
        %s381 = sadd.s32 %s341, 2
        %s382 = sld [smem:[#allocation6 + %s381]]
        %v383 = vstv %s382
        %vm384 = vcmp.eq.s32.totalorder %v325, %v383
        %v385 = vsel %vm384, 1, 0
        %v386 = vcvt.s32.f32 %v385
        %v387 = vmul.f32 %v339, %v386
        %v388 = vrot.slane %v387, 4
        %v389 = vadd.f32 %v387, %v388
        %v390 = vrot.slane %v389, 2
        %v391 = vadd.f32 %v389, %v390
        %v392 = vrot.slane %v391, 1
        %v393 = vadd.f32 %v391, %v392
        %v394 = vmul.f32 %v340, %v386
        %v395 = vrot.slane %v394, 4
        %v396 = vadd.f32 %v394, %v395
        %v397 = vrot.slane %v396, 2
        %v398 = vadd.f32 %v396, %v397
        %v399 = vrot.slane %v398, 1
        %v400 = vadd.f32 %v398, %v399
        %s401 = sadd.s32 %s341, 3
        %s402 = sld [smem:[#allocation6 + %s401]]
        %v403 = vstv %s402
        %vm404 = vcmp.eq.s32.totalorder %v325, %v403
        %v405 = vsel %vm404, 1, 0
        %v406 = vcvt.s32.f32 %v405
        %v407 = vmul.f32 %v339, %v406
        %v408 = vrot.slane %v407, 4
        %v409 = vadd.f32 %v407, %v408
        %v410 = vrot.slane %v409, 2
        %v411 = vadd.f32 %v409, %v410
        %v412 = vrot.slane %v411, 1
        %v413 = vadd.f32 %v411, %v412
        %v414 = vmul.f32 %v340, %v406
        %v415 = vrot.slane %v414, 4
        %v416 = vadd.f32 %v414, %v415
        %v417 = vrot.slane %v416, 2
        %v418 = vadd.f32 %v416, %v417
        %v419 = vrot.slane %v418, 1
        %v420 = vadd.f32 %v418, %v419
        %s421 = sld [smem:[#allocation7 + %s39]]
        %p422 = scmp.gt.s32.totalorder %s421, 0
        %s423 = scalar_select %p422, 1, 0
        %s424 = scvt.s32.f32 %s423
        %v425 = vld [vmem:[%s4] sm:$0xf]
        %v426 = vstv %s424
        %v427 = vmul.f32 %v426, %v425
        %s428 = ssub.f32 1.0, %s424
        %v429 = vstv %s428
        %v430 = vmul.f32 %v429, %v353
        %v431 = vmul.f32 %v429, %v373
        %v432 = vmul.f32 %v429, %v393
        %v433 = vmul.f32 %v429, %v413
        %v438 = vcombine.low %v430, %v431
        %v439 = vcombine.low %v432, %v433
        %v441 = vunpack.c.l.s4 1966171168
        %v442 = vunpack.c.0.s8 %v441
        %v443 = vlaneseq
        %v444 = vshrl.u32 %v443, 7
        %v445 = vsub.s32 %v442, %v444
        %v446 = vrot.slane %v438, %v445
        %v448 = vunpack.c.l.s4 1966171168
        %v449 = vunpack.c.0.s8 %v448
        %v450 = vlaneseq
        %v451 = vshrl.u32 %v450, 7
        %v452 = vsub.s32 %v449, %v451
        %v453 = vrot.slane %v439, %v452
        %v454 = vcombine.low %v446, %v453
        %v456 = vunpack.c.l.s4 1966171168
        %v457 = vunpack.c.0.s8 %v456
        %v458 = vlaneseq
        %v459 = vshrl.u32 %v458, 7
        %v460 = vsub.s32 %v457, %v459
        %v461 = vrot.slane %v454, %v460
        %v463 = vadd.f32 %v427, %v461
        %v464 = vld [vmem:[%s5] sm:$0xf]
        %v465 = vmul.f32 %v426, %v464
        %v466 = vmul.f32 %v429, %v360
        %v467 = vmul.f32 %v429, %v380
        %v468 = vmul.f32 %v429, %v400
        %v469 = vmul.f32 %v429, %v420
        %v474 = vcombine.low %v466, %v467
        %v475 = vcombine.low %v468, %v469
        %v477 = vunpack.c.l.s4 1966171168
        %v478 = vunpack.c.0.s8 %v477
        %v479 = vlaneseq
        %v480 = vshrl.u32 %v479, 7
        %v481 = vsub.s32 %v478, %v480
        %v482 = vrot.slane %v474, %v481
        %v484 = vunpack.c.l.s4 1966171168
        %v485 = vunpack.c.0.s8 %v484
        %v486 = vlaneseq
        %v487 = vshrl.u32 %v486, 7
        %v488 = vsub.s32 %v485, %v487
        %v489 = vrot.slane %v475, %v488
        %v490 = vcombine.low %v482, %v489
        %v492 = vunpack.c.l.s4 1966171168
        %v493 = vunpack.c.0.s8 %v492
        %v494 = vlaneseq
        %v495 = vshrl.u32 %v494, 7
        %v496 = vsub.s32 %v493, %v495
        %v497 = vrot.slane %v490, %v496
        %v499 = vadd.f32 %v465, %v497
        %v500 = vld [vmem:[#allocation8] sm:$0xff]
        %v501 = vld [vmem:[#allocation8 + $0x8] sm:$0xff]
        %v502 = vld [vmem:[#allocation8 + $0x10] sm:$0xff]
        %v503 = vld [vmem:[#allocation8 + $0x18] sm:$0xff]
        %v504 = vld [vmem:[#allocation8 + $0x20] sm:$0xff]
        %v505 = vld [vmem:[#allocation8 + $0x28] sm:$0xff]
        %v506 = vld [vmem:[#allocation8 + $0x30] sm:$0xff]
        %v507 = vld [vmem:[#allocation8 + $0x38] sm:$0xff]
        %v508 = vld [vmem:[#allocation8 + $0x40] sm:$0xff]
        %v509 = vld [vmem:[#allocation8 + $0x48] sm:$0xff]
        %v510 = vld [vmem:[#allocation8 + $0x50] sm:$0xff]
        %v511 = vld [vmem:[#allocation8 + $0x58] sm:$0xff]
        %v512 = vld [vmem:[#allocation8 + $0x60] sm:$0xff]
        %v513 = vld [vmem:[#allocation8 + $0x68] sm:$0xff]
        %v514 = vld [vmem:[#allocation8 + $0x70] sm:$0xff]
        %v515 = vld [vmem:[#allocation8 + $0x78] sm:$0xff]
        %v516 = vld [vmem:[#allocation8 + $0x80] sm:$0xff]
        %v517 = vld [vmem:[#allocation8 + $0x88] sm:$0xff]
        %v518 = vld [vmem:[#allocation8 + $0x90] sm:$0xff]
        %v519 = vld [vmem:[#allocation8 + $0x98] sm:$0xff]
        %v520 = vld [vmem:[#allocation8 + $0xa0] sm:$0xff]
        %v521 = vld [vmem:[#allocation8 + $0xa8] sm:$0xff]
        %v522 = vld [vmem:[#allocation8 + $0xb0] sm:$0xff]
        %v523 = vld [vmem:[#allocation8 + $0xb8] sm:$0xff]
        %v524 = vld [vmem:[#allocation8 + $0xc0] sm:$0xff]
        %v525 = vld [vmem:[#allocation8 + $0xc8] sm:$0xff]
        %v526 = vld [vmem:[#allocation8 + $0xd0] sm:$0xff]
        %v527 = vld [vmem:[#allocation8 + $0xd8] sm:$0xff]
        %v528 = vld [vmem:[#allocation8 + $0xe0] sm:$0xff]
        %v529 = vld [vmem:[#allocation8 + $0xe8] sm:$0xff]
        %v530 = vld [vmem:[#allocation8 + $0xf0] sm:$0xff]
        %v531 = vld [vmem:[#allocation8 + $0xf8] sm:$0xff]
        %v532 = vld [vmem:[%s8] sm:$0xf]
        %v565 = vunpack.c.l.b16 %v500
        %v566 = vunpack.c.h.b16 %v500
        %v567 = vunpack.c.l.b16 %v501
        %v568 = vunpack.c.h.b16 %v501
        %v569 = vunpack.c.l.b16 %v502
        %v570 = vunpack.c.h.b16 %v502
        %v571 = vunpack.c.l.b16 %v503
        %v572 = vunpack.c.h.b16 %v503
        %v573 = vunpack.c.l.b16 %v504
        %v574 = vunpack.c.h.b16 %v504
        %v575 = vunpack.c.l.b16 %v505
        %v576 = vunpack.c.h.b16 %v505
        %v577 = vunpack.c.l.b16 %v506
        %v578 = vunpack.c.h.b16 %v506
        %v579 = vunpack.c.l.b16 %v507
        %v580 = vunpack.c.h.b16 %v507
        %v581 = vunpack.c.l.b16 %v508
        %v582 = vunpack.c.h.b16 %v508
        %v583 = vunpack.c.l.b16 %v509
        %v584 = vunpack.c.h.b16 %v509
        %v585 = vunpack.c.l.b16 %v510
        %v586 = vunpack.c.h.b16 %v510
        %v587 = vunpack.c.l.b16 %v511
        %v588 = vunpack.c.h.b16 %v511
        %v589 = vunpack.c.l.b16 %v512
        %v590 = vunpack.c.h.b16 %v512
        %v591 = vunpack.c.l.b16 %v513
        %v592 = vunpack.c.h.b16 %v513
        %v593 = vunpack.c.l.b16 %v514
        %v594 = vunpack.c.h.b16 %v514
        %v595 = vunpack.c.l.b16 %v515
        %v596 = vunpack.c.h.b16 %v515
        %v597 = vunpack.c.l.b16 %v516
        %v598 = vunpack.c.h.b16 %v516
        %v599 = vunpack.c.l.b16 %v517
        %v600 = vunpack.c.h.b16 %v517
        %v601 = vunpack.c.l.b16 %v518
        %v602 = vunpack.c.h.b16 %v518
        %v603 = vunpack.c.l.b16 %v519
        %v604 = vunpack.c.h.b16 %v519
        %v605 = vunpack.c.l.b16 %v520
        %v606 = vunpack.c.h.b16 %v520
        %v607 = vunpack.c.l.b16 %v521
        %v608 = vunpack.c.h.b16 %v521
        %v609 = vunpack.c.l.b16 %v522
        %v610 = vunpack.c.h.b16 %v522
        %v611 = vunpack.c.l.b16 %v523
        %v612 = vunpack.c.h.b16 %v523
        %v613 = vunpack.c.l.b16 %v524
        %v614 = vunpack.c.h.b16 %v524
        %v615 = vunpack.c.l.b16 %v525
        %v616 = vunpack.c.h.b16 %v525
        %v617 = vunpack.c.l.b16 %v526
        %v618 = vunpack.c.h.b16 %v526
        %v619 = vunpack.c.l.b16 %v527
        %v620 = vunpack.c.h.b16 %v527
        %v621 = vunpack.c.l.b16 %v528
        %v622 = vunpack.c.h.b16 %v528
        %v623 = vunpack.c.l.b16 %v529
        %v624 = vunpack.c.h.b16 %v529
        %v625 = vunpack.c.l.b16 %v530
        %v626 = vunpack.c.h.b16 %v530
        %v627 = vunpack.c.l.b16 %v531
        %v628 = vunpack.c.h.b16 %v531
        %v629 = vpack.c.b16 %v569, %v565
        %v630 = vpack.c.b16 %v570, %v566
        %v631 = vpack.c.b16 %v571, %v567
        %v632 = vpack.c.b16 %v572, %v568
        %v633 = vpack.c.b16 %v577, %v573
        %v634 = vpack.c.b16 %v578, %v574
        %v635 = vpack.c.b16 %v579, %v575
        %v636 = vpack.c.b16 %v580, %v576
        %v637 = vpack.c.b16 %v585, %v581
        %v638 = vpack.c.b16 %v586, %v582
        %v639 = vpack.c.b16 %v587, %v583
        %v640 = vpack.c.b16 %v588, %v584
        %v641 = vpack.c.b16 %v593, %v589
        %v642 = vpack.c.b16 %v594, %v590
        %v643 = vpack.c.b16 %v595, %v591
        %v644 = vpack.c.b16 %v596, %v592
        %v645 = vpack.c.b16 %v601, %v597
        %v646 = vpack.c.b16 %v602, %v598
        %v647 = vpack.c.b16 %v603, %v599
        %v648 = vpack.c.b16 %v604, %v600
        %v649 = vpack.c.b16 %v609, %v605
        %v650 = vpack.c.b16 %v610, %v606
        %v651 = vpack.c.b16 %v611, %v607
        %v652 = vpack.c.b16 %v612, %v608
        %v653 = vpack.c.b16 %v617, %v613
        %v654 = vpack.c.b16 %v618, %v614
        %v655 = vpack.c.b16 %v619, %v615
        %v656 = vpack.c.b16 %v620, %v616
        %v657 = vpack.c.b16 %v625, %v621
        %v658 = vpack.c.b16 %v626, %v622
        %v659 = vpack.c.b16 %v627, %v623
        %v660 = vpack.c.b16 %v628, %v624
        %v694 = vlaneseq
        %v695 = vshrl.u32 %v694, 7
        %v696 = vsub.s32 0, %v695
        %v697 = vrot.slane %v532, %v696
        %v698 = vlaneseq
        %v699 = vshrl.u32 %v698, 7
        %v700 = vsub.s32 1, %v699
        %v701 = vrot.slane %v532, %v700
        %v702 = vlaneseq
        %v703 = vshrl.u32 %v702, 7
        %v704 = vsub.s32 2, %v703
        %v705 = vrot.slane %v532, %v704
        %v706 = vlaneseq
        %v707 = vshrl.u32 %v706, 7
        %v708 = vsub.s32 3, %v707
        %v709 = vrot.slane %v532, %v708
        %714 = vmatprep.subr.bf16.mxu0 %v630
        %715 = vmatpush1.bf16.msra.mxu0 %v629
        %716 = vmatprep.subr.bf16.mxu0 %v634
        %717 = vmatpush1.bf16.msra.mxu0 %v633
        %718 = vmatprep.subr.bf16.mxu0 %v638
        %719 = vmatpush1.bf16.msra.mxu0 %v637
        %720 = vmatprep.subr.bf16.mxu0 %v642
        %721 = vmatpush1.bf16.msra.mxu0 %v641
        %722 = vmatprep.subr.bf16.mxu0 %v646
        %723 = vmatpush1.bf16.msra.mxu0 %v645
        %724 = vmatprep.subr.bf16.mxu0 %v650
        %725 = vmatpush1.bf16.msra.mxu0 %v649
        %726 = vmatprep.subr.bf16.mxu0 %v654
        %727 = vmatpush1.bf16.msra.mxu0 %v653
        %728 = vmatprep.subr.bf16.mxu0 %v658
        %729 = vmatpush1.bf16.msra.mxu0 %v657
        %730 = vmatprep.subr.bf16.mxu0 0
        %731 = vmatpush1.bf16.msra.mxu0 0
        %732 = vmatprep.subr.bf16.mxu0 0
        %733 = vmatpush1.bf16.msra.mxu0 0
        %734 = vmatprep.subr.bf16.mxu0 0
        %735 = vmatpush1.bf16.msra.mxu0 0
        %736 = vmatprep.subr.bf16.mxu0 0
        %737 = vmatpush1.bf16.msra.mxu0 0
        %738 = vmatprep.subr.bf16.mxu0 0
        %739 = vmatpush1.bf16.msra.mxu0 0
        %740 = vmatprep.subr.bf16.mxu0 0
        %741 = vmatpush1.bf16.msra.mxu0 0
        %742 = vmatprep.subr.bf16.mxu0 0
        %743 = vmatpush1.bf16.msra.mxu0 0
        %744 = vmatprep.subr.bf16.mxu0 0
        %745 = vmatpush1.bf16.msra.mxu0 0
        %746 = vmatprep.mubr.bf16.mxu0 0
        %747 = vmatmul.mubr.bf16.gmra.mrb[0].mxu0 %v338
        %v748 = vpop.f32.mrb[0].mxu0
        %v749 = vadd.f32 %v697, %v748
        %v750 = vpop.f32.mrb[0].mxu0
        %v751 = vadd.f32 %v701, %v750
        %v752 = vpop.f32.mrb[0].mxu0
        %v753 = vpop.f32.mrb[0].mxu0
        %754 = vdwg.mxu0
        %755 = vmatprep.subr.bf16.mxu0 %v632
        %756 = vmatpush1.bf16.msra.mxu0 %v631
        %757 = vmatprep.subr.bf16.mxu0 %v636
        %758 = vmatpush1.bf16.msra.mxu0 %v635
        %759 = vmatprep.subr.bf16.mxu0 %v640
        %760 = vmatpush1.bf16.msra.mxu0 %v639
        %761 = vmatprep.subr.bf16.mxu0 %v644
        %762 = vmatpush1.bf16.msra.mxu0 %v643
        %763 = vmatprep.subr.bf16.mxu0 %v648
        %764 = vmatpush1.bf16.msra.mxu0 %v647
        %765 = vmatprep.subr.bf16.mxu0 %v652
        %766 = vmatpush1.bf16.msra.mxu0 %v651
        %767 = vmatprep.subr.bf16.mxu0 %v656
        %768 = vmatpush1.bf16.msra.mxu0 %v655
        %769 = vmatprep.subr.bf16.mxu0 %v660
        %770 = vmatpush1.bf16.msra.mxu0 %v659
        %771 = vmatprep.subr.bf16.mxu0 0
        %772 = vmatpush1.bf16.msra.mxu0 0
        %773 = vmatprep.subr.bf16.mxu0 0
        %774 = vmatpush1.bf16.msra.mxu0 0
        %775 = vmatprep.subr.bf16.mxu0 0
        %776 = vmatpush1.bf16.msra.mxu0 0
        %777 = vmatprep.subr.bf16.mxu0 0
        %778 = vmatpush1.bf16.msra.mxu0 0
        %779 = vmatprep.subr.bf16.mxu0 0
        %780 = vmatpush1.bf16.msra.mxu0 0
        %781 = vmatprep.subr.bf16.mxu0 0
        %782 = vmatpush1.bf16.msra.mxu0 0
        %783 = vmatprep.subr.bf16.mxu0 0
        %784 = vmatpush1.bf16.msra.mxu0 0
        %785 = vmatprep.subr.bf16.mxu0 0
        %786 = vmatpush1.bf16.msra.mxu0 0
        %787 = vmatprep.mubr.bf16.mxu0 0
        %788 = vmatmul.mubr.bf16.gmra.mrb[0].mxu0 %v338
        %v789 = vpop.f32.mrb[0].mxu0
        %v790 = vadd.f32 %v705, %v789
        %v791 = vpop.f32.mrb[0].mxu0
        %v792 = vadd.f32 %v709, %v791
        %v793 = vpop.f32.mrb[0].mxu0
        %v794 = vpop.f32.mrb[0].mxu0
        %795 = vdwg.mxu0
        %v797 = vlaneseq
        %v798 = vshrl.u32 %v797, 7
        %v799 = vsub.s32 0, %v798
        %v800 = vrot.slane %v463, %v799
        %v801 = vlaneseq
        %v802 = vshrl.u32 %v801, 7
        %v803 = vsub.s32 1, %v802
        %v804 = vrot.slane %v463, %v803
        %v805 = vlaneseq
        %v806 = vshrl.u32 %v805, 7
        %v807 = vsub.s32 2, %v806
        %v808 = vrot.slane %v463, %v807
        %v809 = vlaneseq
        %v810 = vshrl.u32 %v809, 7
        %v811 = vsub.s32 3, %v810
        %v812 = vrot.slane %v463, %v811
        %v817 = vpack.c.bf16 %v800, %v800
        %v818 = vpack.c.bf16 %v804, %v804
        %v819 = vpack.c.bf16 %v808, %v808
        %v820 = vpack.c.bf16 %v812, %v812
        %v821 = vld [vmem:[#allocation10] sm:$0xff]
        %v822 = vld [vmem:[#allocation10 + $0x8] sm:$0xff]
        %v823 = vld [vmem:[#allocation10 + $0x10] sm:$0xff]
        %v824 = vld [vmem:[#allocation10 + $0x18] sm:$0xf]
        %v825 = vld [vmem:[#allocation10 + $0x1c] sm:$0xff]
        %v826 = vld [vmem:[#allocation10 + $0x24] sm:$0xff]
        %v827 = vld [vmem:[#allocation10 + $0x2c] sm:$0xff]
        %v828 = vld [vmem:[#allocation10 + $0x34] sm:$0xf]
        %v829 = vld [vmem:[#allocation10 + $0x38] sm:$0xff]
        %v830 = vld [vmem:[#allocation10 + $0x40] sm:$0xff]
        %v831 = vld [vmem:[#allocation10 + $0x48] sm:$0xff]
        %v832 = vld [vmem:[#allocation10 + $0x50] sm:$0xf]
        %v833 = vld [vmem:[#allocation10 + $0x54] sm:$0xff]
        %v834 = vld [vmem:[#allocation10 + $0x5c] sm:$0xff]
        %v835 = vld [vmem:[#allocation10 + $0x64] sm:$0xff]
        %v836 = vld [vmem:[#allocation10 + $0x6c] sm:$0xf]
        %v837 = vld [vmem:[#allocation10 + $0x70] sm:$0xff]
        %v838 = vld [vmem:[#allocation10 + $0x78] sm:$0xff]
        %v839 = vld [vmem:[#allocation10 + $0x80] sm:$0xff]
        %v840 = vld [vmem:[#allocation10 + $0x88] sm:$0xf]
        %v841 = vld [vmem:[#allocation10 + $0x8c] sm:$0xff]
        %v842 = vld [vmem:[#allocation10 + $0x94] sm:$0xff]
        %v843 = vld [vmem:[#allocation10 + $0x9c] sm:$0xff]
        %v844 = vld [vmem:[#allocation10 + $0xa4] sm:$0xf]
        %v845 = vld [vmem:[#allocation10 + $0xa8] sm:$0xff]
        %v846 = vld [vmem:[#allocation10 + $0xb0] sm:$0xff]
        %v847 = vld [vmem:[#allocation10 + $0xb8] sm:$0xff]
        %v848 = vld [vmem:[#allocation10 + $0xc0] sm:$0xf]
        %v849 = vld [vmem:[#allocation10 + $0xc4] sm:$0xff]
        %v850 = vld [vmem:[#allocation10 + $0xcc] sm:$0xff]
        %v851 = vld [vmem:[#allocation10 + $0xd4] sm:$0xff]
        %v852 = vld [vmem:[#allocation10 + $0xdc] sm:$0xf]
        %v853 = vld [vmem:[#allocation10 + $0xe0] sm:$0xff]
        %v854 = vld [vmem:[#allocation10 + $0xe8] sm:$0xff]
        %v855 = vld [vmem:[#allocation10 + $0xf0] sm:$0xff]
        %v856 = vld [vmem:[#allocation10 + $0xf8] sm:$0xf]
        %v857 = vld [vmem:[#allocation10 + $0xfc] sm:$0xff]
        %v858 = vld [vmem:[#allocation10 + $0x104] sm:$0xff]
        %v859 = vld [vmem:[#allocation10 + $0x10c] sm:$0xff]
        %v860 = vld [vmem:[#allocation10 + $0x114] sm:$0xf]
        %v861 = vld [vmem:[#allocation10 + $0x118] sm:$0xff]
        %v862 = vld [vmem:[#allocation10 + $0x120] sm:$0xff]
        %v863 = vld [vmem:[#allocation10 + $0x128] sm:$0xff]
        %v864 = vld [vmem:[#allocation10 + $0x130] sm:$0xf]
        %v865 = vld [vmem:[#allocation10 + $0x134] sm:$0xff]
        %v866 = vld [vmem:[#allocation10 + $0x13c] sm:$0xff]
        %v867 = vld [vmem:[#allocation10 + $0x144] sm:$0xff]
        %v868 = vld [vmem:[#allocation10 + $0x14c] sm:$0xf]
        %v869 = vld [vmem:[#allocation10 + $0x150] sm:$0xff]
        %v870 = vld [vmem:[#allocation10 + $0x158] sm:$0xff]
        %v871 = vld [vmem:[#allocation10 + $0x160] sm:$0xff]
        %v872 = vld [vmem:[#allocation10 + $0x168] sm:$0xf]
        %v873 = vld [vmem:[#allocation10 + $0x16c] sm:$0xff]
        %v874 = vld [vmem:[#allocation10 + $0x174] sm:$0xff]
        %v875 = vld [vmem:[#allocation10 + $0x17c] sm:$0xff]
        %v876 = vld [vmem:[#allocation10 + $0x184] sm:$0xf]
        %v877 = vld [vmem:[#allocation10 + $0x188] sm:$0xff]
        %v878 = vld [vmem:[#allocation10 + $0x190] sm:$0xff]
        %v879 = vld [vmem:[#allocation10 + $0x198] sm:$0xff]
        %v880 = vld [vmem:[#allocation10 + $0x1a0] sm:$0xf]
        %v881 = vld [vmem:[#allocation10 + $0x1a4] sm:$0xff]
        %v882 = vld [vmem:[#allocation10 + $0x1ac] sm:$0xff]
        %v883 = vld [vmem:[#allocation10 + $0x1b4] sm:$0xff]
        %v884 = vld [vmem:[#allocation10 + $0x1bc] sm:$0xf]
        %v885 = vld [vmem:[#allocation10 + $0x1c0] sm:$0xff]
        %v886 = vld [vmem:[#allocation10 + $0x1c8] sm:$0xff]
        %v887 = vld [vmem:[#allocation10 + $0x1d0] sm:$0xff]
        %v888 = vld [vmem:[#allocation10 + $0x1d8] sm:$0xf]
        %v889 = vld [vmem:[#allocation10 + $0x1dc] sm:$0xff]
        %v890 = vld [vmem:[#allocation10 + $0x1e4] sm:$0xff]
        %v891 = vld [vmem:[#allocation10 + $0x1ec] sm:$0xff]
        %v892 = vld [vmem:[#allocation10 + $0x1f4] sm:$0xf]
        %v893 = vld [vmem:[#allocation10 + $0x1f8] sm:$0xff]
        %v894 = vld [vmem:[#allocation10 + $0x200] sm:$0xff]
        %v895 = vld [vmem:[#allocation10 + $0x208] sm:$0xff]
        %v896 = vld [vmem:[#allocation10 + $0x210] sm:$0xf]
        %v897 = vld [vmem:[#allocation10 + $0x214] sm:$0xff]
        %v898 = vld [vmem:[#allocation10 + $0x21c] sm:$0xff]
        %v899 = vld [vmem:[#allocation10 + $0x224] sm:$0xff]
        %v900 = vld [vmem:[#allocation10 + $0x22c] sm:$0xf]
        %v901 = vld [vmem:[#allocation10 + $0x230] sm:$0xff]
        %v902 = vld [vmem:[#allocation10 + $0x238] sm:$0xff]
        %v903 = vld [vmem:[#allocation10 + $0x240] sm:$0xff]
        %v904 = vld [vmem:[#allocation10 + $0x248] sm:$0xf]
        %v905 = vld [vmem:[#allocation10 + $0x24c] sm:$0xff]
        %v906 = vld [vmem:[#allocation10 + $0x254] sm:$0xff]
        %v907 = vld [vmem:[#allocation10 + $0x25c] sm:$0xff]
        %v908 = vld [vmem:[#allocation10 + $0x264] sm:$0xf]
        %v909 = vld [vmem:[#allocation10 + $0x268] sm:$0xff]
        %v910 = vld [vmem:[#allocation10 + $0x270] sm:$0xff]
        %v911 = vld [vmem:[#allocation10 + $0x278] sm:$0xff]
        %v912 = vld [vmem:[#allocation10 + $0x280] sm:$0xf]
        %v913 = vld [vmem:[#allocation10 + $0x284] sm:$0xff]
        %v914 = vld [vmem:[#allocation10 + $0x28c] sm:$0xff]
        %v915 = vld [vmem:[#allocation10 + $0x294] sm:$0xff]
        %v916 = vld [vmem:[#allocation10 + $0x29c] sm:$0xf]
        %v917 = vld [vmem:[#allocation10 + $0x2a0] sm:$0xff]
        %v918 = vld [vmem:[#allocation10 + $0x2a8] sm:$0xff]
        %v919 = vld [vmem:[#allocation10 + $0x2b0] sm:$0xff]
        %v920 = vld [vmem:[#allocation10 + $0x2b8] sm:$0xf]
        %v921 = vld [vmem:[#allocation10 + $0x2bc] sm:$0xff]
        %v922 = vld [vmem:[#allocation10 + $0x2c4] sm:$0xff]
        %v923 = vld [vmem:[#allocation10 + $0x2cc] sm:$0xff]
        %v924 = vld [vmem:[#allocation10 + $0x2d4] sm:$0xf]
        %v925 = vld [vmem:[#allocation10 + $0x2d8] sm:$0xff]
        %v926 = vld [vmem:[#allocation10 + $0x2e0] sm:$0xff]
        %v927 = vld [vmem:[#allocation10 + $0x2e8] sm:$0xff]
        %v928 = vld [vmem:[#allocation10 + $0x2f0] sm:$0xf]
        %v929 = vld [vmem:[#allocation10 + $0x2f4] sm:$0xff]
        %v930 = vld [vmem:[#allocation10 + $0x2fc] sm:$0xff]
        %v931 = vld [vmem:[#allocation10 + $0x304] sm:$0xff]
        %v932 = vld [vmem:[#allocation10 + $0x30c] sm:$0xf]
        %v933 = vld [vmem:[#allocation10 + $0x310] sm:$0xff]
        %v934 = vld [vmem:[#allocation10 + $0x318] sm:$0xff]
        %v935 = vld [vmem:[#allocation10 + $0x320] sm:$0xff]
        %v936 = vld [vmem:[#allocation10 + $0x328] sm:$0xf]
        %v937 = vld [vmem:[#allocation10 + $0x32c] sm:$0xff]
        %v938 = vld [vmem:[#allocation10 + $0x334] sm:$0xff]
        %v939 = vld [vmem:[#allocation10 + $0x33c] sm:$0xff]
        %v940 = vld [vmem:[#allocation10 + $0x344] sm:$0xf]
        %v941 = vld [vmem:[#allocation10 + $0x348] sm:$0xff]
        %v942 = vld [vmem:[#allocation10 + $0x350] sm:$0xff]
        %v943 = vld [vmem:[#allocation10 + $0x358] sm:$0xff]
        %v944 = vld [vmem:[#allocation10 + $0x360] sm:$0xf]
        %v945 = vld [vmem:[#allocation10 + $0x364] sm:$0xff]
        %v946 = vld [vmem:[#allocation10 + $0x36c] sm:$0xff]
        %v947 = vld [vmem:[#allocation10 + $0x374] sm:$0xff]
        %v948 = vld [vmem:[#allocation10 + $0x37c] sm:$0xf]
        %v949 = vld [vmem:[#allocation10 + $0x380] sm:$0xff]
        %v950 = vld [vmem:[#allocation10 + $0x388] sm:$0xff]
        %v951 = vld [vmem:[#allocation10 + $0x390] sm:$0xff]
        %v952 = vld [vmem:[#allocation10 + $0x398] sm:$0xf]
        %v953 = vld [vmem:[#allocation10 + $0x39c] sm:$0xff]
        %v954 = vld [vmem:[#allocation10 + $0x3a4] sm:$0xff]
        %v955 = vld [vmem:[#allocation10 + $0x3ac] sm:$0xff]
        %v956 = vld [vmem:[#allocation10 + $0x3b4] sm:$0xf]
        %v957 = vld [vmem:[#allocation10 + $0x3b8] sm:$0xff]
        %v958 = vld [vmem:[#allocation10 + $0x3c0] sm:$0xff]
        %v959 = vld [vmem:[#allocation10 + $0x3c8] sm:$0xff]
        %v960 = vld [vmem:[#allocation10 + $0x3d0] sm:$0xf]
        %v961 = vld [vmem:[#allocation10 + $0x3d4] sm:$0xff]
        %v962 = vld [vmem:[#allocation10 + $0x3dc] sm:$0xff]
        %v963 = vld [vmem:[#allocation10 + $0x3e4] sm:$0xff]
        %v964 = vld [vmem:[#allocation10 + $0x3ec] sm:$0xf]
        %v965 = vld [vmem:[#allocation10 + $0x3f0] sm:$0xff]
        %v966 = vld [vmem:[#allocation10 + $0x3f8] sm:$0xff]
        %v967 = vld [vmem:[#allocation10 + $0x400] sm:$0xff]
        %v968 = vld [vmem:[#allocation10 + $0x408] sm:$0xf]
        %v969 = vld [vmem:[#allocation10 + $0x40c] sm:$0xff]
        %v970 = vld [vmem:[#allocation10 + $0x414] sm:$0xff]
        %v971 = vld [vmem:[#allocation10 + $0x41c] sm:$0xff]
        %v972 = vld [vmem:[#allocation10 + $0x424] sm:$0xf]
        %v973 = vld [vmem:[#allocation10 + $0x428] sm:$0xff]
        %v974 = vld [vmem:[#allocation10 + $0x430] sm:$0xff]
        %v975 = vld [vmem:[#allocation10 + $0x438] sm:$0xff]
        %v976 = vld [vmem:[#allocation10 + $0x440] sm:$0xf]
        %v977 = vld [vmem:[#allocation10 + $0x444] sm:$0xff]
        %v978 = vld [vmem:[#allocation10 + $0x44c] sm:$0xff]
        %v979 = vld [vmem:[#allocation10 + $0x454] sm:$0xff]
        %v980 = vld [vmem:[#allocation10 + $0x45c] sm:$0xf]
        %v981 = vld [vmem:[#allocation10 + $0x460] sm:$0xff]
        %v982 = vld [vmem:[#allocation10 + $0x468] sm:$0xff]
        %v983 = vld [vmem:[#allocation10 + $0x470] sm:$0xff]
        %v984 = vld [vmem:[#allocation10 + $0x478] sm:$0xf]
        %v985 = vld [vmem:[#allocation10 + $0x47c] sm:$0xff]
        %v986 = vld [vmem:[#allocation10 + $0x484] sm:$0xff]
        %v987 = vld [vmem:[#allocation10 + $0x48c] sm:$0xff]
        %v988 = vld [vmem:[#allocation10 + $0x494] sm:$0xf]
        %v989 = vld [vmem:[#allocation10 + $0x498] sm:$0xff]
        %v990 = vld [vmem:[#allocation10 + $0x4a0] sm:$0xff]
        %v991 = vld [vmem:[#allocation10 + $0x4a8] sm:$0xff]
        %v992 = vld [vmem:[#allocation10 + $0x4b0] sm:$0xf]
        %v993 = vld [vmem:[#allocation10 + $0x4b4] sm:$0xff]
        %v994 = vld [vmem:[#allocation10 + $0x4bc] sm:$0xff]
        %v995 = vld [vmem:[#allocation10 + $0x4c4] sm:$0xff]
        %v996 = vld [vmem:[#allocation10 + $0x4cc] sm:$0xf]
        %v997 = vld [vmem:[#allocation10 + $0x4d0] sm:$0xff]
        %v998 = vld [vmem:[#allocation10 + $0x4d8] sm:$0xff]
        %v999 = vld [vmem:[#allocation10 + $0x4e0] sm:$0xff]
        %v1000 = vld [vmem:[#allocation10 + $0x4e8] sm:$0xf]
        %v1001 = vld [vmem:[#allocation10 + $0x4ec] sm:$0xff]
        %v1002 = vld [vmem:[#allocation10 + $0x4f4] sm:$0xff]
        %v1003 = vld [vmem:[#allocation10 + $0x4fc] sm:$0xff]
        %v1004 = vld [vmem:[#allocation10 + $0x504] sm:$0xf]
        %v1005 = vld [vmem:[#allocation10 + $0x508] sm:$0xff]
        %v1006 = vld [vmem:[#allocation10 + $0x510] sm:$0xff]
        %v1007 = vld [vmem:[#allocation10 + $0x518] sm:$0xff]
        %v1008 = vld [vmem:[#allocation10 + $0x520] sm:$0xf]
        %v1009 = vld [vmem:[#allocation10 + $0x524] sm:$0xff]
        %v1010 = vld [vmem:[#allocation10 + $0x52c] sm:$0xff]
        %v1011 = vld [vmem:[#allocation10 + $0x534] sm:$0xff]
        %v1012 = vld [vmem:[#allocation10 + $0x53c] sm:$0xf]
        %v1013 = vld [vmem:[#allocation10 + $0x540] sm:$0xff]
        %v1014 = vld [vmem:[#allocation10 + $0x548] sm:$0xff]
        %v1015 = vld [vmem:[#allocation10 + $0x550] sm:$0xff]
        %v1016 = vld [vmem:[#allocation10 + $0x558] sm:$0xf]
        %v1017 = vld [vmem:[#allocation10 + $0x55c] sm:$0xff]
        %v1018 = vld [vmem:[#allocation10 + $0x564] sm:$0xff]
        %v1019 = vld [vmem:[#allocation10 + $0x56c] sm:$0xff]
        %v1020 = vld [vmem:[#allocation10 + $0x574] sm:$0xf]
        %v1021 = vld [vmem:[#allocation10 + $0x578] sm:$0xff]
        %v1022 = vld [vmem:[#allocation10 + $0x580] sm:$0xff]
        %v1023 = vld [vmem:[#allocation10 + $0x588] sm:$0xff]
        %v1024 = vld [vmem:[#allocation10 + $0x590] sm:$0xf]
        %v1025 = vld [vmem:[#allocation10 + $0x594] sm:$0xff]
        %v1026 = vld [vmem:[#allocation10 + $0x59c] sm:$0xff]
        %v1027 = vld [vmem:[#allocation10 + $0x5a4] sm:$0xff]
        %v1028 = vld [vmem:[#allocation10 + $0x5ac] sm:$0xf]
        %v1029 = vld [vmem:[#allocation10 + $0x5b0] sm:$0xff]
        %v1030 = vld [vmem:[#allocation10 + $0x5b8] sm:$0xff]
        %v1031 = vld [vmem:[#allocation10 + $0x5c0] sm:$0xff]
        %v1032 = vld [vmem:[#allocation10 + $0x5c8] sm:$0xf]
        %v1033 = vld [vmem:[#allocation10 + $0x5cc] sm:$0xff]
        %v1034 = vld [vmem:[#allocation10 + $0x5d4] sm:$0xff]
        %v1035 = vld [vmem:[#allocation10 + $0x5dc] sm:$0xff]
        %v1036 = vld [vmem:[#allocation10 + $0x5e4] sm:$0xf]
        %v1037 = vld [vmem:[#allocation10 + $0x5e8] sm:$0xff]
        %v1038 = vld [vmem:[#allocation10 + $0x5f0] sm:$0xff]
        %v1039 = vld [vmem:[#allocation10 + $0x5f8] sm:$0xff]
        %v1040 = vld [vmem:[#allocation10 + $0x600] sm:$0xf]
        %v1041 = vld [vmem:[#allocation10 + $0x604] sm:$0xff]
        %v1042 = vld [vmem:[#allocation10 + $0x60c] sm:$0xff]
        %v1043 = vld [vmem:[#allocation10 + $0x614] sm:$0xff]
        %v1044 = vld [vmem:[#allocation10 + $0x61c] sm:$0xf]
        %v1045 = vld [vmem:[#allocation10 + $0x620] sm:$0xff]
        %v1046 = vld [vmem:[#allocation10 + $0x628] sm:$0xff]
        %v1047 = vld [vmem:[#allocation10 + $0x630] sm:$0xff]
        %v1048 = vld [vmem:[#allocation10 + $0x638] sm:$0xf]
        %v1049 = vld [vmem:[#allocation10 + $0x63c] sm:$0xff]
        %v1050 = vld [vmem:[#allocation10 + $0x644] sm:$0xff]
        %v1051 = vld [vmem:[#allocation10 + $0x64c] sm:$0xff]
        %v1052 = vld [vmem:[#allocation10 + $0x654] sm:$0xf]
        %v1053 = vld [vmem:[#allocation10 + $0x658] sm:$0xff]
        %v1054 = vld [vmem:[#allocation10 + $0x660] sm:$0xff]
        %v1055 = vld [vmem:[#allocation10 + $0x668] sm:$0xff]
        %v1056 = vld [vmem:[#allocation10 + $0x670] sm:$0xf]
        %v1057 = vld [vmem:[#allocation10 + $0x674] sm:$0xff]
        %v1058 = vld [vmem:[#allocation10 + $0x67c] sm:$0xff]
        %v1059 = vld [vmem:[#allocation10 + $0x684] sm:$0xff]
        %v1060 = vld [vmem:[#allocation10 + $0x68c] sm:$0xf]
        %v1061 = vld [vmem:[#allocation10 + $0x690] sm:$0xff]
        %v1062 = vld [vmem:[#allocation10 + $0x698] sm:$0xff]
        %v1063 = vld [vmem:[#allocation10 + $0x6a0] sm:$0xff]
        %v1064 = vld [vmem:[#allocation10 + $0x6a8] sm:$0xf]
        %v1065 = vld [vmem:[#allocation10 + $0x6ac] sm:$0xff]
        %v1066 = vld [vmem:[#allocation10 + $0x6b4] sm:$0xff]
        %v1067 = vld [vmem:[#allocation10 + $0x6bc] sm:$0xff]
        %v1068 = vld [vmem:[#allocation10 + $0x6c4] sm:$0xf]
        %v1069 = vld [vmem:[#allocation10 + $0x6c8] sm:$0xff]
        %v1070 = vld [vmem:[#allocation10 + $0x6d0] sm:$0xff]
        %v1071 = vld [vmem:[#allocation10 + $0x6d8] sm:$0xff]
        %v1072 = vld [vmem:[#allocation10 + $0x6e0] sm:$0xf]
        %v1073 = vld [vmem:[#allocation10 + $0x6e4] sm:$0xff]
        %v1074 = vld [vmem:[#allocation10 + $0x6ec] sm:$0xff]
        %v1075 = vld [vmem:[#allocation10 + $0x6f4] sm:$0xff]
        %v1076 = vld [vmem:[#allocation10 + $0x6fc] sm:$0xf]
        %v1077 = vld [vmem:[%s9] sm:$0xff]
        %v1334 = vunpack.c.l.b16 %v821
        %v1335 = vunpack.c.h.b16 %v821
        %v1336 = vunpack.c.l.b16 %v822
        %v1337 = vunpack.c.h.b16 %v822
        %v1338 = vunpack.c.l.b16 %v823
        %v1339 = vunpack.c.h.b16 %v823
        %v1340 = vunpack.c.l.b16 %v824
        %v1341 = vunpack.c.l.b16 %v825
        %v1342 = vunpack.c.h.b16 %v825
        %v1343 = vunpack.c.l.b16 %v826
        %v1344 = vunpack.c.h.b16 %v826
        %v1345 = vunpack.c.l.b16 %v827
        %v1346 = vunpack.c.h.b16 %v827
        %v1347 = vunpack.c.l.b16 %v828
        %v1348 = vunpack.c.l.b16 %v829
        %v1349 = vunpack.c.h.b16 %v829
        %v1350 = vunpack.c.l.b16 %v830
        %v1351 = vunpack.c.h.b16 %v830
        %v1352 = vunpack.c.l.b16 %v831
        %v1353 = vunpack.c.h.b16 %v831
        %v1354 = vunpack.c.l.b16 %v832
        %v1355 = vunpack.c.l.b16 %v833
        %v1356 = vunpack.c.h.b16 %v833
        %v1357 = vunpack.c.l.b16 %v834
        %v1358 = vunpack.c.h.b16 %v834
        %v1359 = vunpack.c.l.b16 %v835
        %v1360 = vunpack.c.h.b16 %v835
        %v1361 = vunpack.c.l.b16 %v836
        %v1362 = vunpack.c.l.b16 %v837
        %v1363 = vunpack.c.h.b16 %v837
        %v1364 = vunpack.c.l.b16 %v838
        %v1365 = vunpack.c.h.b16 %v838
        %v1366 = vunpack.c.l.b16 %v839
        %v1367 = vunpack.c.h.b16 %v839
        %v1368 = vunpack.c.l.b16 %v840
        %v1369 = vunpack.c.l.b16 %v841
        %v1370 = vunpack.c.h.b16 %v841
        %v1371 = vunpack.c.l.b16 %v842
        %v1372 = vunpack.c.h.b16 %v842
        %v1373 = vunpack.c.l.b16 %v843
        %v1374 = vunpack.c.h.b16 %v843
        %v1375 = vunpack.c.l.b16 %v844
        %v1376 = vunpack.c.l.b16 %v845
        %v1377 = vunpack.c.h.b16 %v845
        %v1378 = vunpack.c.l.b16 %v846
        %v1379 = vunpack.c.h.b16 %v846
        %v1380 = vunpack.c.l.b16 %v847
        %v1381 = vunpack.c.h.b16 %v847
        %v1382 = vunpack.c.l.b16 %v848
        %v1383 = vunpack.c.l.b16 %v849
        %v1384 = vunpack.c.h.b16 %v849
        %v1385 = vunpack.c.l.b16 %v850
        %v1386 = vunpack.c.h.b16 %v850
        %v1387 = vunpack.c.l.b16 %v851
        %v1388 = vunpack.c.h.b16 %v851
        %v1389 = vunpack.c.l.b16 %v852
        %v1390 = vunpack.c.l.b16 %v853
        %v1391 = vunpack.c.h.b16 %v853
        %v1392 = vunpack.c.l.b16 %v854
        %v1393 = vunpack.c.h.b16 %v854
        %v1394 = vunpack.c.l.b16 %v855
        %v1395 = vunpack.c.h.b16 %v855
        %v1396 = vunpack.c.l.b16 %v856
        %v1397 = vunpack.c.l.b16 %v857
        %v1398 = vunpack.c.h.b16 %v857
        %v1399 = vunpack.c.l.b16 %v858
        %v1400 = vunpack.c.h.b16 %v858
        %v1401 = vunpack.c.l.b16 %v859
        %v1402 = vunpack.c.h.b16 %v859
        %v1403 = vunpack.c.l.b16 %v860
        %v1404 = vunpack.c.l.b16 %v861
        %v1405 = vunpack.c.h.b16 %v861
        %v1406 = vunpack.c.l.b16 %v862
        %v1407 = vunpack.c.h.b16 %v862
        %v1408 = vunpack.c.l.b16 %v863
        %v1409 = vunpack.c.h.b16 %v863
        %v1410 = vunpack.c.l.b16 %v864
        %v1411 = vunpack.c.l.b16 %v865
        %v1412 = vunpack.c.h.b16 %v865
        %v1413 = vunpack.c.l.b16 %v866
        %v1414 = vunpack.c.h.b16 %v866
        %v1415 = vunpack.c.l.b16 %v867
        %v1416 = vunpack.c.h.b16 %v867
        %v1417 = vunpack.c.l.b16 %v868
        %v1418 = vunpack.c.l.b16 %v869
        %v1419 = vunpack.c.h.b16 %v869
        %v1420 = vunpack.c.l.b16 %v870
        %v1421 = vunpack.c.h.b16 %v870
        %v1422 = vunpack.c.l.b16 %v871
        %v1423 = vunpack.c.h.b16 %v871
        %v1424 = vunpack.c.l.b16 %v872
        %v1425 = vunpack.c.l.b16 %v873
        %v1426 = vunpack.c.h.b16 %v873
        %v1427 = vunpack.c.l.b16 %v874
        %v1428 = vunpack.c.h.b16 %v874
        %v1429 = vunpack.c.l.b16 %v875
        %v1430 = vunpack.c.h.b16 %v875
        %v1431 = vunpack.c.l.b16 %v876
        %v1432 = vunpack.c.l.b16 %v877
        %v1433 = vunpack.c.h.b16 %v877
        %v1434 = vunpack.c.l.b16 %v878
        %v1435 = vunpack.c.h.b16 %v878
        %v1436 = vunpack.c.l.b16 %v879
        %v1437 = vunpack.c.h.b16 %v879
        %v1438 = vunpack.c.l.b16 %v880
        %v1439 = vunpack.c.l.b16 %v881
        %v1440 = vunpack.c.h.b16 %v881
        %v1441 = vunpack.c.l.b16 %v882
        %v1442 = vunpack.c.h.b16 %v882
        %v1443 = vunpack.c.l.b16 %v883
        %v1444 = vunpack.c.h.b16 %v883
        %v1445 = vunpack.c.l.b16 %v884
        %v1446 = vunpack.c.l.b16 %v885
        %v1447 = vunpack.c.h.b16 %v885
        %v1448 = vunpack.c.l.b16 %v886
        %v1449 = vunpack.c.h.b16 %v886
        %v1450 = vunpack.c.l.b16 %v887
        %v1451 = vunpack.c.h.b16 %v887
        %v1452 = vunpack.c.l.b16 %v888
        %v1453 = vunpack.c.l.b16 %v889
        %v1454 = vunpack.c.h.b16 %v889
        %v1455 = vunpack.c.l.b16 %v890
        %v1456 = vunpack.c.h.b16 %v890
        %v1457 = vunpack.c.l.b16 %v891
        %v1458 = vunpack.c.h.b16 %v891
        %v1459 = vunpack.c.l.b16 %v892
        %v1460 = vunpack.c.l.b16 %v893
        %v1461 = vunpack.c.h.b16 %v893
        %v1462 = vunpack.c.l.b16 %v894
        %v1463 = vunpack.c.h.b16 %v894
        %v1464 = vunpack.c.l.b16 %v895
        %v1465 = vunpack.c.h.b16 %v895
        %v1466 = vunpack.c.l.b16 %v896
        %v1467 = vunpack.c.l.b16 %v897
        %v1468 = vunpack.c.h.b16 %v897
        %v1469 = vunpack.c.l.b16 %v898
        %v1470 = vunpack.c.h.b16 %v898
        %v1471 = vunpack.c.l.b16 %v899
        %v1472 = vunpack.c.h.b16 %v899
        %v1473 = vunpack.c.l.b16 %v900
        %v1474 = vunpack.c.l.b16 %v901
        %v1475 = vunpack.c.h.b16 %v901
        %v1476 = vunpack.c.l.b16 %v902
        %v1477 = vunpack.c.h.b16 %v902
        %v1478 = vunpack.c.l.b16 %v903
        %v1479 = vunpack.c.h.b16 %v903
        %v1480 = vunpack.c.l.b16 %v904
        %v1481 = vunpack.c.l.b16 %v905
        %v1482 = vunpack.c.h.b16 %v905
        %v1483 = vunpack.c.l.b16 %v906
        %v1484 = vunpack.c.h.b16 %v906
        %v1485 = vunpack.c.l.b16 %v907
        %v1486 = vunpack.c.h.b16 %v907
        %v1487 = vunpack.c.l.b16 %v908
        %v1488 = vunpack.c.l.b16 %v909
        %v1489 = vunpack.c.h.b16 %v909
        %v1490 = vunpack.c.l.b16 %v910
        %v1491 = vunpack.c.h.b16 %v910
        %v1492 = vunpack.c.l.b16 %v911
        %v1493 = vunpack.c.h.b16 %v911
        %v1494 = vunpack.c.l.b16 %v912
        %v1495 = vunpack.c.l.b16 %v913
        %v1496 = vunpack.c.h.b16 %v913
        %v1497 = vunpack.c.l.b16 %v914
        %v1498 = vunpack.c.h.b16 %v914
        %v1499 = vunpack.c.l.b16 %v915
        %v1500 = vunpack.c.h.b16 %v915
        %v1501 = vunpack.c.l.b16 %v916
        %v1502 = vunpack.c.l.b16 %v917
        %v1503 = vunpack.c.h.b16 %v917
        %v1504 = vunpack.c.l.b16 %v918
        %v1505 = vunpack.c.h.b16 %v918
        %v1506 = vunpack.c.l.b16 %v919
        %v1507 = vunpack.c.h.b16 %v919
        %v1508 = vunpack.c.l.b16 %v920
        %v1509 = vunpack.c.l.b16 %v921
        %v1510 = vunpack.c.h.b16 %v921
        %v1511 = vunpack.c.l.b16 %v922
        %v1512 = vunpack.c.h.b16 %v922
        %v1513 = vunpack.c.l.b16 %v923
        %v1514 = vunpack.c.h.b16 %v923
        %v1515 = vunpack.c.l.b16 %v924
        %v1516 = vunpack.c.l.b16 %v925
        %v1517 = vunpack.c.h.b16 %v925
        %v1518 = vunpack.c.l.b16 %v926
        %v1519 = vunpack.c.h.b16 %v926
        %v1520 = vunpack.c.l.b16 %v927
        %v1521 = vunpack.c.h.b16 %v927
        %v1522 = vunpack.c.l.b16 %v928
        %v1523 = vunpack.c.l.b16 %v929
        %v1524 = vunpack.c.h.b16 %v929
        %v1525 = vunpack.c.l.b16 %v930
        %v1526 = vunpack.c.h.b16 %v930
        %v1527 = vunpack.c.l.b16 %v931
        %v1528 = vunpack.c.h.b16 %v931
        %v1529 = vunpack.c.l.b16 %v932
        %v1530 = vunpack.c.l.b16 %v933
        %v1531 = vunpack.c.h.b16 %v933
        %v1532 = vunpack.c.l.b16 %v934
        %v1533 = vunpack.c.h.b16 %v934
        %v1534 = vunpack.c.l.b16 %v935
        %v1535 = vunpack.c.h.b16 %v935
        %v1536 = vunpack.c.l.b16 %v936
        %v1537 = vunpack.c.l.b16 %v937
        %v1538 = vunpack.c.h.b16 %v937
        %v1539 = vunpack.c.l.b16 %v938
        %v1540 = vunpack.c.h.b16 %v938
        %v1541 = vunpack.c.l.b16 %v939
        %v1542 = vunpack.c.h.b16 %v939
        %v1543 = vunpack.c.l.b16 %v940
        %v1544 = vunpack.c.l.b16 %v941
        %v1545 = vunpack.c.h.b16 %v941
        %v1546 = vunpack.c.l.b16 %v942
        %v1547 = vunpack.c.h.b16 %v942
        %v1548 = vunpack.c.l.b16 %v943
        %v1549 = vunpack.c.h.b16 %v943
        %v1550 = vunpack.c.l.b16 %v944
        %v1551 = vunpack.c.l.b16 %v945
        %v1552 = vunpack.c.h.b16 %v945
        %v1553 = vunpack.c.l.b16 %v946
        %v1554 = vunpack.c.h.b16 %v946
        %v1555 = vunpack.c.l.b16 %v947
        %v1556 = vunpack.c.h.b16 %v947
        %v1557 = vunpack.c.l.b16 %v948
        %v1558 = vunpack.c.l.b16 %v949
        %v1559 = vunpack.c.h.b16 %v949
        %v1560 = vunpack.c.l.b16 %v950
        %v1561 = vunpack.c.h.b16 %v950
        %v1562 = vunpack.c.l.b16 %v951
        %v1563 = vunpack.c.h.b16 %v951
        %v1564 = vunpack.c.l.b16 %v952
        %v1565 = vunpack.c.l.b16 %v953
        %v1566 = vunpack.c.h.b16 %v953
        %v1567 = vunpack.c.l.b16 %v954
        %v1568 = vunpack.c.h.b16 %v954
        %v1569 = vunpack.c.l.b16 %v955
        %v1570 = vunpack.c.h.b16 %v955
        %v1571 = vunpack.c.l.b16 %v956
        %v1572 = vunpack.c.l.b16 %v957
        %v1573 = vunpack.c.h.b16 %v957
        %v1574 = vunpack.c.l.b16 %v958
        %v1575 = vunpack.c.h.b16 %v958
        %v1576 = vunpack.c.l.b16 %v959
        %v1577 = vunpack.c.h.b16 %v959
        %v1578 = vunpack.c.l.b16 %v960
        %v1579 = vunpack.c.l.b16 %v961
        %v1580 = vunpack.c.h.b16 %v961
        %v1581 = vunpack.c.l.b16 %v962
        %v1582 = vunpack.c.h.b16 %v962
        %v1583 = vunpack.c.l.b16 %v963
        %v1584 = vunpack.c.h.b16 %v963
        %v1585 = vunpack.c.l.b16 %v964
        %v1586 = vunpack.c.l.b16 %v965
        %v1587 = vunpack.c.h.b16 %v965
        %v1588 = vunpack.c.l.b16 %v966
        %v1589 = vunpack.c.h.b16 %v966
        %v1590 = vunpack.c.l.b16 %v967
        %v1591 = vunpack.c.h.b16 %v967
        %v1592 = vunpack.c.l.b16 %v968
        %v1593 = vunpack.c.l.b16 %v969
        %v1594 = vunpack.c.h.b16 %v969
        %v1595 = vunpack.c.l.b16 %v970
        %v1596 = vunpack.c.h.b16 %v970
        %v1597 = vunpack.c.l.b16 %v971
        %v1598 = vunpack.c.h.b16 %v971
        %v1599 = vunpack.c.l.b16 %v972
        %v1600 = vunpack.c.l.b16 %v973
        %v1601 = vunpack.c.h.b16 %v973
        %v1602 = vunpack.c.l.b16 %v974
        %v1603 = vunpack.c.h.b16 %v974
        %v1604 = vunpack.c.l.b16 %v975
        %v1605 = vunpack.c.h.b16 %v975
        %v1606 = vunpack.c.l.b16 %v976
        %v1607 = vunpack.c.l.b16 %v977
        %v1608 = vunpack.c.h.b16 %v977
        %v1609 = vunpack.c.l.b16 %v978
        %v1610 = vunpack.c.h.b16 %v978
        %v1611 = vunpack.c.l.b16 %v979
        %v1612 = vunpack.c.h.b16 %v979
        %v1613 = vunpack.c.l.b16 %v980
        %v1614 = vunpack.c.l.b16 %v981
        %v1615 = vunpack.c.h.b16 %v981
        %v1616 = vunpack.c.l.b16 %v982
        %v1617 = vunpack.c.h.b16 %v982
        %v1618 = vunpack.c.l.b16 %v983
        %v1619 = vunpack.c.h.b16 %v983
        %v1620 = vunpack.c.l.b16 %v984
        %v1621 = vunpack.c.l.b16 %v985
        %v1622 = vunpack.c.h.b16 %v985
        %v1623 = vunpack.c.l.b16 %v986
        %v1624 = vunpack.c.h.b16 %v986
        %v1625 = vunpack.c.l.b16 %v987
        %v1626 = vunpack.c.h.b16 %v987
        %v1627 = vunpack.c.l.b16 %v988
        %v1628 = vunpack.c.l.b16 %v989
        %v1629 = vunpack.c.h.b16 %v989
        %v1630 = vunpack.c.l.b16 %v990
        %v1631 = vunpack.c.h.b16 %v990
        %v1632 = vunpack.c.l.b16 %v991
        %v1633 = vunpack.c.h.b16 %v991
        %v1634 = vunpack.c.l.b16 %v992
        %v1635 = vunpack.c.l.b16 %v993
        %v1636 = vunpack.c.h.b16 %v993
        %v1637 = vunpack.c.l.b16 %v994
        %v1638 = vunpack.c.h.b16 %v994
        %v1639 = vunpack.c.l.b16 %v995
        %v1640 = vunpack.c.h.b16 %v995
        %v1641 = vunpack.c.l.b16 %v996
        %v1642 = vunpack.c.l.b16 %v997
        %v1643 = vunpack.c.h.b16 %v997
        %v1644 = vunpack.c.l.b16 %v998
        %v1645 = vunpack.c.h.b16 %v998
        %v1646 = vunpack.c.l.b16 %v999
        %v1647 = vunpack.c.h.b16 %v999
        %v1648 = vunpack.c.l.b16 %v1000
        %v1649 = vunpack.c.l.b16 %v1001
        %v1650 = vunpack.c.h.b16 %v1001
        %v1651 = vunpack.c.l.b16 %v1002
        %v1652 = vunpack.c.h.b16 %v1002
        %v1653 = vunpack.c.l.b16 %v1003
        %v1654 = vunpack.c.h.b16 %v1003
        %v1655 = vunpack.c.l.b16 %v1004
        %v1656 = vunpack.c.l.b16 %v1005
        %v1657 = vunpack.c.h.b16 %v1005
        %v1658 = vunpack.c.l.b16 %v1006
        %v1659 = vunpack.c.h.b16 %v1006
        %v1660 = vunpack.c.l.b16 %v1007
        %v1661 = vunpack.c.h.b16 %v1007
        %v1662 = vunpack.c.l.b16 %v1008
        %v1663 = vunpack.c.l.b16 %v1009
        %v1664 = vunpack.c.h.b16 %v1009
        %v1665 = vunpack.c.l.b16 %v1010
        %v1666 = vunpack.c.h.b16 %v1010
        %v1667 = vunpack.c.l.b16 %v1011
        %v1668 = vunpack.c.h.b16 %v1011
        %v1669 = vunpack.c.l.b16 %v1012
        %v1670 = vunpack.c.l.b16 %v1013
        %v1671 = vunpack.c.h.b16 %v1013
        %v1672 = vunpack.c.l.b16 %v1014
        %v1673 = vunpack.c.h.b16 %v1014
        %v1674 = vunpack.c.l.b16 %v1015
        %v1675 = vunpack.c.h.b16 %v1015
        %v1676 = vunpack.c.l.b16 %v1016
        %v1677 = vunpack.c.l.b16 %v1017
        %v1678 = vunpack.c.h.b16 %v1017
        %v1679 = vunpack.c.l.b16 %v1018
        %v1680 = vunpack.c.h.b16 %v1018
        %v1681 = vunpack.c.l.b16 %v1019
        %v1682 = vunpack.c.h.b16 %v1019
        %v1683 = vunpack.c.l.b16 %v1020
        %v1684 = vunpack.c.l.b16 %v1021
        %v1685 = vunpack.c.h.b16 %v1021
        %v1686 = vunpack.c.l.b16 %v1022
        %v1687 = vunpack.c.h.b16 %v1022
        %v1688 = vunpack.c.l.b16 %v1023
        %v1689 = vunpack.c.h.b16 %v1023
        %v1690 = vunpack.c.l.b16 %v1024
        %v1691 = vunpack.c.l.b16 %v1025
        %v1692 = vunpack.c.h.b16 %v1025
        %v1693 = vunpack.c.l.b16 %v1026
        %v1694 = vunpack.c.h.b16 %v1026
        %v1695 = vunpack.c.l.b16 %v1027
        %v1696 = vunpack.c.h.b16 %v1027
        %v1697 = vunpack.c.l.b16 %v1028
        %v1698 = vunpack.c.l.b16 %v1029
        %v1699 = vunpack.c.h.b16 %v1029
        %v1700 = vunpack.c.l.b16 %v1030
        %v1701 = vunpack.c.h.b16 %v1030
        %v1702 = vunpack.c.l.b16 %v1031
        %v1703 = vunpack.c.h.b16 %v1031
        %v1704 = vunpack.c.l.b16 %v1032
        %v1705 = vunpack.c.l.b16 %v1033
        %v1706 = vunpack.c.h.b16 %v1033
        %v1707 = vunpack.c.l.b16 %v1034
        %v1708 = vunpack.c.h.b16 %v1034
        %v1709 = vunpack.c.l.b16 %v1035
        %v1710 = vunpack.c.h.b16 %v1035
        %v1711 = vunpack.c.l.b16 %v1036
        %v1712 = vunpack.c.l.b16 %v1037
        %v1713 = vunpack.c.h.b16 %v1037
        %v1714 = vunpack.c.l.b16 %v1038
        %v1715 = vunpack.c.h.b16 %v1038
        %v1716 = vunpack.c.l.b16 %v1039
        %v1717 = vunpack.c.h.b16 %v1039
        %v1718 = vunpack.c.l.b16 %v1040
        %v1719 = vunpack.c.l.b16 %v1041
        %v1720 = vunpack.c.h.b16 %v1041
        %v1721 = vunpack.c.l.b16 %v1042
        %v1722 = vunpack.c.h.b16 %v1042
        %v1723 = vunpack.c.l.b16 %v1043
        %v1724 = vunpack.c.h.b16 %v1043
        %v1725 = vunpack.c.l.b16 %v1044
        %v1726 = vunpack.c.l.b16 %v1045
        %v1727 = vunpack.c.h.b16 %v1045
        %v1728 = vunpack.c.l.b16 %v1046
        %v1729 = vunpack.c.h.b16 %v1046
        %v1730 = vunpack.c.l.b16 %v1047
        %v1731 = vunpack.c.h.b16 %v1047
        %v1732 = vunpack.c.l.b16 %v1048
        %v1733 = vunpack.c.l.b16 %v1049
        %v1734 = vunpack.c.h.b16 %v1049
        %v1735 = vunpack.c.l.b16 %v1050
        %v1736 = vunpack.c.h.b16 %v1050
        %v1737 = vunpack.c.l.b16 %v1051
        %v1738 = vunpack.c.h.b16 %v1051
        %v1739 = vunpack.c.l.b16 %v1052
        %v1740 = vunpack.c.l.b16 %v1053
        %v1741 = vunpack.c.h.b16 %v1053
        %v1742 = vunpack.c.l.b16 %v1054
        %v1743 = vunpack.c.h.b16 %v1054
        %v1744 = vunpack.c.l.b16 %v1055
        %v1745 = vunpack.c.h.b16 %v1055
        %v1746 = vunpack.c.l.b16 %v1056
        %v1747 = vunpack.c.l.b16 %v1057
        %v1748 = vunpack.c.h.b16 %v1057
        %v1749 = vunpack.c.l.b16 %v1058
        %v1750 = vunpack.c.h.b16 %v1058
        %v1751 = vunpack.c.l.b16 %v1059
        %v1752 = vunpack.c.h.b16 %v1059
        %v1753 = vunpack.c.l.b16 %v1060
        %v1754 = vunpack.c.l.b16 %v1061
        %v1755 = vunpack.c.h.b16 %v1061
        %v1756 = vunpack.c.l.b16 %v1062
        %v1757 = vunpack.c.h.b16 %v1062
        %v1758 = vunpack.c.l.b16 %v1063
        %v1759 = vunpack.c.h.b16 %v1063
        %v1760 = vunpack.c.l.b16 %v1064
        %v1761 = vunpack.c.l.b16 %v1065
        %v1762 = vunpack.c.h.b16 %v1065
        %v1763 = vunpack.c.l.b16 %v1066
        %v1764 = vunpack.c.h.b16 %v1066
        %v1765 = vunpack.c.l.b16 %v1067
        %v1766 = vunpack.c.h.b16 %v1067
        %v1767 = vunpack.c.l.b16 %v1068
        %v1768 = vunpack.c.l.b16 %v1069
        %v1769 = vunpack.c.h.b16 %v1069
        %v1770 = vunpack.c.l.b16 %v1070
        %v1771 = vunpack.c.h.b16 %v1070
        %v1772 = vunpack.c.l.b16 %v1071
        %v1773 = vunpack.c.h.b16 %v1071
        %v1774 = vunpack.c.l.b16 %v1072
        %v1775 = vunpack.c.l.b16 %v1073
        %v1776 = vunpack.c.h.b16 %v1073
        %v1777 = vunpack.c.l.b16 %v1074
        %v1778 = vunpack.c.h.b16 %v1074
        %v1779 = vunpack.c.l.b16 %v1075
        %v1780 = vunpack.c.h.b16 %v1075
        %v1781 = vunpack.c.l.b16 %v1076
        %v1782 = vpack.c.b16 %v1341, %v1334
        %v1783 = vpack.c.b16 %v1342, %v1335
        %v1784 = vpack.c.b16 %v1343, %v1336
        %v1785 = vpack.c.b16 %v1344, %v1337
        %v1786 = vpack.c.b16 %v1345, %v1338
        %v1787 = vpack.c.b16 %v1346, %v1339
        %v1788 = vpack.c.b16 %v1347, %v1340
        %v1789 = vpack.c.b16 %v1355, %v1348
        %v1790 = vpack.c.b16 %v1356, %v1349
        %v1791 = vpack.c.b16 %v1357, %v1350
        %v1792 = vpack.c.b16 %v1358, %v1351
        %v1793 = vpack.c.b16 %v1359, %v1352
        %v1794 = vpack.c.b16 %v1360, %v1353
        %v1795 = vpack.c.b16 %v1361, %v1354
        %v1796 = vpack.c.b16 %v1369, %v1362
        %v1797 = vpack.c.b16 %v1370, %v1363
        %v1798 = vpack.c.b16 %v1371, %v1364
        %v1799 = vpack.c.b16 %v1372, %v1365
        %v1800 = vpack.c.b16 %v1373, %v1366
        %v1801 = vpack.c.b16 %v1374, %v1367
        %v1802 = vpack.c.b16 %v1375, %v1368
        %v1803 = vpack.c.b16 %v1383, %v1376
        %v1804 = vpack.c.b16 %v1384, %v1377
        %v1805 = vpack.c.b16 %v1385, %v1378
        %v1806 = vpack.c.b16 %v1386, %v1379
        %v1807 = vpack.c.b16 %v1387, %v1380
        %v1808 = vpack.c.b16 %v1388, %v1381
        %v1809 = vpack.c.b16 %v1389, %v1382
        %v1810 = vpack.c.b16 %v1397, %v1390
        %v1811 = vpack.c.b16 %v1398, %v1391
        %v1812 = vpack.c.b16 %v1399, %v1392
        %v1813 = vpack.c.b16 %v1400, %v1393
        %v1814 = vpack.c.b16 %v1401, %v1394
        %v1815 = vpack.c.b16 %v1402, %v1395
        %v1816 = vpack.c.b16 %v1403, %v1396
        %v1817 = vpack.c.b16 %v1411, %v1404
        %v1818 = vpack.c.b16 %v1412, %v1405
        %v1819 = vpack.c.b16 %v1413, %v1406
        %v1820 = vpack.c.b16 %v1414, %v1407
        %v1821 = vpack.c.b16 %v1415, %v1408
        %v1822 = vpack.c.b16 %v1416, %v1409
        %v1823 = vpack.c.b16 %v1417, %v1410
        %v1824 = vpack.c.b16 %v1425, %v1418
        %v1825 = vpack.c.b16 %v1426, %v1419
        %v1826 = vpack.c.b16 %v1427, %v1420
        %v1827 = vpack.c.b16 %v1428, %v1421
        %v1828 = vpack.c.b16 %v1429, %v1422
        %v1829 = vpack.c.b16 %v1430, %v1423
        %v1830 = vpack.c.b16 %v1431, %v1424
        %v1831 = vpack.c.b16 %v1439, %v1432
        %v1832 = vpack.c.b16 %v1440, %v1433
        %v1833 = vpack.c.b16 %v1441, %v1434
        %v1834 = vpack.c.b16 %v1442, %v1435
        %v1835 = vpack.c.b16 %v1443, %v1436
        %v1836 = vpack.c.b16 %v1444, %v1437
        %v1837 = vpack.c.b16 %v1445, %v1438
        %v1838 = vpack.c.b16 %v1453, %v1446
        %v1839 = vpack.c.b16 %v1454, %v1447
        %v1840 = vpack.c.b16 %v1455, %v1448
        %v1841 = vpack.c.b16 %v1456, %v1449
        %v1842 = vpack.c.b16 %v1457, %v1450
        %v1843 = vpack.c.b16 %v1458, %v1451
        %v1844 = vpack.c.b16 %v1459, %v1452
        %v1845 = vpack.c.b16 %v1467, %v1460
        %v1846 = vpack.c.b16 %v1468, %v1461
        %v1847 = vpack.c.b16 %v1469, %v1462
        %v1848 = vpack.c.b16 %v1470, %v1463
        %v1849 = vpack.c.b16 %v1471, %v1464
        %v1850 = vpack.c.b16 %v1472, %v1465
        %v1851 = vpack.c.b16 %v1473, %v1466
        %v1852 = vpack.c.b16 %v1481, %v1474
        %v1853 = vpack.c.b16 %v1482, %v1475
        %v1854 = vpack.c.b16 %v1483, %v1476
        %v1855 = vpack.c.b16 %v1484, %v1477
        %v1856 = vpack.c.b16 %v1485, %v1478
        %v1857 = vpack.c.b16 %v1486, %v1479
        %v1858 = vpack.c.b16 %v1487, %v1480
        %v1859 = vpack.c.b16 %v1495, %v1488
        %v1860 = vpack.c.b16 %v1496, %v1489
        %v1861 = vpack.c.b16 %v1497, %v1490
        %v1862 = vpack.c.b16 %v1498, %v1491
        %v1863 = vpack.c.b16 %v1499, %v1492
        %v1864 = vpack.c.b16 %v1500, %v1493
        %v1865 = vpack.c.b16 %v1501, %v1494
        %v1866 = vpack.c.b16 %v1509, %v1502
        %v1867 = vpack.c.b16 %v1510, %v1503
        %v1868 = vpack.c.b16 %v1511, %v1504
        %v1869 = vpack.c.b16 %v1512, %v1505
        %v1870 = vpack.c.b16 %v1513, %v1506
        %v1871 = vpack.c.b16 %v1514, %v1507
        %v1872 = vpack.c.b16 %v1515, %v1508
        %v1873 = vpack.c.b16 %v1523, %v1516
        %v1874 = vpack.c.b16 %v1524, %v1517
        %v1875 = vpack.c.b16 %v1525, %v1518
        %v1876 = vpack.c.b16 %v1526, %v1519
        %v1877 = vpack.c.b16 %v1527, %v1520
        %v1878 = vpack.c.b16 %v1528, %v1521
        %v1879 = vpack.c.b16 %v1529, %v1522
        %v1880 = vpack.c.b16 %v1537, %v1530
        %v1881 = vpack.c.b16 %v1538, %v1531
        %v1882 = vpack.c.b16 %v1539, %v1532
        %v1883 = vpack.c.b16 %v1540, %v1533
        %v1884 = vpack.c.b16 %v1541, %v1534
        %v1885 = vpack.c.b16 %v1542, %v1535
        %v1886 = vpack.c.b16 %v1543, %v1536
        %v1887 = vpack.c.b16 %v1551, %v1544
        %v1888 = vpack.c.b16 %v1552, %v1545
        %v1889 = vpack.c.b16 %v1553, %v1546
        %v1890 = vpack.c.b16 %v1554, %v1547
        %v1891 = vpack.c.b16 %v1555, %v1548
        %v1892 = vpack.c.b16 %v1556, %v1549
        %v1893 = vpack.c.b16 %v1557, %v1550
        %v1894 = vpack.c.b16 %v1565, %v1558
        %v1895 = vpack.c.b16 %v1566, %v1559
        %v1896 = vpack.c.b16 %v1567, %v1560
        %v1897 = vpack.c.b16 %v1568, %v1561
        %v1898 = vpack.c.b16 %v1569, %v1562
        %v1899 = vpack.c.b16 %v1570, %v1563
        %v1900 = vpack.c.b16 %v1571, %v1564
        %v1901 = vpack.c.b16 %v1579, %v1572
        %v1902 = vpack.c.b16 %v1580, %v1573
        %v1903 = vpack.c.b16 %v1581, %v1574
        %v1904 = vpack.c.b16 %v1582, %v1575
        %v1905 = vpack.c.b16 %v1583, %v1576
        %v1906 = vpack.c.b16 %v1584, %v1577
        %v1907 = vpack.c.b16 %v1585, %v1578
        %v1908 = vpack.c.b16 %v1593, %v1586
        %v1909 = vpack.c.b16 %v1594, %v1587
        %v1910 = vpack.c.b16 %v1595, %v1588
        %v1911 = vpack.c.b16 %v1596, %v1589
        %v1912 = vpack.c.b16 %v1597, %v1590
        %v1913 = vpack.c.b16 %v1598, %v1591
        %v1914 = vpack.c.b16 %v1599, %v1592
        %v1915 = vpack.c.b16 %v1607, %v1600
        %v1916 = vpack.c.b16 %v1608, %v1601
        %v1917 = vpack.c.b16 %v1609, %v1602
        %v1918 = vpack.c.b16 %v1610, %v1603
        %v1919 = vpack.c.b16 %v1611, %v1604
        %v1920 = vpack.c.b16 %v1612, %v1605
        %v1921 = vpack.c.b16 %v1613, %v1606
        %v1922 = vpack.c.b16 %v1621, %v1614
        %v1923 = vpack.c.b16 %v1622, %v1615
        %v1924 = vpack.c.b16 %v1623, %v1616
        %v1925 = vpack.c.b16 %v1624, %v1617
        %v1926 = vpack.c.b16 %v1625, %v1618
        %v1927 = vpack.c.b16 %v1626, %v1619
        %v1928 = vpack.c.b16 %v1627, %v1620
        %v1929 = vpack.c.b16 %v1635, %v1628
        %v1930 = vpack.c.b16 %v1636, %v1629
        %v1931 = vpack.c.b16 %v1637, %v1630
        %v1932 = vpack.c.b16 %v1638, %v1631
        %v1933 = vpack.c.b16 %v1639, %v1632
        %v1934 = vpack.c.b16 %v1640, %v1633
        %v1935 = vpack.c.b16 %v1641, %v1634
        %v1936 = vpack.c.b16 %v1649, %v1642
        %v1937 = vpack.c.b16 %v1650, %v1643
        %v1938 = vpack.c.b16 %v1651, %v1644
        %v1939 = vpack.c.b16 %v1652, %v1645
        %v1940 = vpack.c.b16 %v1653, %v1646
        %v1941 = vpack.c.b16 %v1654, %v1647
        %v1942 = vpack.c.b16 %v1655, %v1648
        %v1943 = vpack.c.b16 %v1663, %v1656
        %v1944 = vpack.c.b16 %v1664, %v1657
        %v1945 = vpack.c.b16 %v1665, %v1658
        %v1946 = vpack.c.b16 %v1666, %v1659
        %v1947 = vpack.c.b16 %v1667, %v1660
        %v1948 = vpack.c.b16 %v1668, %v1661
        %v1949 = vpack.c.b16 %v1669, %v1662
        %v1950 = vpack.c.b16 %v1677, %v1670
        %v1951 = vpack.c.b16 %v1678, %v1671
        %v1952 = vpack.c.b16 %v1679, %v1672
        %v1953 = vpack.c.b16 %v1680, %v1673
        %v1954 = vpack.c.b16 %v1681, %v1674
        %v1955 = vpack.c.b16 %v1682, %v1675
        %v1956 = vpack.c.b16 %v1683, %v1676
        %v1957 = vpack.c.b16 %v1691, %v1684
        %v1958 = vpack.c.b16 %v1692, %v1685
        %v1959 = vpack.c.b16 %v1693, %v1686
        %v1960 = vpack.c.b16 %v1694, %v1687
        %v1961 = vpack.c.b16 %v1695, %v1688
        %v1962 = vpack.c.b16 %v1696, %v1689
        %v1963 = vpack.c.b16 %v1697, %v1690
        %v1964 = vpack.c.b16 %v1705, %v1698
        %v1965 = vpack.c.b16 %v1706, %v1699
        %v1966 = vpack.c.b16 %v1707, %v1700
        %v1967 = vpack.c.b16 %v1708, %v1701
        %v1968 = vpack.c.b16 %v1709, %v1702
        %v1969 = vpack.c.b16 %v1710, %v1703
        %v1970 = vpack.c.b16 %v1711, %v1704
        %v1971 = vpack.c.b16 %v1719, %v1712
        %v1972 = vpack.c.b16 %v1720, %v1713
        %v1973 = vpack.c.b16 %v1721, %v1714
        %v1974 = vpack.c.b16 %v1722, %v1715
        %v1975 = vpack.c.b16 %v1723, %v1716
        %v1976 = vpack.c.b16 %v1724, %v1717
        %v1977 = vpack.c.b16 %v1725, %v1718
        %v1978 = vpack.c.b16 %v1733, %v1726
        %v1979 = vpack.c.b16 %v1734, %v1727
        %v1980 = vpack.c.b16 %v1735, %v1728
        %v1981 = vpack.c.b16 %v1736, %v1729
        %v1982 = vpack.c.b16 %v1737, %v1730
        %v1983 = vpack.c.b16 %v1738, %v1731
        %v1984 = vpack.c.b16 %v1739, %v1732
        %v1985 = vpack.c.b16 %v1747, %v1740
        %v1986 = vpack.c.b16 %v1748, %v1741
        %v1987 = vpack.c.b16 %v1749, %v1742
        %v1988 = vpack.c.b16 %v1750, %v1743
        %v1989 = vpack.c.b16 %v1751, %v1744
        %v1990 = vpack.c.b16 %v1752, %v1745
        %v1991 = vpack.c.b16 %v1753, %v1746
        %v1992 = vpack.c.b16 %v1761, %v1754
        %v1993 = vpack.c.b16 %v1762, %v1755
        %v1994 = vpack.c.b16 %v1763, %v1756
        %v1995 = vpack.c.b16 %v1764, %v1757
        %v1996 = vpack.c.b16 %v1765, %v1758
        %v1997 = vpack.c.b16 %v1766, %v1759
        %v1998 = vpack.c.b16 %v1767, %v1760
        %v1999 = vpack.c.b16 %v1775, %v1768
        %v2000 = vpack.c.b16 %v1776, %v1769
        %v2001 = vpack.c.b16 %v1777, %v1770
        %v2002 = vpack.c.b16 %v1778, %v1771
        %v2003 = vpack.c.b16 %v1779, %v1772
        %v2004 = vpack.c.b16 %v1780, %v1773
        %v2005 = vpack.c.b16 %v1781, %v1774
        %v2231 = vlaneseq
        %v2232 = vshrl.u32 %v2231, 7
        %v2233 = vsub.s32 0, %v2232
        %v2234 = vrot.slane %v1077, %v2233
        %v2235 = vlaneseq
        %v2236 = vshrl.u32 %v2235, 7
        %v2237 = vsub.s32 1, %v2236
        %v2238 = vrot.slane %v1077, %v2237
        %v2239 = vlaneseq
        %v2240 = vshrl.u32 %v2239, 7
        %v2241 = vsub.s32 2, %v2240
        %v2242 = vrot.slane %v1077, %v2241
        %v2243 = vlaneseq
        %v2244 = vshrl.u32 %v2243, 7
        %v2245 = vsub.s32 3, %v2244
        %v2246 = vrot.slane %v1077, %v2245
        %v2247 = vlaneseq
        %v2248 = vshrl.u32 %v2247, 7
        %v2249 = vsub.s32 4, %v2248
        %v2250 = vrot.slane %v1077, %v2249
        %v2251 = vlaneseq
        %v2252 = vshrl.u32 %v2251, 7
        %v2253 = vsub.s32 5, %v2252
        %v2254 = vrot.slane %v1077, %v2253
        %v2255 = vlaneseq
        %v2256 = vshrl.u32 %v2255, 7
        %v2257 = vsub.s32 6, %v2256
        %v2258 = vrot.slane %v1077, %v2257
        %2266 = vmatprep.subr.bf16.mxu0 %v1783
        %2267 = vmatpush1.bf16.msra.mxu0 %v1782
        %2268 = vmatprep.subr.bf16.mxu0 %v1790
        %2269 = vmatpush1.bf16.msra.mxu0 %v1789
        %2270 = vmatprep.subr.bf16.mxu0 %v1797
        %2271 = vmatpush1.bf16.msra.mxu0 %v1796
        %2272 = vmatprep.subr.bf16.mxu0 %v1804
        %2273 = vmatpush1.bf16.msra.mxu0 %v1803
        %2274 = vmatprep.subr.bf16.mxu0 %v1811
        %2275 = vmatpush1.bf16.msra.mxu0 %v1810
        %2276 = vmatprep.subr.bf16.mxu0 %v1818
        %2277 = vmatpush1.bf16.msra.mxu0 %v1817
        %2278 = vmatprep.subr.bf16.mxu0 %v1825
        %2279 = vmatpush1.bf16.msra.mxu0 %v1824
        %2280 = vmatprep.subr.bf16.mxu0 %v1832
        %2281 = vmatpush1.bf16.msra.mxu0 %v1831
        %2282 = vmatprep.subr.bf16.mxu0 %v1839
        %2283 = vmatpush1.bf16.msra.mxu0 %v1838
        %2284 = vmatprep.subr.bf16.mxu0 %v1846
        %2285 = vmatpush1.bf16.msra.mxu0 %v1845
        %2286 = vmatprep.subr.bf16.mxu0 %v1853
        %2287 = vmatpush1.bf16.msra.mxu0 %v1852
        %2288 = vmatprep.subr.bf16.mxu0 %v1860
        %2289 = vmatpush1.bf16.msra.mxu0 %v1859
        %2290 = vmatprep.subr.bf16.mxu0 %v1867
        %2291 = vmatpush1.bf16.msra.mxu0 %v1866
        %2292 = vmatprep.subr.bf16.mxu0 %v1874
        %2293 = vmatpush1.bf16.msra.mxu0 %v1873
        %2294 = vmatprep.subr.bf16.mxu0 %v1881
        %2295 = vmatpush1.bf16.msra.mxu0 %v1880
        %2296 = vmatprep.subr.bf16.mxu0 %v1888
        %2297 = vmatpush1.bf16.msra.mxu0 %v1887
        %2298 = vmatprep.mubr.bf16.mxu0 %v818
        %2299 = vmatmul.mubr.bf16.gmra.mrb[0].mxu0 %v817
        %v2300 = vpop.f32.mrb[0].mxu0
        %v2301 = vadd.f32 %v2234, %v2300
        %v2302 = vpop.f32.mrb[0].mxu0
        %v2303 = vadd.f32 %v2238, %v2302
        %v2304 = vpop.f32.mrb[0].mxu0
        %v2305 = vpop.f32.mrb[0].mxu0
        %2306 = vdwg.mxu0
        %2307 = vmatprep.subr.bf16.mxu0 %v1895
        %2308 = vmatpush1.bf16.msra.mxu0 %v1894
        %2309 = vmatprep.subr.bf16.mxu0 %v1902
        %2310 = vmatpush1.bf16.msra.mxu0 %v1901
        %2311 = vmatprep.subr.bf16.mxu0 %v1909
        %2312 = vmatpush1.bf16.msra.mxu0 %v1908
        %2313 = vmatprep.subr.bf16.mxu0 %v1916
        %2314 = vmatpush1.bf16.msra.mxu0 %v1915
        %2315 = vmatprep.subr.bf16.mxu0 %v1923
        %2316 = vmatpush1.bf16.msra.mxu0 %v1922
        %2317 = vmatprep.subr.bf16.mxu0 %v1930
        %2318 = vmatpush1.bf16.msra.mxu0 %v1929
        %2319 = vmatprep.subr.bf16.mxu0 %v1937
        %2320 = vmatpush1.bf16.msra.mxu0 %v1936
        %2321 = vmatprep.subr.bf16.mxu0 %v1944
        %2322 = vmatpush1.bf16.msra.mxu0 %v1943
        %2323 = vmatprep.subr.bf16.mxu0 %v1951
        %2324 = vmatpush1.bf16.msra.mxu0 %v1950
        %2325 = vmatprep.subr.bf16.mxu0 %v1958
        %2326 = vmatpush1.bf16.msra.mxu0 %v1957
        %2327 = vmatprep.subr.bf16.mxu0 %v1965
        %2328 = vmatpush1.bf16.msra.mxu0 %v1964
        %2329 = vmatprep.subr.bf16.mxu0 %v1972
        %2330 = vmatpush1.bf16.msra.mxu0 %v1971
        %2331 = vmatprep.subr.bf16.mxu0 %v1979
        %2332 = vmatpush1.bf16.msra.mxu0 %v1978
        %2333 = vmatprep.subr.bf16.mxu0 %v1986
        %2334 = vmatpush1.bf16.msra.mxu0 %v1985
        %2335 = vmatprep.subr.bf16.mxu0 %v1993
        %2336 = vmatpush1.bf16.msra.mxu0 %v1992
        %2337 = vmatprep.subr.bf16.mxu0 %v2000
        %2338 = vmatpush1.bf16.msra.mxu0 %v1999
        %2339 = vmatprep.mubr.bf16.mxu0 %v820
        %2340 = vmatmul.mubr.bf16.gmra.mrb[0].mxu0 %v819
        %v2341 = vpop.f32.mrb[0].mxu0
        %v2342 = vadd.f32 %v2301, %v2341
        %v2343 = vpop.f32.mrb[0].mxu0
        %v2344 = vadd.f32 %v2303, %v2343
        %v2345 = vpop.f32.mrb[0].mxu0
        %v2346 = vpop.f32.mrb[0].mxu0
        %2347 = vdwg.mxu0
        %2348 = vmatprep.subr.bf16.mxu0 %v1785
        %2349 = vmatpush1.bf16.msra.mxu0 %v1784
        %2350 = vmatprep.subr.bf16.mxu0 %v1792
        %2351 = vmatpush1.bf16.msra.mxu0 %v1791
        %2352 = vmatprep.subr.bf16.mxu0 %v1799
        %2353 = vmatpush1.bf16.msra.mxu0 %v1798
        %2354 = vmatprep.subr.bf16.mxu0 %v1806
        %2355 = vmatpush1.bf16.msra.mxu0 %v1805
        %2356 = vmatprep.subr.bf16.mxu0 %v1813
        %2357 = vmatpush1.bf16.msra.mxu0 %v1812
        %2358 = vmatprep.subr.bf16.mxu0 %v1820
        %2359 = vmatpush1.bf16.msra.mxu0 %v1819
        %2360 = vmatprep.subr.bf16.mxu0 %v1827
        %2361 = vmatpush1.bf16.msra.mxu0 %v1826
        %2362 = vmatprep.subr.bf16.mxu0 %v1834
        %2363 = vmatpush1.bf16.msra.mxu0 %v1833
        %2364 = vmatprep.subr.bf16.mxu0 %v1841
        %2365 = vmatpush1.bf16.msra.mxu0 %v1840
        %2366 = vmatprep.subr.bf16.mxu0 %v1848
        %2367 = vmatpush1.bf16.msra.mxu0 %v1847
        %2368 = vmatprep.subr.bf16.mxu0 %v1855
        %2369 = vmatpush1.bf16.msra.mxu0 %v1854
        %2370 = vmatprep.subr.bf16.mxu0 %v1862
        %2371 = vmatpush1.bf16.msra.mxu0 %v1861
        %2372 = vmatprep.subr.bf16.mxu0 %v1869
        %2373 = vmatpush1.bf16.msra.mxu0 %v1868
        %2374 = vmatprep.subr.bf16.mxu0 %v1876
        %2375 = vmatpush1.bf16.msra.mxu0 %v1875
        %2376 = vmatprep.subr.bf16.mxu0 %v1883
        %2377 = vmatpush1.bf16.msra.mxu0 %v1882
        %2378 = vmatprep.subr.bf16.mxu0 %v1890
        %2379 = vmatpush1.bf16.msra.mxu0 %v1889
        %2380 = vmatprep.mubr.bf16.mxu0 %v818
        %2381 = vmatmul.mubr.bf16.gmra.mrb[0].mxu0 %v817
        %v2382 = vpop.f32.mrb[0].mxu0
        %v2383 = vadd.f32 %v2242, %v2382
        %v2384 = vpop.f32.mrb[0].mxu0
        %v2385 = vadd.f32 %v2246, %v2384
        %v2386 = vpop.f32.mrb[0].mxu0
        %v2387 = vpop.f32.mrb[0].mxu0
        %2388 = vdwg.mxu0
        %2389 = vmatprep.subr.bf16.mxu0 %v1897
        %2390 = vmatpush1.bf16.msra.mxu0 %v1896
        %2391 = vmatprep.subr.bf16.mxu0 %v1904
        %2392 = vmatpush1.bf16.msra.mxu0 %v1903
        %2393 = vmatprep.subr.bf16.mxu0 %v1911
        %2394 = vmatpush1.bf16.msra.mxu0 %v1910
        %2395 = vmatprep.subr.bf16.mxu0 %v1918
        %2396 = vmatpush1.bf16.msra.mxu0 %v1917
        %2397 = vmatprep.subr.bf16.mxu0 %v1925
        %2398 = vmatpush1.bf16.msra.mxu0 %v1924
        %2399 = vmatprep.subr.bf16.mxu0 %v1932
        %2400 = vmatpush1.bf16.msra.mxu0 %v1931
        %2401 = vmatprep.subr.bf16.mxu0 %v1939
        %2402 = vmatpush1.bf16.msra.mxu0 %v1938
        %2403 = vmatprep.subr.bf16.mxu0 %v1946
        %2404 = vmatpush1.bf16.msra.mxu0 %v1945
        %2405 = vmatprep.subr.bf16.mxu0 %v1953
        %2406 = vmatpush1.bf16.msra.mxu0 %v1952
        %2407 = vmatprep.subr.bf16.mxu0 %v1960
        %2408 = vmatpush1.bf16.msra.mxu0 %v1959
        %2409 = vmatprep.subr.bf16.mxu0 %v1967
        %2410 = vmatpush1.bf16.msra.mxu0 %v1966
        %2411 = vmatprep.subr.bf16.mxu0 %v1974
        %2412 = vmatpush1.bf16.msra.mxu0 %v1973
        %2413 = vmatprep.subr.bf16.mxu0 %v1981
        %2414 = vmatpush1.bf16.msra.mxu0 %v1980
        %2415 = vmatprep.subr.bf16.mxu0 %v1988
        %2416 = vmatpush1.bf16.msra.mxu0 %v1987
        %2417 = vmatprep.subr.bf16.mxu0 %v1995
        %2418 = vmatpush1.bf16.msra.mxu0 %v1994
        %2419 = vmatprep.subr.bf16.mxu0 %v2002
        %2420 = vmatpush1.bf16.msra.mxu0 %v2001
        %2421 = vmatprep.mubr.bf16.mxu0 %v820
        %2422 = vmatmul.mubr.bf16.gmra.mrb[0].mxu0 %v819
        %v2423 = vpop.f32.mrb[0].mxu0
        %v2424 = vadd.f32 %v2383, %v2423
        %v2425 = vpop.f32.mrb[0].mxu0
        %v2426 = vadd.f32 %v2385, %v2425
        %v2427 = vpop.f32.mrb[0].mxu0
        %v2428 = vpop.f32.mrb[0].mxu0
        %2429 = vdwg.mxu0
        %2430 = vmatprep.subr.bf16.mxu0 %v1787
        %2431 = vmatpush1.bf16.msra.mxu0 %v1786
        %2432 = vmatprep.subr.bf16.mxu0 %v1794
        %2433 = vmatpush1.bf16.msra.mxu0 %v1793
        %2434 = vmatprep.subr.bf16.mxu0 %v1801
        %2435 = vmatpush1.bf16.msra.mxu0 %v1800
        %2436 = vmatprep.subr.bf16.mxu0 %v1808
        %2437 = vmatpush1.bf16.msra.mxu0 %v1807
        %2438 = vmatprep.subr.bf16.mxu0 %v1815
        %2439 = vmatpush1.bf16.msra.mxu0 %v1814
        %2440 = vmatprep.subr.bf16.mxu0 %v1822
        %2441 = vmatpush1.bf16.msra.mxu0 %v1821
        %2442 = vmatprep.subr.bf16.mxu0 %v1829
        %2443 = vmatpush1.bf16.msra.mxu0 %v1828
        %2444 = vmatprep.subr.bf16.mxu0 %v1836
        %2445 = vmatpush1.bf16.msra.mxu0 %v1835
        %2446 = vmatprep.subr.bf16.mxu0 %v1843
        %2447 = vmatpush1.bf16.msra.mxu0 %v1842
        %2448 = vmatprep.subr.bf16.mxu0 %v1850
        %2449 = vmatpush1.bf16.msra.mxu0 %v1849
        %2450 = vmatprep.subr.bf16.mxu0 %v1857
        %2451 = vmatpush1.bf16.msra.mxu0 %v1856
        %2452 = vmatprep.subr.bf16.mxu0 %v1864
        %2453 = vmatpush1.bf16.msra.mxu0 %v1863
        %2454 = vmatprep.subr.bf16.mxu0 %v1871
        %2455 = vmatpush1.bf16.msra.mxu0 %v1870
        %2456 = vmatprep.subr.bf16.mxu0 %v1878
        %2457 = vmatpush1.bf16.msra.mxu0 %v1877
        %2458 = vmatprep.subr.bf16.mxu0 %v1885
        %2459 = vmatpush1.bf16.msra.mxu0 %v1884
        %2460 = vmatprep.subr.bf16.mxu0 %v1892
        %2461 = vmatpush1.bf16.msra.mxu0 %v1891
        %2462 = vmatprep.mubr.bf16.mxu0 %v818
        %2463 = vmatmul.mubr.bf16.gmra.mrb[0].mxu0 %v817
        %v2464 = vpop.f32.mrb[0].mxu0
        %v2465 = vadd.f32 %v2250, %v2464
        %v2466 = vpop.f32.mrb[0].mxu0
        %v2467 = vadd.f32 %v2254, %v2466
        %v2468 = vpop.f32.mrb[0].mxu0
        %v2469 = vpop.f32.mrb[0].mxu0
        %2470 = vdwg.mxu0
        %2471 = vmatprep.subr.bf16.mxu0 %v1899
        %2472 = vmatpush1.bf16.msra.mxu0 %v1898
        %2473 = vmatprep.subr.bf16.mxu0 %v1906
        %2474 = vmatpush1.bf16.msra.mxu0 %v1905
        %2475 = vmatprep.subr.bf16.mxu0 %v1913
        %2476 = vmatpush1.bf16.msra.mxu0 %v1912
        %2477 = vmatprep.subr.bf16.mxu0 %v1920
        %2478 = vmatpush1.bf16.msra.mxu0 %v1919
        %2479 = vmatprep.subr.bf16.mxu0 %v1927
        %2480 = vmatpush1.bf16.msra.mxu0 %v1926
        %2481 = vmatprep.subr.bf16.mxu0 %v1934
        %2482 = vmatpush1.bf16.msra.mxu0 %v1933
        %2483 = vmatprep.subr.bf16.mxu0 %v1941
        %2484 = vmatpush1.bf16.msra.mxu0 %v1940
        %2485 = vmatprep.subr.bf16.mxu0 %v1948
        %2486 = vmatpush1.bf16.msra.mxu0 %v1947
        %2487 = vmatprep.subr.bf16.mxu0 %v1955
        %2488 = vmatpush1.bf16.msra.mxu0 %v1954
        %2489 = vmatprep.subr.bf16.mxu0 %v1962
        %2490 = vmatpush1.bf16.msra.mxu0 %v1961
        %2491 = vmatprep.subr.bf16.mxu0 %v1969
        %2492 = vmatpush1.bf16.msra.mxu0 %v1968
        %2493 = vmatprep.subr.bf16.mxu0 %v1976
        %2494 = vmatpush1.bf16.msra.mxu0 %v1975
        %2495 = vmatprep.subr.bf16.mxu0 %v1983
        %2496 = vmatpush1.bf16.msra.mxu0 %v1982
        %2497 = vmatprep.subr.bf16.mxu0 %v1990
        %2498 = vmatpush1.bf16.msra.mxu0 %v1989
        %2499 = vmatprep.subr.bf16.mxu0 %v1997
        %2500 = vmatpush1.bf16.msra.mxu0 %v1996
        %2501 = vmatprep.subr.bf16.mxu0 %v2004
        %2502 = vmatpush1.bf16.msra.mxu0 %v2003
        %2503 = vmatprep.mubr.bf16.mxu0 %v820
        %2504 = vmatmul.mubr.bf16.gmra.mrb[0].mxu0 %v819
        %v2505 = vpop.f32.mrb[0].mxu0
        %v2506 = vadd.f32 %v2465, %v2505
        %v2507 = vpop.f32.mrb[0].mxu0
        %v2508 = vadd.f32 %v2467, %v2507
        %v2509 = vpop.f32.mrb[0].mxu0
        %v2510 = vpop.f32.mrb[0].mxu0
        %2511 = vdwg.mxu0
        %2512 = vmatprep.subr.bf16.mxu0 0
        %2513 = vmatpush1.bf16.msra.mxu0 %v1788
        %2514 = vmatprep.subr.bf16.mxu0 0
        %2515 = vmatpush1.bf16.msra.mxu0 %v1795
        %2516 = vmatprep.subr.bf16.mxu0 0
        %2517 = vmatpush1.bf16.msra.mxu0 %v1802
        %2518 = vmatprep.subr.bf16.mxu0 0
        %2519 = vmatpush1.bf16.msra.mxu0 %v1809
        %2520 = vmatprep.subr.bf16.mxu0 0
        %2521 = vmatpush1.bf16.msra.mxu0 %v1816
        %2522 = vmatprep.subr.bf16.mxu0 0
        %2523 = vmatpush1.bf16.msra.mxu0 %v1823
        %2524 = vmatprep.subr.bf16.mxu0 0
        %2525 = vmatpush1.bf16.msra.mxu0 %v1830
        %2526 = vmatprep.subr.bf16.mxu0 0
        %2527 = vmatpush1.bf16.msra.mxu0 %v1837
        %2528 = vmatprep.subr.bf16.mxu0 0
        %2529 = vmatpush1.bf16.msra.mxu0 %v1844
        %2530 = vmatprep.subr.bf16.mxu0 0
        %2531 = vmatpush1.bf16.msra.mxu0 %v1851
        %2532 = vmatprep.subr.bf16.mxu0 0
        %2533 = vmatpush1.bf16.msra.mxu0 %v1858
        %2534 = vmatprep.subr.bf16.mxu0 0
        %2535 = vmatpush1.bf16.msra.mxu0 %v1865
        %2536 = vmatprep.subr.bf16.mxu0 0
        %2537 = vmatpush1.bf16.msra.mxu0 %v1872
        %2538 = vmatprep.subr.bf16.mxu0 0
        %2539 = vmatpush1.bf16.msra.mxu0 %v1879
        %2540 = vmatprep.subr.bf16.mxu0 0
        %2541 = vmatpush1.bf16.msra.mxu0 %v1886
        %2542 = vmatprep.subr.bf16.mxu0 0
        %2543 = vmatpush1.bf16.msra.mxu0 %v1893
        %2544 = vmatprep.mubr.bf16.mxu0 %v818
        %2545 = vmatmul.mubr.bf16.gmra.mrb[0].mxu0 %v817
        %v2546 = vpop.f32.mrb[0].mxu0
        %v2547 = vadd.f32 %v2258, %v2546
        %v2548 = vpop.f32.mrb[0].mxu0
        %v2549 = vpop.f32.mrb[0].mxu0
        %v2550 = vpop.f32.mrb[0].mxu0
        %2551 = vdwg.mxu0
        %2552 = vmatprep.subr.bf16.mxu0 0
        %2553 = vmatpush1.bf16.msra.mxu0 %v1900
        %2554 = vmatprep.subr.bf16.mxu0 0
        %2555 = vmatpush1.bf16.msra.mxu0 %v1907
        %2556 = vmatprep.subr.bf16.mxu0 0
        %2557 = vmatpush1.bf16.msra.mxu0 %v1914
        %2558 = vmatprep.subr.bf16.mxu0 0
        %2559 = vmatpush1.bf16.msra.mxu0 %v1921
        %2560 = vmatprep.subr.bf16.mxu0 0
        %2561 = vmatpush1.bf16.msra.mxu0 %v1928
        %2562 = vmatprep.subr.bf16.mxu0 0
        %2563 = vmatpush1.bf16.msra.mxu0 %v1935
        %2564 = vmatprep.subr.bf16.mxu0 0
        %2565 = vmatpush1.bf16.msra.mxu0 %v1942
        %2566 = vmatprep.subr.bf16.mxu0 0
        %2567 = vmatpush1.bf16.msra.mxu0 %v1949
        %2568 = vmatprep.subr.bf16.mxu0 0
        %2569 = vmatpush1.bf16.msra.mxu0 %v1956
        %2570 = vmatprep.subr.bf16.mxu0 0
        %2571 = vmatpush1.bf16.msra.mxu0 %v1963
        %2572 = vmatprep.subr.bf16.mxu0 0
        %2573 = vmatpush1.bf16.msra.mxu0 %v1970
        %2574 = vmatprep.subr.bf16.mxu0 0
        %2575 = vmatpush1.bf16.msra.mxu0 %v1977
        %2576 = vmatprep.subr.bf16.mxu0 0
        %2577 = vmatpush1.bf16.msra.mxu0 %v1984
        %2578 = vmatprep.subr.bf16.mxu0 0
        %2579 = vmatpush1.bf16.msra.mxu0 %v1991
        %2580 = vmatprep.subr.bf16.mxu0 0
        %2581 = vmatpush1.bf16.msra.mxu0 %v1998
        %2582 = vmatprep.subr.bf16.mxu0 0
        %2583 = vmatpush1.bf16.msra.mxu0 %v2005
        %2584 = vmatprep.mubr.bf16.mxu0 %v820
        %2585 = vmatmul.mubr.bf16.gmra.mrb[0].mxu0 %v819
        %v2586 = vpop.f32.mrb[0].mxu0
        %v2587 = vadd.f32 %v2547, %v2586
        %v2588 = vpop.f32.mrb[0].mxu0
        %v2589 = vpop.f32.mrb[0].mxu0
        %v2590 = vpop.f32.mrb[0].mxu0
        %2591 = vdwg.mxu0
        %v2592 = vadd.f32 %v749, %v2342
        %v2593 = vadd.f32 %v751, %v2344
        %v2594 = vadd.f32 %v790, %v2424
        %v2595 = vxor.u32 %v2592, 2147483648
        %v2596 = vmul.f32 %v2595, 1.442695
        %v2597 = vpow.pop %v2596
        %v2598 = vadd.f32 %v2597, 1.0
        %v2599 = vrcp.pop %v2598
        %v2600 = vmul.f32 1.0, %v2599
        %v2601 = vxor.u32 %v2593, 2147483648
        %v2602 = vmul.f32 %v2601, 1.442695
        %v2603 = vpow.pop %v2602
        %v2604 = vadd.f32 %v2603, 1.0
        %v2605 = vrcp.pop %v2604
        %v2606 = vmul.f32 1.0, %v2605
        %v2607 = vtanh.pop %v2594
        %v2608 = vadd.f32 %v2426, %v792
        %v2609 = vxor.u32 %v2608, 2147483648
        %v2610 = vmul.f32 %v2609, 1.442695
        %v2611 = vpow.pop %v2610
        %v2612 = vadd.f32 %v2611, 1.0
        %v2613 = vrcp.pop %v2612
        %v2614 = vmul.f32 1.0, %v2613
        %v2615 = vmul.f32 %v2614, %v499
        %v2616 = vadd.f32 %v2615, 0.0
        %v2617 = vadd.f32 %v2506, %v792
        %v2618 = vxor.u32 %v2617, 2147483648
        %v2619 = vmul.f32 %v2618, 1.442695
        %v2620 = vpow.pop %v2619
        %v2621 = vadd.f32 %v2620, 1.0
        %v2622 = vrcp.pop %v2621
        %v2623 = vmul.f32 1.0, %v2622
        %v2625 = vlaneseq
        %v2626 = vshrl.u32 %v2625, 7
        %v2627 = vsub.s32 1, %v2626
        %v2628 = vrot.slane %v499, %v2627
        %v2630 = vmul.f32 %v2623, %v2628
        %v2631 = vadd.f32 %v2616, %v2630
        %v2632 = vadd.f32 %v2508, %v792
        %v2633 = vxor.u32 %v2632, 2147483648
        %v2634 = vmul.f32 %v2633, 1.442695
        %v2635 = vpow.pop %v2634
        %v2636 = vadd.f32 %v2635, 1.0
        %v2637 = vrcp.pop %v2636
        %v2638 = vmul.f32 1.0, %v2637
        %v2639 = vlaneseq
        %v2640 = vshrl.u32 %v2639, 7
        %v2641 = vsub.s32 2, %v2640
        %v2642 = vrot.slane %v499, %v2641
        %v2644 = vmul.f32 %v2638, %v2642
        %v2645 = vadd.f32 %v2631, %v2644
        %v2646 = vadd.f32 %v2587, %v792
        %v2647 = vxor.u32 %v2646, 2147483648
        %v2648 = vmul.f32 %v2647, 1.442695
        %v2649 = vpow.pop %v2648
        %v2650 = vadd.f32 %v2649, 1.0
        %v2651 = vrcp.pop %v2650
        %v2652 = vmul.f32 1.0, %v2651
        %v2653 = vlaneseq
        %v2654 = vshrl.u32 %v2653, 7
        %v2655 = vsub.s32 3, %v2654
        %v2656 = vrot.slane %v499, %v2655
        %v2658 = vmul.f32 %v2652, %v2656
        %v2659 = vadd.f32 %v2645, %v2658
        %v2660 = vmul.f32 %v2600, %v2607
        %v2661 = vadd.f32 %v2660, %v2659
        %v2662 = vtanh.pop %v2661
        %v2663 = vmul.f32 %v2606, %v2662
        %v2664 = vstv %s39
        %vm2665 = vcmp.eq.s32.totalorder %v325, %v2664
        %v2666 = vsel %vm2665, 1, 0
        %v2667 = vcvt.s32.f32 %v2666
        %v2668 = vlaneseq
        %v2669 = vshrl.u32 %v2668, 7
        %v2670 = vsub.s32 0, %v2669
        %v2671 = vrot.slane %v2663, %v2670
        %v2672 = vmul.f32 %v2667, %v2671
        %v2673 = vadd.f32 %v339, %v2672
        %v2674 = vlaneseq
        %v2675 = vshrl.u32 %v2674, 7
        %v2676 = vsub.s32 0, %v2675
        %v2677 = vrot.slane %v2661, %v2676
        %v2678 = vmul.f32 %v2667, %v2677
        %v2679 = vadd.f32 %v340, %v2678
        %2680 = vst [vmem:[#allocation2] sm:$0xff] %v2673
        %2681 = vst [vmem:[#allocation3] sm:$0xff] %v2679
        %2682 = vst [vmem:[%s10] sm:$0xff] %v2673
        %2683 = vst [vmem:[%s11] sm:$0xff] %v2679
        // Predicated region
        $region61: #{_forward_jit.2} parent=47 // pred_check
          %p2684 = pneg %p199
        $region62: #{_forward_jit.2} parent=47 // pred_check_branch
          %2686 = sbr.rel (%p2684) target = $region64
        $region63: #{_forward_jit.2} parent=47 // pred_region
          _
        $region64: #{_forward_jit.2} parent=47 // pred_fallthru
          _
        // Predicated region
        $region65: #{_forward_jit.2} parent=47 // pred_check
          %p2687 = pneg %p220
        $region66: #{_forward_jit.2} parent=47 // pred_check_branch
          %2689 = sbr.rel (%p2687) target = $region68
        $region67: #{_forward_jit.2} parent=47 // pred_region
          _
        $region68: #{_forward_jit.2} parent=47 // pred_fallthru
          _
        // Predicated region
        $region69: #{_forward_jit.2} parent=47 // pred_check
          %p2690 = pneg %p199
        $region70: #{_forward_jit.2} parent=47 // pred_check_branch
          %2692 = sbr.rel (%p2690) target = $region72
        $region71: #{_forward_jit.2} parent=47 // pred_region
          _
        $region72: #{_forward_jit.2} parent=47 // pred_fallthru
          _
        // Predicated region
        $region73: #{_forward_jit.2} parent=47 // pred_check
          %p2693 = pneg %p220
        $region74: #{_forward_jit.2} parent=47 // pred_check_branch
          %2695 = sbr.rel (%p2693) target = $region76
        $region75: #{_forward_jit.2} parent=47 // pred_region
          _
        $region76: #{_forward_jit.2} parent=47 // pred_fallthru
          _
      $region48: #{_forward_jit.2} parent=5 // pred_fallthru
        _
      %p2696 = scmp.le.s32.totalorder 2, %s34
      // Predicated region
      $region77: #{_forward_jit.2} parent=5 // pred_check
        %p2697 = pneg %p2696
      $region78: #{_forward_jit.2} parent=5 // pred_check_branch
        %2699 = sbr.rel (%p2697) target = $region80
      $region79: #{_forward_jit.2} parent=5 // pred_region
        %s2700 = ssub.s32 %s34, 2
      $region80: #{_forward_jit.2} parent=5 // pred_fallthru
        _
    $region6: #{_forward_jit.2} parent=1 // loop_footer
      %s38 = sadd.s32 1, %s34
    $region7: #{_forward_jit.2} parent=1 // loop_footer_branch
      %33 = sbr.rel target = $region3
    $region8: #{_forward_jit.2} parent=1 // loop_exit
      _
    %2701 = vsyncpa [#allocation9], 1
    %s2702 = scalar_lea.sflag [#allocation9], 1
    %2703 = vsyncpa %s2702, 1
    %2704 = vsyncpa [#allocation11], 1

</llo_original>
